<compile_context>
chip_gen: v7x
topology: tpu7x:2x2x1
jax: 0.10.0
libtpu: 0.0.40
codegen_flags: <defaults>
</compile_context>

<pallas_src>
import math
import functools

import jax
import jax.numpy as jnp
from jax import lax
from jax.experimental import pallas as pl
from jax.experimental.pallas import tpu as pltpu

D_K = 256  # hard-coded in MultiHeadAttention.__init__ (self.d_k = 256)
EPS = 1e-6


def _norm(x, alpha, bias):
    # Reproduces Norm.forward:
    #   alpha * (x - mean) / (std + eps) + bias
    # torch.std default is unbiased (divides by n-1).
    n = x.shape[-1]
    mean = jnp.mean(x, axis=-1, keepdims=True)
    xc = x - mean
    var = jnp.sum(xc * xc, axis=-1, keepdims=True) * (1.0 / (n - 1))
    std = jnp.sqrt(var)
    inv = pl.reciprocal(std + EPS, approx=True)   # EUP, off the VALU path
    return alpha * xc * inv + bias


def encoder_layer_kernel(x_ref, mask_ref,
                         wq_ref, bq_ref, wk_ref, bk_ref, wv_ref, bv_ref,
                         wo_ref, bo_ref,
                         a1_ref, g1_ref, a2_ref, g2_ref,
                         w1_ref, c1_ref, w2_ref, c2_ref,
                         fa_ref, fb_ref,
                         out_ref,
                         k_scratch, v_scratch,
                         *, num_heads, tq, apply_final_norm):
    seq = x_ref.shape[1]
    qi = pl.program_id(1)

    a1 = a1_ref[...]
    g1 = g1_ref[...]

    # ---- per-batch prologue: norm_1 over the full sequence + fused K/V
    # projections, cached in bf16 VMEM scratch for all query tiles ----------
    @pl.when(qi == 0)
    def _():
        x_full = x_ref[0]                              # (S, D) f32
        x2_full = _norm(x_full, a1, g1)
        x2f_b = x2_full.astype(jnp.bfloat16)
        k_all = jnp.dot(x2f_b, wk_ref[...],
                        preferred_element_type=jnp.float32) + bk_ref[...]
        v_all = jnp.dot(x2f_b, wv_ref[...],
                        preferred_element_type=jnp.float32) + bv_ref[...]
        k_scratch[...] = k_all.astype(jnp.bfloat16)    # (S, h*d_k) bf16
        v_scratch[...] = v_all.astype(jnp.bfloat16)

    # ---- query tile ---------------------------------------------------------
    if tq == seq:
        x_q = x_ref[0]                                 # single-tile path
    else:
        q_start = pl.multiple_of(qi * tq, tq)          # tq == 128 here
        x_q = x_ref[0, pl.ds(q_start, tq), :]          # (tq, D)

    inv_sqrt_dk = 1.0 / math.sqrt(D_K)
    x2_q = _norm(x_q, a1, g1)
    x2q_b = (x2_q * inv_sqrt_dk).astype(jnp.bfloat16)  # 1/sqrt(d_k) folded in
    # fused Q projection: one (tq, D) x (D, h*d_k) matmul
    q_all = (jnp.dot(x2q_b, wq_ref[...], preferred_element_type=jnp.float32)
             + bq_ref[...] * inv_sqrt_dk)              # (tq, h*d_k) f32

    masked = mask_ref[0] != 0                          # (tq, S) bool; nonzero => -1e9

    heads = []
    for h in range(num_heads):                         # static head count
        lo, hi = h * D_K, (h + 1) * D_K
        qh = q_all[:, lo:hi].astype(jnp.bfloat16)      # (tq, d_k)
        kh = k_scratch[:, lo:hi]                       # (S, d_k) bf16 view
        # q @ k^T without an explicit transpose: contract last dims of both.
        scores = lax.dot_general(qh, kh, (((1,), (1,)), ((), ())),
                                 preferred_element_type=jnp.float32)   # (tq, S)
        scores = jnp.where(masked, jnp.float32(-1e9), scores)
        scores = scores - jnp.max(scores, axis=-1, keepdims=True)
        e = jnp.exp(scores)
        p = e * pl.reciprocal(jnp.sum(e, axis=-1, keepdims=True), approx=True)
        head = jnp.dot(p.astype(jnp.bfloat16), v_scratch[:, lo:hi],
                       preferred_element_type=jnp.float32)             # (tq, d_k)
        heads.append(head.astype(jnp.bfloat16))

    concat = heads[0] if num_heads == 1 else jnp.concatenate(heads, axis=-1)
    # fused output projection: one (tq, h*d_k) x (h*d_k, D) matmul
    attn = jnp.dot(concat, wo_ref[...],
                   preferred_element_type=jnp.float32) + bo_ref[...]

    x_res = x_q + attn                                 # residual 1 (dropout = id)

    # ---- feed-forward -------------------------------------------------------
    x2 = _norm(x_res, a2_ref[...], g2_ref[...])
    hidden = jnp.dot(x2.astype(jnp.bfloat16), w1_ref[...],
                     preferred_element_type=jnp.float32) + c1_ref[...]
    hidden = jnp.maximum(hidden, 0.0)                  # ReLU
    ff = jnp.dot(hidden.astype(jnp.bfloat16), w2_ref[...],
                 preferred_element_type=jnp.float32) + c2_ref[...]
    y = x_res + ff                                     # residual 2

    if apply_final_norm:                               # trailing Norm, fused
        y = _norm(y, fa_ref[...], fb_ref[...])
    out_ref[0] = y


def _full_spec(arr):
    # Whole-array block, identical for every grid step (constant index map).
    nd = arr.ndim
    return pl.BlockSpec(arr.shape, lambda b, qi, _nd=nd: (0,) * _nd)


def _choose_tq(seq):
    # Tile queries when the sequence is long; otherwise one tile per batch.
    return 128 if (seq % 128 == 0) else seq


def encoder_layer(x, mask_i8, p, final_norm, num_heads, apply_final_norm):
    """One EncoderLayer forward. x:(B,S,D) f32, mask_i8:(B,S,S) int8."""
    B, S, D = x.shape
    tq = _choose_tq(S)
    hdk = num_heads * D_K
    fa, fb = final_norm
    param_list = [p["wq"], p["bq"], p["wk"], p["bk"], p["wv"], p["bv"],
                  p["wo"], p["bo"],
                  p["a1"], p["g1"], p["a2"], p["g2"],
                  p["w1"], p["c1"], p["w2"], p["c2"],
                  fa, fb]
    # x block index is constant across qi -> block stays resident, DMA'd once
    # per batch; only the mask tile changes with qi.
    in_specs = [pl.BlockSpec((1, S, D), lambda b, qi: (b, 0, 0)),
                pl.BlockSpec((1, tq, S), lambda b, qi: (b, qi, 0))]
    in_specs += [_full_spec(a) for a in param_list]

    return pl.pallas_call(
        functools.partial(encoder_layer_kernel, num_heads=num_heads, tq=tq,
                          apply_final_norm=apply_final_norm),
        grid=(B, S // tq),
        in_specs=in_specs,
        out_specs=pl.BlockSpec((1, tq, D), lambda b, qi: (b, qi, 0)),
        out_shape=jax.ShapeDtypeStruct((B, S, D), jnp.float32),
        scratch_shapes=[pltpu.VMEM((S, hdk), jnp.bfloat16),   # K cache (per batch)
                        pltpu.VMEM((S, hdk), jnp.bfloat16)],  # V cache (per batch)
        compiler_params=pltpu.CompilerParams(
            dimension_semantics=("parallel", "arbitrary"),
            vmem_limit_bytes=64 * 1024 * 1024),
    )(x, mask_i8, *param_list)


def init_layer_params(key, d_model, num_heads, d_ff):
    hdk = num_heads * D_K
    ks = jax.random.split(key, 8)
    s = 0.02
    f32, bf16 = jnp.float32, jnp.bfloat16
    return {
        # matmul weights stored in HBM as bf16 (f32 accumulation in-kernel)
        "wq": (s * jax.random.normal(ks[0], (d_model, hdk), f32)).astype(bf16),
        "bq": s * jax.random.normal(ks[1], (1, hdk), f32),
        "wk": (s * jax.random.normal(ks[2], (d_model, hdk), f32)).astype(bf16),
        "bk": s * jax.random.normal(ks[3], (1, hdk), f32),
        "wv": (s * jax.random.normal(ks[4], (d_model, hdk), f32)).astype(bf16),
        "bv": s * jax.random.normal(ks[5], (1, hdk), f32),
        "wo": (s * jax.random.normal(ks[6], (hdk, d_model), f32)).astype(bf16),
        "bo": jnp.zeros((1, d_model), f32),
        # Norm params init: alpha=ones, bias=zeros (as in the module)
        "a1": jnp.ones((1, d_model), f32),
        "g1": jnp.zeros((1, d_model), f32),
        "a2": jnp.ones((1, d_model), f32),
        "g2": jnp.zeros((1, d_model), f32),
        "w1": (s * jax.random.normal(ks[7], (d_model, d_ff), f32)).astype(bf16),
        "c1": jnp.zeros((1, d_ff), f32),
        "w2": (s * jax.random.normal(jax.random.fold_in(key, 99),
                                     (d_ff, d_model), f32)).astype(bf16),
        "c2": jnp.zeros((1, d_model), f32),
    }


def encoding_block(q, mask, layer_params, norm_alpha, norm_bias, num_heads):
    """Encoding_Block.forward: N stacked EncoderLayers + final Norm (fused)."""
    # masked_fill(mask.bool(), -1e9): nonzero entries are masked.  Ship int8
    # instead of f32 to cut mask DMA 4x.
    mask_i8 = (mask != 0).astype(jnp.int8)
    n = len(layer_params)
    for i, p in enumerate(layer_params):
        q = encoder_layer(q, mask_i8, p, (norm_alpha, norm_bias), num_heads,
                          apply_final_norm=(i == n - 1))
    return q


if __name__ == "__main__":
    # Small, module-consistent shapes with lane-dense feature dims.
    B, S = 2, 8            # batch, max_seq_len
    d_model = 128          # multiple of 128 lanes
    num_heads = 2          # h * d_k = 512
    d_ff = 256
    num_stack = 2

    key = jax.random.PRNGKey(0)
    k_x, k_p = jax.random.split(key)

    # input sequence of encoding vectors
    x = jax.random.normal(k_x, (B, S, d_model), jnp.float32)
    # mask: nonzero entries are masked out (masked_fill with -1e9).
    tri = jnp.triu(jnp.ones((S, S), jnp.float32), k=1)
    mask = jnp.broadcast_to(tri, (B, S, S))

    layer_keys = jax.random.split(k_p, num_stack)
    layer_params = [init_layer_params(layer_keys[i], d_model, num_heads, d_ff)
                    for i in range(num_stack)]
    norm_alpha = jnp.ones((1, d_model), jnp.float32)
    norm_bias = jnp.zeros((1, d_model), jnp.float32)

    out = encoding_block(x, mask, layer_params, norm_alpha, norm_bias, num_heads)
    out = jax.block_until_ready(out)
    assert out.shape == (B, S, d_model) and out.dtype == jnp.float32
    assert bool(jnp.all(jnp.isfinite(out)))
    print("KERNEL_OK")
</pallas_src>

<mosaic_0001>
module attributes {stable_mosaic.version = 11 : i64} {
  func.func @encoder_layer_kernel(%arg0: i32, %arg1: i32, %arg2: memref<1x8x128xf32, #tpu.memory_space<vmem>>, %arg3: memref<1x8x8xi8, #tpu.memory_space<vmem>>, %arg4: memref<128x512xbf16, #tpu.memory_space<vmem>>, %arg5: memref<1x512xf32, #tpu.memory_space<vmem>>, %arg6: memref<128x512xbf16, #tpu.memory_space<vmem>>, %arg7: memref<1x512xf32, #tpu.memory_space<vmem>>, %arg8: memref<128x512xbf16, #tpu.memory_space<vmem>>, %arg9: memref<1x512xf32, #tpu.memory_space<vmem>>, %arg10: memref<512x128xbf16, #tpu.memory_space<vmem>>, %arg11: memref<1x128xf32, #tpu.memory_space<vmem>>, %arg12: memref<1x128xf32, #tpu.memory_space<vmem>>, %arg13: memref<1x128xf32, #tpu.memory_space<vmem>>, %arg14: memref<1x128xf32, #tpu.memory_space<vmem>>, %arg15: memref<1x128xf32, #tpu.memory_space<vmem>>, %arg16: memref<128x256xbf16, #tpu.memory_space<vmem>>, %arg17: memref<1x256xf32, #tpu.memory_space<vmem>>, %arg18: memref<256x128xbf16, #tpu.memory_space<vmem>>, %arg19: memref<1x128xf32, #tpu.memory_space<vmem>>, %arg20: memref<1x128xf32, #tpu.memory_space<vmem>>, %arg21: memref<1x128xf32, #tpu.memory_space<vmem>>, %arg22: memref<1x8x128xf32, #tpu.memory_space<vmem>>, %arg23: memref<8x512xbf16, #tpu.memory_space<vmem>>, %arg24: memref<8x512xbf16, #tpu.memory_space<vmem>>) attributes {dimension_semantics = [#tpu.dimension_semantics<parallel>, #tpu.dimension_semantics<arbitrary>], iteration_bounds = array<i64: 2, 1>, scalar_prefetch = 0 : i64, scratch_operands = 2 : i64, tpu.core_type = #tpu.core_type<tc>, window_params = [{transform_indices = @transform_0, window_bounds = array<i64: 1, 8, 128>}, {transform_indices = @transform_1, window_bounds = array<i64: 1, 8, 8>}, {pipeline_mode = #tpu.pipeline_mode<synchronous>, transform_indices = @transform_2, window_bounds = array<i64: 128, 512>}, {pipeline_mode = #tpu.pipeline_mode<synchronous>, transform_indices = @transform_3, window_bounds = array<i64: 1, 512>}, {pipeline_mode = #tpu.pipeline_mode<synchronous>, transform_indices = @transform_4, window_bounds = array<i64: 128, 512>}, {pipeline_mode = #tpu.pipeline_mode<synchronous>, transform_indices = @transform_5, window_bounds = array<i64: 1, 512>}, {pipeline_mode = #tpu.pipeline_mode<synchronous>, transform_indices = @transform_6, window_bounds = array<i64: 128, 512>}, {pipeline_mode = #tpu.pipeline_mode<synchronous>, transform_indices = @transform_7, window_bounds = array<i64: 1, 512>}, {pipeline_mode = #tpu.pipeline_mode<synchronous>, transform_indices = @transform_8, window_bounds = array<i64: 512, 128>}, {pipeline_mode = #tpu.pipeline_mode<synchronous>, transform_indices = @transform_9, window_bounds = array<i64: 1, 128>}, {pipeline_mode = #tpu.pipeline_mode<synchronous>, transform_indices = @transform_10, window_bounds = array<i64: 1, 128>}, {pipeline_mode = #tpu.pipeline_mode<synchronous>, transform_indices = @transform_11, window_bounds = array<i64: 1, 128>}, {pipeline_mode = #tpu.pipeline_mode<synchronous>, transform_indices = @transform_12, window_bounds = array<i64: 1, 128>}, {pipeline_mode = #tpu.pipeline_mode<synchronous>, transform_indices = @transform_13, window_bounds = array<i64: 1, 128>}, {pipeline_mode = #tpu.pipeline_mode<synchronous>, transform_indices = @transform_14, window_bounds = array<i64: 128, 256>}, {pipeline_mode = #tpu.pipeline_mode<synchronous>, transform_indices = @transform_15, window_bounds = array<i64: 1, 256>}, {pipeline_mode = #tpu.pipeline_mode<synchronous>, transform_indices = @transform_16, window_bounds = array<i64: 256, 128>}, {pipeline_mode = #tpu.pipeline_mode<synchronous>, transform_indices = @transform_17, window_bounds = array<i64: 1, 128>}, {pipeline_mode = #tpu.pipeline_mode<synchronous>, transform_indices = @transform_18, window_bounds = array<i64: 1, 128>}, {pipeline_mode = #tpu.pipeline_mode<synchronous>, transform_indices = @transform_19, window_bounds = array<i64: 1, 128>}, {transform_indices = @transform_20, window_bounds = array<i64: 1, 8, 128>}]} {
    %c0 = arith.constant 0 : index
    %c0_0 = arith.constant 0 : index
    %0 = vector.load %arg12[%c0, %c0_0] : memref<1x128xf32, #tpu.memory_space<vmem>>, vector<1x128xf32>
    %c0_1 = arith.constant 0 : index
    %c0_2 = arith.constant 0 : index
    %1 = vector.load %arg13[%c0_1, %c0_2] : memref<1x128xf32, #tpu.memory_space<vmem>>, vector<1x128xf32>
    %c0_i32 = arith.constant 0 : i32
    %2 = arith.cmpi eq, %arg1, %c0_i32 : i32
    %3 = arith.extui %2 : i1 to i32
    %c0_i32_3 = arith.constant 0 : i32
    %4 = arith.cmpi ne, %3, %c0_i32_3 : i32
    scf.if %4 {
      %c0_66 = arith.constant 0 : index
      %c0_67 = arith.constant 0 : index
      %c0_68 = arith.constant 0 : index
      %130 = vector.load %arg2[%c0_66, %c0_67, %c0_68] : memref<1x8x128xf32, #tpu.memory_space<vmem>>, vector<1x8x128xf32>
      %131 = vector.shape_cast %130 : vector<1x8x128xf32> to vector<8x128xf32>
      %cst_69 = arith.constant dense<0.000000e+00> : vector<8xf32>
      %132 = vector.multi_reduction <add>, %131, %cst_69 [1] : vector<8x128xf32> to vector<8xf32>
      %133 = vector.shape_cast %132 : vector<8xf32> to vector<8x1xf32>
      %cst_70 = arith.constant 1.280000e+02 : f32
      %134 = vector.broadcast %cst_70 : f32 to vector<8x1xf32>
      %135 = arith.divf %133, %134 : vector<8x1xf32>
      %136 = vector.broadcast %135 : vector<8x1xf32> to vector<8x128xf32>
      %137 = arith.subf %131, %136 : vector<8x128xf32>
      %138 = arith.mulf %137, %137 : vector<8x128xf32>
      %cst_71 = arith.constant dense<0.000000e+00> : vector<8xf32>
      %139 = vector.multi_reduction <add>, %138, %cst_71 [1] : vector<8x128xf32> to vector<8xf32>
      %140 = vector.shape_cast %139 : vector<8xf32> to vector<8x1xf32>
      %cst_72 = arith.constant 0.00787401571 : f32
      %141 = vector.broadcast %cst_72 : f32 to vector<8x1xf32>
      %142 = arith.mulf %140, %141 : vector<8x1xf32>
      %143 = math.sqrt %142 : vector<8x1xf32>
      %cst_73 = arith.constant 9.99999997E-7 : f32
      %144 = vector.broadcast %cst_73 : f32 to vector<8x1xf32>
      %145 = arith.addf %143, %144 : vector<8x1xf32>
      %146 = tpu.reciprocal %145 {approx = true} : vector<8x1xf32> -> vector<8x1xf32>
      %147 = vector.broadcast %0 : vector<1x128xf32> to vector<8x128xf32>
      %148 = arith.mulf %147, %137 : vector<8x128xf32>
      %149 = vector.broadcast %146 : vector<8x1xf32> to vector<8x128xf32>
      %150 = arith.mulf %148, %149 : vector<8x128xf32>
      %151 = vector.broadcast %1 : vector<1x128xf32> to vector<8x128xf32>
      %152 = arith.addf %150, %151 : vector<8x128xf32>
      %153 = arith.truncf %152 : vector<8x128xf32> to vector<8x128xbf16>
      %c0_74 = arith.constant 0 : index
      %c0_75 = arith.constant 0 : index
      %154 = vector.load %arg6[%c0_74, %c0_75] : memref<128x512xbf16, #tpu.memory_space<vmem>>, vector<128x512xbf16>
      %cst_76 = arith.constant dense<0.000000e+00> : vector<8x512xf32>
      %155 = tpu.matmul %153, %154, %cst_76 {dimension_numbers = #tpu.dot_dimension_numbers<[1], [0], [0], [1], [0, 0, 1, 1], [], []>} : vector<8x128xbf16>, vector<128x512xbf16>, vector<8x512xf32> -> vector<8x512xf32>
      %c0_77 = arith.constant 0 : index
      %c0_78 = arith.constant 0 : index
      %156 = vector.load %arg7[%c0_77, %c0_78] : memref<1x512xf32, #tpu.memory_space<vmem>>, vector<1x512xf32>
      %157 = vector.broadcast %156 : vector<1x512xf32> to vector<8x512xf32>
      %158 = arith.addf %155, %157 : vector<8x512xf32>
      %c0_79 = arith.constant 0 : index
      %c0_80 = arith.constant 0 : index
      %159 = vector.load %arg8[%c0_79, %c0_80] : memref<128x512xbf16, #tpu.memory_space<vmem>>, vector<128x512xbf16>
      %cst_81 = arith.constant dense<0.000000e+00> : vector<8x512xf32>
      %160 = tpu.matmul %153, %159, %cst_81 {dimension_numbers = #tpu.dot_dimension_numbers<[1], [0], [0], [1], [0, 0, 1, 1], [], []>} : vector<8x128xbf16>, vector<128x512xbf16>, vector<8x512xf32> -> vector<8x512xf32>
      %c0_82 = arith.constant 0 : index
      %c0_83 = arith.constant 0 : index
      %161 = vector.load %arg9[%c0_82, %c0_83] : memref<1x512xf32, #tpu.memory_space<vmem>>, vector<1x512xf32>
      %162 = vector.broadcast %161 : vector<1x512xf32> to vector<8x512xf32>
      %163 = arith.addf %160, %162 : vector<8x512xf32>
      %164 = arith.truncf %158 : vector<8x512xf32> to vector<8x512xbf16>
      %c0_84 = arith.constant 0 : index
      %c0_85 = arith.constant 0 : index
      %165 = vector.load %arg23[%c0_84, %c0_85] : memref<8x512xbf16, #tpu.memory_space<vmem>>, vector<8x512xbf16>
      tpu.vector_store %arg23[%c0_84, %c0_85], %164 {strides = array<i32>} : memref<8x512xbf16, #tpu.memory_space<vmem>>, vector<8x512xbf16>,
      %166 = arith.truncf %163 : vector<8x512xf32> to vector<8x512xbf16>
      %c0_86 = arith.constant 0 : index
      %c0_87 = arith.constant 0 : index
      %167 = vector.load %arg24[%c0_86, %c0_87] : memref<8x512xbf16, #tpu.memory_space<vmem>>, vector<8x512xbf16>
      tpu.vector_store %arg24[%c0_86, %c0_87], %166 {strides = array<i32>} : memref<8x512xbf16, #tpu.memory_space<vmem>>, vector<8x512xbf16>,
    } else {
    }
    %c0_4 = arith.constant 0 : index
    %c0_5 = arith.constant 0 : index
    %c0_6 = arith.constant 0 : index
    %5 = vector.load %arg2[%c0_4, %c0_5, %c0_6] : memref<1x8x128xf32, #tpu.memory_space<vmem>>, vector<1x8x128xf32>
    %6 = vector.shape_cast %5 : vector<1x8x128xf32> to vector<8x128xf32>
    %cst = arith.constant dense<0.000000e+00> : vector<8xf32>
    %7 = vector.multi_reduction <add>, %6, %cst [1] : vector<8x128xf32> to vector<8xf32>
    %8 = vector.shape_cast %7 : vector<8xf32> to vector<8x1xf32>
    %cst_7 = arith.constant 1.280000e+02 : f32
    %9 = vector.broadcast %cst_7 : f32 to vector<8x1xf32>
    %10 = arith.divf %8, %9 : vector<8x1xf32>
    %11 = vector.broadcast %10 : vector<8x1xf32> to vector<8x128xf32>
    %12 = arith.subf %6, %11 : vector<8x128xf32>
    %13 = arith.mulf %12, %12 : vector<8x128xf32>
    %cst_8 = arith.constant dense<0.000000e+00> : vector<8xf32>
    %14 = vector.multi_reduction <add>, %13, %cst_8 [1] : vector<8x128xf32> to vector<8xf32>
    %15 = vector.shape_cast %14 : vector<8xf32> to vector<8x1xf32>
    %cst_9 = arith.constant 0.00787401571 : f32
    %16 = vector.broadcast %cst_9 : f32 to vector<8x1xf32>
    %17 = arith.mulf %15, %16 : vector<8x1xf32>
    %18 = math.sqrt %17 : vector<8x1xf32>
    %cst_10 = arith.constant 9.99999997E-7 : f32
    %19 = vector.broadcast %cst_10 : f32 to vector<8x1xf32>
    %20 = arith.addf %18, %19 : vector<8x1xf32>
    %21 = tpu.reciprocal %20 {approx = true} : vector<8x1xf32> -> vector<8x1xf32>
    %22 = vector.broadcast %0 : vector<1x128xf32> to vector<8x128xf32>
    %23 = arith.mulf %22, %12 : vector<8x128xf32>
    %24 = vector.broadcast %21 : vector<8x1xf32> to vector<8x128xf32>
    %25 = arith.mulf %23, %24 : vector<8x128xf32>
    %26 = vector.broadcast %1 : vector<1x128xf32> to vector<8x128xf32>
    %27 = arith.addf %25, %26 : vector<8x128xf32>
    %cst_11 = arith.constant 6.250000e-02 : f32
    %28 = vector.broadcast %cst_11 : f32 to vector<8x128xf32>
    %29 = arith.mulf %27, %28 : vector<8x128xf32>
    %30 = arith.truncf %29 : vector<8x128xf32> to vector<8x128xbf16>
    %c0_12 = arith.constant 0 : index
    %c0_13 = arith.constant 0 : index
    %31 = vector.load %arg4[%c0_12, %c0_13] : memref<128x512xbf16, #tpu.memory_space<vmem>>, vector<128x512xbf16>
    %cst_14 = arith.constant dense<0.000000e+00> : vector<8x512xf32>
    %32 = tpu.matmul %30, %31, %cst_14 {dimension_numbers = #tpu.dot_dimension_numbers<[1], [0], [0], [1], [0, 0, 1, 1], [], []>} : vector<8x128xbf16>, vector<128x512xbf16>, vector<8x512xf32> -> vector<8x512xf32>
    %c0_15 = arith.constant 0 : index
    %c0_16 = arith.constant 0 : index
    %33 = vector.load %arg5[%c0_15, %c0_16] : memref<1x512xf32, #tpu.memory_space<vmem>>, vector<1x512xf32>
    %cst_17 = arith.constant 6.250000e-02 : f32
    %34 = vector.broadcast %cst_17 : f32 to vector<1x512xf32>
    %35 = arith.mulf %33, %34 : vector<1x512xf32>
    %36 = vector.broadcast %35 : vector<1x512xf32> to vector<8x512xf32>
    %37 = arith.addf %32, %36 : vector<8x512xf32>
    %c0_18 = arith.constant 0 : index
    %c0_19 = arith.constant 0 : index
    %c0_20 = arith.constant 0 : index
    %38 = vector.load %arg3[%c0_18, %c0_19, %c0_20] : memref<1x8x8xi8, #tpu.memory_space<vmem>>, vector<1x8x8xi8>
    %39 = vector.shape_cast %38 : vector<1x8x8xi8> to vector<8x8xi8>
    %c0_i8 = arith.constant 0 : i8
    %40 = vector.broadcast %c0_i8 : i8 to vector<8x8xi8>
    %41 = arith.cmpi ne, %39, %40 : vector<8x8xi8>
    %42 = vector.extract_strided_slice %37 {offsets = [0, 0], sizes = [8, 256], strides = [1, 1]} : vector<8x512xf32> to vector<8x256xf32>
    %43 = arith.truncf %42 : vector<8x256xf32> to vector<8x256xbf16>
    %c0_21 = arith.constant 0 : index
    %c0_22 = arith.constant 0 : index
    %44 = vector.load %arg23[%c0_21, %c0_22] : memref<8x512xbf16, #tpu.memory_space<vmem>>, vector<8x256xbf16>
    %cst_23 = arith.constant dense<0.000000e+00> : vector<8x8xf32>
    %45 = tpu.matmul %43, %44, %cst_23 {dimension_numbers = #tpu.dot_dimension_numbers<[1], [1], [0], [0], [0, 0, 1, 0], [], []>} : vector<8x256xbf16>, vector<8x256xbf16>, vector<8x8xf32> -> vector<8x8xf32>
    %cst_24 = arith.constant -1.000000e+09 : f32
    %46 = vector.broadcast %cst_24 : f32 to vector<8x8xf32>
    %47 = arith.select %41, %46, %45 : vector<8x8xi1>, vector<8x8xf32>
    %cst_25 = arith.constant dense<0xFF800000> : vector<8xf32>
    %48 = vector.multi_reduction <maximumf>, %47, %cst_25 [1] : vector<8x8xf32> to vector<8xf32>
    %49 = vector.shape_cast %48 : vector<8xf32> to vector<8x1xf32>
    %50 = vector.broadcast %49 : vector<8x1xf32> to vector<8x8xf32>
    %51 = arith.subf %47, %50 : vector<8x8xf32>
    %52 = math.exp %51 : vector<8x8xf32>
    %cst_26 = arith.constant dense<0.000000e+00> : vector<8xf32>
    %53 = vector.multi_reduction <add>, %52, %cst_26 [1] : vector<8x8xf32> to vector<8xf32>
    %54 = vector.shape_cast %53 : vector<8xf32> to vector<8x1xf32>
    %55 = tpu.reciprocal %54 {approx = true} : vector<8x1xf32> -> vector<8x1xf32>
    %56 = vector.broadcast %55 : vector<8x1xf32> to vector<8x8xf32>
    %57 = arith.mulf %52, %56 : vector<8x8xf32>
    %58 = arith.truncf %57 : vector<8x8xf32> to vector<8x8xbf16>
    %c0_27 = arith.constant 0 : index
    %c0_28 = arith.constant 0 : index
    %59 = vector.load %arg24[%c0_27, %c0_28] : memref<8x512xbf16, #tpu.memory_space<vmem>>, vector<8x256xbf16>
    %cst_29 = arith.constant dense<0.000000e+00> : vector<8x256xf32>
    %60 = tpu.matmul %58, %59, %cst_29 {dimension_numbers = #tpu.dot_dimension_numbers<[1], [0], [0], [1], [0, 0, 1, 1], [], []>} : vector<8x8xbf16>, vector<8x256xbf16>, vector<8x256xf32> -> vector<8x256xf32>
    %61 = arith.truncf %60 : vector<8x256xf32> to vector<8x256xbf16>
    %62 = vector.extract_strided_slice %37 {offsets = [0, 256], sizes = [8, 256], strides = [1, 1]} : vector<8x512xf32> to vector<8x256xf32>
    %63 = arith.truncf %62 : vector<8x256xf32> to vector<8x256xbf16>
    %c0_30 = arith.constant 0 : index
    %c256 = arith.constant 256 : index
    %64 = vector.load %arg23[%c0_30, %c256] : memref<8x512xbf16, #tpu.memory_space<vmem>>, vector<8x256xbf16>
    %cst_31 = arith.constant dense<0.000000e+00> : vector<8x8xf32>
    %65 = tpu.matmul %63, %64, %cst_31 {dimension_numbers = #tpu.dot_dimension_numbers<[1], [1], [0], [0], [0, 0, 1, 0], [], []>} : vector<8x256xbf16>, vector<8x256xbf16>, vector<8x8xf32> -> vector<8x8xf32>
    %cst_32 = arith.constant -1.000000e+09 : f32
    %66 = vector.broadcast %cst_32 : f32 to vector<8x8xf32>
    %67 = arith.select %41, %66, %65 : vector<8x8xi1>, vector<8x8xf32>
    %cst_33 = arith.constant dense<0xFF800000> : vector<8xf32>
    %68 = vector.multi_reduction <maximumf>, %67, %cst_33 [1] : vector<8x8xf32> to vector<8xf32>
    %69 = vector.shape_cast %68 : vector<8xf32> to vector<8x1xf32>
    %70 = vector.broadcast %69 : vector<8x1xf32> to vector<8x8xf32>
    %71 = arith.subf %67, %70 : vector<8x8xf32>
    %72 = math.exp %71 : vector<8x8xf32>
    %cst_34 = arith.constant dense<0.000000e+00> : vector<8xf32>
    %73 = vector.multi_reduction <add>, %72, %cst_34 [1] : vector<8x8xf32> to vector<8xf32>
    %74 = vector.shape_cast %73 : vector<8xf32> to vector<8x1xf32>
    %75 = tpu.reciprocal %74 {approx = true} : vector<8x1xf32> -> vector<8x1xf32>
    %76 = vector.broadcast %75 : vector<8x1xf32> to vector<8x8xf32>
    %77 = arith.mulf %72, %76 : vector<8x8xf32>
    %78 = arith.truncf %77 : vector<8x8xf32> to vector<8x8xbf16>
    %c0_35 = arith.constant 0 : index
    %c256_36 = arith.constant 256 : index
    %79 = vector.load %arg24[%c0_35, %c256_36] : memref<8x512xbf16, #tpu.memory_space<vmem>>, vector<8x256xbf16>
    %cst_37 = arith.constant dense<0.000000e+00> : vector<8x256xf32>
    %80 = tpu.matmul %78, %79, %cst_37 {dimension_numbers = #tpu.dot_dimension_numbers<[1], [0], [0], [1], [0, 0, 1, 1], [], []>} : vector<8x8xbf16>, vector<8x256xbf16>, vector<8x256xf32> -> vector<8x256xf32>
    %81 = arith.truncf %80 : vector<8x256xf32> to vector<8x256xbf16>
    %82 = tpu.concatenate %61, %81 in 1 : vector<8x256xbf16>, vector<8x256xbf16> -> vector<8x512xbf16>
    %c0_38 = arith.constant 0 : index
    %c0_39 = arith.constant 0 : index
    %83 = vector.load %arg10[%c0_38, %c0_39] : memref<512x128xbf16, #tpu.memory_space<vmem>>, vector<512x128xbf16>
    %cst_40 = arith.constant dense<0.000000e+00> : vector<8x128xf32>
    %84 = tpu.matmul %82, %83, %cst_40 {dimension_numbers = #tpu.dot_dimension_numbers<[1], [0], [0], [1], [0, 0, 1, 1], [], []>} : vector<8x512xbf16>, vector<512x128xbf16>, vector<8x128xf32> -> vector<8x128xf32>
    %c0_41 = arith.constant 0 : index
    %c0_42 = arith.constant 0 : index
    %85 = vector.load %arg11[%c0_41, %c0_42] : memref<1x128xf32, #tpu.memory_space<vmem>>, vector<1x128xf32>
    %86 = vector.broadcast %85 : vector<1x128xf32> to vector<8x128xf32>
    %87 = arith.addf %84, %86 : vector<8x128xf32>
    %88 = arith.addf %6, %87 : vector<8x128xf32>
    %c0_43 = arith.constant 0 : index
    %c0_44 = arith.constant 0 : index
    %89 = vector.load %arg14[%c0_43, %c0_44] : memref<1x128xf32, #tpu.memory_space<vmem>>, vector<1x128xf32>
    %c0_45 = arith.constant 0 : index
    %c0_46 = arith.constant 0 : index
    %90 = vector.load %arg15[%c0_45, %c0_46] : memref<1x128xf32, #tpu.memory_space<vmem>>, vector<1x128xf32>
    %cst_47 = arith.constant dense<0.000000e+00> : vector<8xf32>
    %91 = vector.multi_reduction <add>, %88, %cst_47 [1] : vector<8x128xf32> to vector<8xf32>
    %92 = vector.shape_cast %91 : vector<8xf32> to vector<8x1xf32>
    %cst_48 = arith.constant 1.280000e+02 : f32
    %93 = vector.broadcast %cst_48 : f32 to vector<8x1xf32>
    %94 = arith.divf %92, %93 : vector<8x1xf32>
    %95 = vector.broadcast %94 : vector<8x1xf32> to vector<8x128xf32>
    %96 = arith.subf %88, %95 : vector<8x128xf32>
    %97 = arith.mulf %96, %96 : vector<8x128xf32>
    %cst_49 = arith.constant dense<0.000000e+00> : vector<8xf32>
    %98 = vector.multi_reduction <add>, %97, %cst_49 [1] : vector<8x128xf32> to vector<8xf32>
    %99 = vector.shape_cast %98 : vector<8xf32> to vector<8x1xf32>
    %cst_50 = arith.constant 0.00787401571 : f32
    %100 = vector.broadcast %cst_50 : f32 to vector<8x1xf32>
    %101 = arith.mulf %99, %100 : vector<8x1xf32>
    %102 = math.sqrt %101 : vector<8x1xf32>
    %cst_51 = arith.constant 9.99999997E-7 : f32
    %103 = vector.broadcast %cst_51 : f32 to vector<8x1xf32>
    %104 = arith.addf %102, %103 : vector<8x1xf32>
    %105 = tpu.reciprocal %104 {approx = true} : vector<8x1xf32> -> vector<8x1xf32>
    %106 = vector.broadcast %89 : vector<1x128xf32> to vector<8x128xf32>
    %107 = arith.mulf %106, %96 : vector<8x128xf32>
    %108 = vector.broadcast %105 : vector<8x1xf32> to vector<8x128xf32>
    %109 = arith.mulf %107, %108 : vector<8x128xf32>
    %110 = vector.broadcast %90 : vector<1x128xf32> to vector<8x128xf32>
    %111 = arith.addf %109, %110 : vector<8x128xf32>
    %112 = arith.truncf %111 : vector<8x128xf32> to vector<8x128xbf16>
    %c0_52 = arith.constant 0 : index
    %c0_53 = arith.constant 0 : index
    %113 = vector.load %arg16[%c0_52, %c0_53] : memref<128x256xbf16, #tpu.memory_space<vmem>>, vector<128x256xbf16>
    %cst_54 = arith.constant dense<0.000000e+00> : vector<8x256xf32>
    %114 = tpu.matmul %112, %113, %cst_54 {dimension_numbers = #tpu.dot_dimension_numbers<[1], [0], [0], [1], [0, 0, 1, 1], [], []>} : vector<8x128xbf16>, vector<128x256xbf16>, vector<8x256xf32> -> vector<8x256xf32>
    %c0_55 = arith.constant 0 : index
    %c0_56 = arith.constant 0 : index
    %115 = vector.load %arg17[%c0_55, %c0_56] : memref<1x256xf32, #tpu.memory_space<vmem>>, vector<1x256xf32>
    %116 = vector.broadcast %115 : vector<1x256xf32> to vector<8x256xf32>
    %117 = arith.addf %114, %116 : vector<8x256xf32>
    %cst_57 = arith.constant 0.000000e+00 : f32
    %118 = vector.broadcast %cst_57 : f32 to vector<8x256xf32>
    %119 = arith.maximumf %117, %118 : vector<8x256xf32>
    %120 = arith.truncf %119 : vector<8x256xf32> to vector<8x256xbf16>
    %c0_58 = arith.constant 0 : index
    %c0_59 = arith.constant 0 : index
    %121 = vector.load %arg18[%c0_58, %c0_59] : memref<256x128xbf16, #tpu.memory_space<vmem>>, vector<256x128xbf16>
    %cst_60 = arith.constant dense<0.000000e+00> : vector<8x128xf32>
    %122 = tpu.matmul %120, %121, %cst_60 {dimension_numbers = #tpu.dot_dimension_numbers<[1], [0], [0], [1], [0, 0, 1, 1], [], []>} : vector<8x256xbf16>, vector<256x128xbf16>, vector<8x128xf32> -> vector<8x128xf32>
    %c0_61 = arith.constant 0 : index
    %c0_62 = arith.constant 0 : index
    %123 = vector.load %arg19[%c0_61, %c0_62] : memref<1x128xf32, #tpu.memory_space<vmem>>, vector<1x128xf32>
    %124 = vector.broadcast %123 : vector<1x128xf32> to vector<8x128xf32>
    %125 = arith.addf %122, %124 : vector<8x128xf32>
    %126 = arith.addf %88, %125 : vector<8x128xf32>
    %c0_63 = arith.constant 0 : index
    %c0_64 = arith.constant 0 : index
    %c0_65 = arith.constant 0 : index
    %127 = vector.load %arg22[%c0_63, %c0_64, %c0_65] : memref<1x8x128xf32, #tpu.memory_space<vmem>>, vector<1x8x128xf32>
    %128 = vector.shape_cast %127 : vector<1x8x128xf32> to vector<8x128xf32>
    %129 = vector.shape_cast %126 : vector<8x128xf32> to vector<1x8x128xf32>
    tpu.vector_store %arg22[%c0_63, %c0_64, %c0_65], %129 {strides = array<i32>} : memref<1x8x128xf32, #tpu.memory_space<vmem>>, vector<1x8x128xf32>,
    return
  }
  func.func @transform_0(%arg0: i32, %arg1: i32) -> (i32, i32, i32) {
    %c0_i32 = arith.constant 0 : i32
    %c0_i32_0 = arith.constant 0 : i32
    %c0_i32_1 = arith.constant 0 : i32
    return %arg0, %c0_i32, %c0_i32_0 : i32, i32, i32
  }
  func.func @transform_1(%arg0: i32, %arg1: i32) -> (i32, i32, i32) {
    %c0_i32 = arith.constant 0 : i32
    %c0_i32_0 = arith.constant 0 : i32
    return %arg0, %arg1, %c0_i32 : i32, i32, i32
  }
  func.func @transform_2(%arg0: i32, %arg1: i32) -> (i32, i32) {
    %c0_i32 = arith.constant 0 : i32
    %c0_i32_0 = arith.constant 0 : i32
    %c0_i32_1 = arith.constant 0 : i32
    return %c0_i32, %c0_i32_0 : i32, i32
  }
  func.func @transform_3(%arg0: i32, %arg1: i32) -> (i32, i32) {
    %c0_i32 = arith.constant 0 : i32
    %c0_i32_0 = arith.constant 0 : i32
    %c0_i32_1 = arith.constant 0 : i32
    return %c0_i32, %c0_i32_0 : i32, i32
  }
  func.func @transform_4(%arg0: i32, %arg1: i32) -> (i32, i32) {
    %c0_i32 = arith.constant 0 : i32
    %c0_i32_0 = arith.constant 0 : i32
    %c0_i32_1 = arith.constant 0 : i32
    return %c0_i32, %c0_i32_0 : i32, i32
  }
  func.func @transform_5(%arg0: i32, %arg1: i32) -> (i32, i32) {
    %c0_i32 = arith.constant 0 : i32
    %c0_i32_0 = arith.constant 0 : i32
    %c0_i32_1 = arith.constant 0 : i32
    return %c0_i32, %c0_i32_0 : i32, i32
  }
  func.func @transform_6(%arg0: i32, %arg1: i32) -> (i32, i32) {
    %c0_i32 = arith.constant 0 : i32
    %c0_i32_0 = arith.constant 0 : i32
    %c0_i32_1 = arith.constant 0 : i32
    return %c0_i32, %c0_i32_0 : i32, i32
  }
  func.func @transform_7(%arg0: i32, %arg1: i32) -> (i32, i32) {
    %c0_i32 = arith.constant 0 : i32
    %c0_i32_0 = arith.constant 0 : i32
    %c0_i32_1 = arith.constant 0 : i32
    return %c0_i32, %c0_i32_0 : i32, i32
  }
  func.func @transform_8(%arg0: i32, %arg1: i32) -> (i32, i32) {
    %c0_i32 = arith.constant 0 : i32
    %c0_i32_0 = arith.constant 0 : i32
    %c0_i32_1 = arith.constant 0 : i32
    return %c0_i32, %c0_i32_0 : i32, i32
  }
  func.func @transform_9(%arg0: i32, %arg1: i32) -> (i32, i32) {
    %c0_i32 = arith.constant 0 : i32
    %c0_i32_0 = arith.constant 0 : i32
    %c0_i32_1 = arith.constant 0 : i32
    return %c0_i32, %c0_i32_0 : i32, i32
  }
  func.func @transform_10(%arg0: i32, %arg1: i32) -> (i32, i32) {
    %c0_i32 = arith.constant 0 : i32
    %c0_i32_0 = arith.constant 0 : i32
    %c0_i32_1 = arith.constant 0 : i32
    return %c0_i32, %c0_i32_0 : i32, i32
  }
  func.func @transform_11(%arg0: i32, %arg1: i32) -> (i32, i32) {
    %c0_i32 = arith.constant 0 : i32
    %c0_i32_0 = arith.constant 0 : i32
    %c0_i32_1 = arith.constant 0 : i32
    return %c0_i32, %c0_i32_0 : i32, i32
  }
  func.func @transform_12(%arg0: i32, %arg1: i32) -> (i32, i32) {
    %c0_i32 = arith.constant 0 : i32
    %c0_i32_0 = arith.constant 0 : i32
    %c0_i32_1 = arith.constant 0 : i32
    return %c0_i32, %c0_i32_0 : i32, i32
  }
  func.func @transform_13(%arg0: i32, %arg1: i32) -> (i32, i32) {
    %c0_i32 = arith.constant 0 : i32
    %c0_i32_0 = arith.constant 0 : i32
    %c0_i32_1 = arith.constant 0 : i32
    return %c0_i32, %c0_i32_0 : i32, i32
  }
  func.func @transform_14(%arg0: i32, %arg1: i32) -> (i32, i32) {
    %c0_i32 = arith.constant 0 : i32
    %c0_i32_0 = arith.constant 0 : i32
    %c0_i32_1 = arith.constant 0 : i32
    return %c0_i32, %c0_i32_0 : i32, i32
  }
  func.func @transform_15(%arg0: i32, %arg1: i32) -> (i32, i32) {
    %c0_i32 = arith.constant 0 : i32
    %c0_i32_0 = arith.constant 0 : i32
    %c0_i32_1 = arith.constant 0 : i32
    return %c0_i32, %c0_i32_0 : i32, i32
  }
  func.func @transform_16(%arg0: i32, %arg1: i32) -> (i32, i32) {
    %c0_i32 = arith.constant 0 : i32
    %c0_i32_0 = arith.constant 0 : i32
    %c0_i32_1 = arith.constant 0 : i32
    return %c0_i32, %c0_i32_0 : i32, i32
  }
  func.func @transform_17(%arg0: i32, %arg1: i32) -> (i32, i32) {
    %c0_i32 = arith.constant 0 : i32
    %c0_i32_0 = arith.constant 0 : i32
    %c0_i32_1 = arith.constant 0 : i32
    return %c0_i32, %c0_i32_0 : i32, i32
  }
  func.func @transform_18(%arg0: i32, %arg1: i32) -> (i32, i32) {
    %c0_i32 = arith.constant 0 : i32
    %c0_i32_0 = arith.constant 0 : i32
    %c0_i32_1 = arith.constant 0 : i32
    return %c0_i32, %c0_i32_0 : i32, i32
  }
  func.func @transform_19(%arg0: i32, %arg1: i32) -> (i32, i32) {
    %c0_i32 = arith.constant 0 : i32
    %c0_i32_0 = arith.constant 0 : i32
    %c0_i32_1 = arith.constant 0 : i32
    return %c0_i32, %c0_i32_0 : i32, i32
  }
  func.func @transform_20(%arg0: i32, %arg1: i32) -> (i32, i32, i32) {
    %c0_i32 = arith.constant 0 : i32
    %c0_i32_0 = arith.constant 0 : i32
    return %arg0, %arg1, %c0_i32 : i32, i32, i32
  }
}

</mosaic_0001>

<llo_original>
// kernel: tpu_custom_call.1
$region0: #{tpu_custom_call.1}
  #allocation0 [shape = 'u32[]', space=smem, size = 0x4, offset = 0x4, fixed_abs, tag = 'smem constant byte address 0x4 - core index']
  #allocation1 [shape = 'u32[144,128]{1,0:T(1,128)}', space=vmem, size = 0x12000, scoped, tag = 'internal scratch']
  #allocation2 [shape = 'bf16[8,512]{1,0:T(8,128)(2,1)}', space=vmem, size = 0x2000, scoped, tag = 'scratch operand']
  #allocation3 [shape = 'bf16[8,512]{1,0:T(8,128)(2,1)}', space=vmem, size = 0x2000, scoped, tag = 'scratch operand']
  %s0 = inlined_call_operand.hbm [shape: f32[2,8,128], index: 0, kind: input, shape index: {}]
  %s1 = inlined_call_operand.hbm [shape: s8[2,8,8], index: 1, kind: input, shape index: {}]
  %s2 = inlined_call_operand.hbm [shape: bf16[128,512], index: 2, kind: input, shape index: {}]
  %s3 = inlined_call_operand.hbm [shape: f32[1,512], index: 3, kind: input, shape index: {}]
  %s4 = inlined_call_operand.hbm [shape: bf16[128,512], index: 4, kind: input, shape index: {}]
  %s5 = inlined_call_operand.hbm [shape: f32[1,512], index: 5, kind: input, shape index: {}]
  %s6 = inlined_call_operand.hbm [shape: bf16[128,512], index: 6, kind: input, shape index: {}]
  %s7 = inlined_call_operand.hbm [shape: f32[1,512], index: 7, kind: input, shape index: {}]
  %s8 = inlined_call_operand.hbm [shape: bf16[512,128], index: 8, kind: input, shape index: {}]
  %s9 = inlined_call_operand.hbm [shape: f32[1,128], index: 9, kind: input, shape index: {}]
  %s10 = inlined_call_operand.hbm [shape: f32[1,128], index: 10, kind: input, shape index: {}]
  %s11 = inlined_call_operand.hbm [shape: f32[1,128], index: 11, kind: input, shape index: {}]
  %s12 = inlined_call_operand.hbm [shape: f32[1,128], index: 12, kind: input, shape index: {}]
  %s13 = inlined_call_operand.hbm [shape: f32[1,128], index: 13, kind: input, shape index: {}]
  %s14 = inlined_call_operand.hbm [shape: bf16[128,256], index: 14, kind: input, shape index: {}]
  %s15 = inlined_call_operand.hbm [shape: f32[1,256], index: 15, kind: input, shape index: {}]
  %s16 = inlined_call_operand.hbm [shape: bf16[256,128], index: 16, kind: input, shape index: {}]
  %s17 = inlined_call_operand.hbm [shape: f32[1,128], index: 17, kind: input, shape index: {}]
  %s18 = inlined_call_operand.hbm [shape: f32[1,128], index: 18, kind: input, shape index: {}]
  %s19 = inlined_call_operand.hbm [shape: f32[1,128], index: 19, kind: input, shape index: {}]
  %s20 = inlined_call_operand.hbm [shape: f32[2,8,128], index: 20, kind: output, shape index: {}]
  %s21 = sld [smem:[#allocation0]]
  $region197: #{tpu_custom_call.1} parent=0
    _
  %s23 = ssub.s32 1, %s21
  %s24 = scalar_select 0, %s23, %s21
  $region1: #{tpu_custom_call.1} parent=0
    #allocation4 [shape = 'u8[8192]{0}', space=vmem, size = 0x2000, scoped, tag = 'input window, operand 0']
    #allocation5 [shape = 's32[2]{0}', space=sflag, size = 0x8, scoped, tag = 'scoped memory for tpu_custom_call.1']
    #allocation6 [shape = 's32[2]{0}', space=sflag, size = 0x8, scoped, tag = 'scoped memory for tpu_custom_call.1']
    #allocation7 [shape = 'u8[2048]{0}', space=vmem, size = 0x800, scoped, tag = 'input window, operand 1']
    #allocation8 [shape = 's32[2]{0}', space=sflag, size = 0x8, scoped, tag = 'scoped memory for tpu_custom_call.1']
    #allocation9 [shape = 'u8[131072]{0}', space=vmem, size = 0x20000, scoped, tag = 'input window, operand 2, single buffered']
    #allocation10 [shape = 'u8[2048]{0}', space=vmem, size = 0x800, scoped, tag = 'input window, operand 3, single buffered']
    #allocation11 [shape = 's32[1]{0}', space=sflag, size = 0x4, scoped, tag = 'scoped memory for tpu_custom_call.1']
    #allocation12 [shape = 'u8[131072]{0}', space=vmem, size = 0x20000, scoped, tag = 'input window, operand 4, single buffered']
    #allocation13 [shape = 'u8[2048]{0}', space=vmem, size = 0x800, scoped, tag = 'input window, operand 5, single buffered']
    #allocation14 [shape = 's32[1]{0}', space=sflag, size = 0x4, scoped, tag = 'scoped memory for tpu_custom_call.1']
    #allocation15 [shape = 'u8[131072]{0}', space=vmem, size = 0x20000, scoped, tag = 'input window, operand 6, single buffered']
    #allocation16 [shape = 'u8[2048]{0}', space=vmem, size = 0x800, scoped, tag = 'input window, operand 7, single buffered']
    #allocation17 [shape = 's32[1]{0}', space=sflag, size = 0x4, scoped, tag = 'scoped memory for tpu_custom_call.1']
    #allocation18 [shape = 'u8[131072]{0}', space=vmem, size = 0x20000, scoped, tag = 'input window, operand 8, single buffered']
    #allocation19 [shape = 'u8[512]{0}', space=vmem, size = 0x400, scoped, tag = 'input window, operand 9, single buffered']
    #allocation20 [shape = 's32[1]{0}', space=sflag, size = 0x4, scoped, tag = 'scoped memory for tpu_custom_call.1']
    #allocation21 [shape = 'u8[512]{0}', space=vmem, size = 0x400, scoped, tag = 'input window, operand 10, single buffered']
    #allocation22 [shape = 'u8[512]{0}', space=vmem, size = 0x400, scoped, tag = 'input window, operand 11, single buffered']
    #allocation23 [shape = 's32[1]{0}', space=sflag, size = 0x4, scoped, tag = 'scoped memory for tpu_custom_call.1']
    #allocation24 [shape = 'u8[512]{0}', space=vmem, size = 0x400, scoped, tag = 'input window, operand 12, single buffered']
    #allocation25 [shape = 'u8[512]{0}', space=vmem, size = 0x400, scoped, tag = 'input window, operand 13, single buffered']
    #allocation26 [shape = 's32[1]{0}', space=sflag, size = 0x4, scoped, tag = 'scoped memory for tpu_custom_call.1']
    #allocation27 [shape = 'u8[65536]{0}', space=vmem, size = 0x10000, scoped, tag = 'input window, operand 14, single buffered']
    #allocation28 [shape = 'u8[1024]{0}', space=vmem, size = 0x400, scoped, tag = 'input window, operand 15, single buffered']
    #allocation29 [shape = 's32[1]{0}', space=sflag, size = 0x4, scoped, tag = 'scoped memory for tpu_custom_call.1']
    #allocation30 [shape = 'u8[65536]{0}', space=vmem, size = 0x10000, scoped, tag = 'input window, operand 16, single buffered']
    #allocation31 [shape = 'u8[512]{0}', space=vmem, size = 0x400, scoped, tag = 'input window, operand 17, single buffered']
    #allocation32 [shape = 's32[1]{0}', space=sflag, size = 0x4, scoped, tag = 'scoped memory for tpu_custom_call.1']
    #allocation33 [shape = 'u8[512]{0}', space=vmem, size = 0x400, scoped, tag = 'input window, operand 18, single buffered']
    #allocation34 [shape = 'u8[512]{0}', space=vmem, size = 0x400, scoped, tag = 'input window, operand 19, single buffered']
    #allocation35 [shape = 's32[1]{0}', space=sflag, size = 0x4, scoped, tag = 'scoped memory for tpu_custom_call.1']
    #allocation36 [shape = 'u8[8192]{0}', space=vmem, size = 0x2000, scoped, tag = 'output window, operand 0']
    %25 = vsyncpa [#allocation5], 0
    %s26 = scalar_lea.sflag [#allocation5], 1
    %27 = vsyncpa %s26, 0
    %28 = vsyncpa [#allocation8], 0
    %s29 = scalar_lea.sflag [#allocation8], 1
    %30 = vsyncpa %s29, 0
    %31 = vsyncpa [#allocation11], 0
    %32 = vsyncpa [#allocation14], 0
    %33 = vsyncpa [#allocation17], 0
    %34 = vsyncpa [#allocation20], 0
    %35 = vsyncpa [#allocation23], 0
    %36 = vsyncpa [#allocation26], 0
    %37 = vsyncpa [#allocation29], 0
    %38 = vsyncpa [#allocation32], 0
    %39 = vsyncpa [#allocation35], 0
    %40 = vsyncpa [#allocation6], 0
    %s41 = scalar_lea.sflag [#allocation6], 1
    %42 = vsyncpa %s41, 0
    loop: start=0, step=1, limit=4
    $region2: #{tpu_custom_call.1} parent=1 // loop_pre_header
      _
    $region3: #{tpu_custom_call.1} parent=1 // loop_header
      %s44 = sphi 0, %s48
      %p45 = scmp.ge.s32.totalorder %s44, 4
      %s51 = sphi 0, %s63
      %s52 = sphi 0, %s59
      %s53 = sphi 0, %s51
      %s54 = sphi 0, %s52
      %s55 = sphi 0, %s53
      %s56 = sphi 0, %s54
      %s66 = sphi 0, %s68
      %s69 = sphi 0, %s66
      %s70 = sphi 0, %s69
      %s86 = sphi 0, %s70
      %s94 = sphi 0, %s96
      %s97 = sphi 0, %s94
      %s98 = sphi 0, %s97
      %s114 = sphi 0, %s98
      %s118 = sphi 0, %s118
      %s120 = sphi 0, %s118
      %s121 = sphi 0, %s120
      %s135 = sphi 0, %s121
      %s139 = sphi 0, %s139
      %s141 = sphi 0, %s139
      %s142 = sphi 0, %s141
      %s156 = sphi 0, %s142
      %s160 = sphi 0, %s160
      %s162 = sphi 0, %s160
      %s163 = sphi 0, %s162
      %s177 = sphi 0, %s163
      %s181 = sphi 0, %s181
      %s183 = sphi 0, %s181
      %s184 = sphi 0, %s183
      %s198 = sphi 0, %s184
      %s202 = sphi 0, %s202
      %s204 = sphi 0, %s202
      %s205 = sphi 0, %s204
      %s219 = sphi 0, %s205
      %s223 = sphi 0, %s223
      %s225 = sphi 0, %s223
      %s226 = sphi 0, %s225
      %s240 = sphi 0, %s226
      %s244 = sphi 0, %s244
      %s246 = sphi 0, %s244
      %s247 = sphi 0, %s246
      %s261 = sphi 0, %s247
      %s265 = sphi 0, %s265
      %s267 = sphi 0, %s265
      %s268 = sphi 0, %s267
      %s282 = sphi 0, %s268
      %s286 = sphi 0, %s286
      %s288 = sphi 0, %s286
      %s289 = sphi 0, %s288
      %s303 = sphi 0, %s289
      %s307 = sphi 0, %s307
      %s309 = sphi 0, %s307
      %s310 = sphi 0, %s309
      %s324 = sphi 0, %s310
      %s328 = sphi 0, %s328
      %s330 = sphi 0, %s328
      %s331 = sphi 0, %s330
      %s345 = sphi 0, %s331
      %s349 = sphi 0, %s349
      %s351 = sphi 0, %s349
      %s352 = sphi 0, %s351
      %s366 = sphi 0, %s352
      %s370 = sphi 0, %s370
      %s372 = sphi 0, %s370
      %s373 = sphi 0, %s372
      %s387 = sphi 0, %s373
      %s391 = sphi 0, %s391
      %s393 = sphi 0, %s391
      %s394 = sphi 0, %s393
      %s408 = sphi 0, %s394
      %s412 = sphi 0, %s412
      %s414 = sphi 0, %s412
      %s415 = sphi 0, %s414
      %s429 = sphi 0, %s415
      %s433 = sphi 0, %s433
      %s435 = sphi 0, %s433
      %s436 = sphi 0, %s435
      %s450 = sphi 0, %s436
      %s454 = sphi 0, %s454
      %s456 = sphi 0, %s454
      %s457 = sphi 0, %s456
      %s471 = sphi 0, %s457
      %s475 = sphi 0, %s475
      %s477 = sphi 0, %s475
      %s478 = sphi 0, %s477
      %s492 = sphi 0, %s478
      %s500 = sphi 0, %s502
      %s503 = sphi 0, %s500
      %s504 = sphi 0, %s503
      %s520 = sphi 0, %s504
    $region4: #{tpu_custom_call.1} parent=1 // loop_header_branch
      %47 = sbr.rel (%p45) target = $region8
    $region5: #{tpu_custom_call.1} parent=1 // loop_body
      %s49 = ssub.s32 %s44, 1
      %s50 = ssub.s32 %s44, 2
      %s57 = sadd.s32 1, %s52
      %p58 = scmp.ge.s32.totalorder %s57, 1
      %s59 = scalar_select %p58, 0, %s57
      %s60 = sadd.s32 1, %s51
      %s61 = scalar_select %p58, %s60, %s51
      %p62 = scmp.ge.s32.totalorder %s61, 2
      %s63 = scalar_select %p62, 0, %s61
      %s64 = ssub.s32 %s51, %s63
      %p65 = scmp.eq.s32.totalorder %s64, 0
      %s67 = sadd.s32 %s66, 1
      %s68 = scalar_select %p65, %s66, %s67
      %p71 = pneg %p65
      %p72 = scmp.eq.s32.totalorder %s44, 1
      %p73 = por %p71, %p72
      %p74 = scmp.ne.s32.totalorder %s66, %s69
      %p75 = scmp.eq.s32.totalorder %s44, 0
      %p76 = por %p74, %p75
      %p77 = scmp.ne.s32.totalorder %s66, %s69
      %p78 = scmp.eq.s32.totalorder %s49, 1
      %p79 = por %p77, %p78
      %p80 = scmp.ne.s32.totalorder %s69, %s70
      %p81 = scmp.eq.s32.totalorder %s49, 0
      %p82 = por %p80, %p81
      %p83 = scmp.ne.s32.totalorder %s69, %s70
      %p84 = scmp.eq.s32.totalorder %s50, 1
      %p85 = por %p83, %p84
      %p87 = scmp.ne.s32.totalorder %s70, %s86
      %p88 = scmp.eq.s32.totalorder %s50, 0
      %p89 = por %p87, %p88
      %s90 = ssub.s32 %s51, %s63
      %s91 = ssub.s32 %s52, %s59
      %s92 = sor.u32 %s90, %s91
      %p93 = scmp.eq.s32.totalorder %s92, 0
      %s95 = sadd.s32 %s94, 1
      %s96 = scalar_select %p93, %s94, %s95
      %p99 = pneg %p93
      %p100 = scmp.eq.s32.totalorder %s44, 1
      %p101 = por %p99, %p100
      %p102 = scmp.ne.s32.totalorder %s94, %s97
      %p103 = scmp.eq.s32.totalorder %s44, 0
      %p104 = por %p102, %p103
      %p105 = scmp.ne.s32.totalorder %s94, %s97
      %p106 = scmp.eq.s32.totalorder %s49, 1
      %p107 = por %p105, %p106
      %p108 = scmp.ne.s32.totalorder %s97, %s98
      %p109 = scmp.eq.s32.totalorder %s49, 0
      %p110 = por %p108, %p109
      %p111 = scmp.ne.s32.totalorder %s97, %s98
      %p112 = scmp.eq.s32.totalorder %s50, 1
      %p113 = por %p111, %p112
      %p115 = scmp.ne.s32.totalorder %s98, %s114
      %p116 = scmp.eq.s32.totalorder %s50, 0
      %p117 = por %p115, %p116
      %s119 = sadd.s32 %s118, 1
      %p122 = scmp.eq.s32.totalorder %s44, 1
      %p123 = scmp.ne.s32.totalorder %s118, %s120
      %p124 = scmp.eq.s32.totalorder %s44, 0
      %p125 = por %p123, %p124
      %p126 = scmp.ne.s32.totalorder %s118, %s120
      %p127 = scmp.eq.s32.totalorder %s49, 1
      %p128 = por %p126, %p127
      %p129 = scmp.ne.s32.totalorder %s120, %s121
      %p130 = scmp.eq.s32.totalorder %s49, 0
      %p131 = por %p129, %p130
      %p132 = scmp.ne.s32.totalorder %s120, %s121
      %p133 = scmp.eq.s32.totalorder %s50, 1
      %p134 = por %p132, %p133
      %p136 = scmp.ne.s32.totalorder %s121, %s135
      %p137 = scmp.eq.s32.totalorder %s50, 0
      %p138 = por %p136, %p137
      %s140 = sadd.s32 %s139, 1
      %p143 = scmp.eq.s32.totalorder %s44, 1
      %p144 = scmp.ne.s32.totalorder %s139, %s141
      %p145 = scmp.eq.s32.totalorder %s44, 0
      %p146 = por %p144, %p145
      %p147 = scmp.ne.s32.totalorder %s139, %s141
      %p148 = scmp.eq.s32.totalorder %s49, 1
      %p149 = por %p147, %p148
      %p150 = scmp.ne.s32.totalorder %s141, %s142
      %p151 = scmp.eq.s32.totalorder %s49, 0
      %p152 = por %p150, %p151
      %p153 = scmp.ne.s32.totalorder %s141, %s142
      %p154 = scmp.eq.s32.totalorder %s50, 1
      %p155 = por %p153, %p154
      %p157 = scmp.ne.s32.totalorder %s142, %s156
      %p158 = scmp.eq.s32.totalorder %s50, 0
      %p159 = por %p157, %p158
      %s161 = sadd.s32 %s160, 1
      %p164 = scmp.eq.s32.totalorder %s44, 1
      %p165 = scmp.ne.s32.totalorder %s160, %s162
      %p166 = scmp.eq.s32.totalorder %s44, 0
      %p167 = por %p165, %p166
      %p168 = scmp.ne.s32.totalorder %s160, %s162
      %p169 = scmp.eq.s32.totalorder %s49, 1
      %p170 = por %p168, %p169
      %p171 = scmp.ne.s32.totalorder %s162, %s163
      %p172 = scmp.eq.s32.totalorder %s49, 0
      %p173 = por %p171, %p172
      %p174 = scmp.ne.s32.totalorder %s162, %s163
      %p175 = scmp.eq.s32.totalorder %s50, 1
      %p176 = por %p174, %p175
      %p178 = scmp.ne.s32.totalorder %s163, %s177
      %p179 = scmp.eq.s32.totalorder %s50, 0
      %p180 = por %p178, %p179
      %s182 = sadd.s32 %s181, 1
      %p185 = scmp.eq.s32.totalorder %s44, 1
      %p186 = scmp.ne.s32.totalorder %s181, %s183
      %p187 = scmp.eq.s32.totalorder %s44, 0
      %p188 = por %p186, %p187
      %p189 = scmp.ne.s32.totalorder %s181, %s183
      %p190 = scmp.eq.s32.totalorder %s49, 1
      %p191 = por %p189, %p190
      %p192 = scmp.ne.s32.totalorder %s183, %s184
      %p193 = scmp.eq.s32.totalorder %s49, 0
      %p194 = por %p192, %p193
      %p195 = scmp.ne.s32.totalorder %s183, %s184
      %p196 = scmp.eq.s32.totalorder %s50, 1
      %p197 = por %p195, %p196
      %p199 = scmp.ne.s32.totalorder %s184, %s198
      %p200 = scmp.eq.s32.totalorder %s50, 0
      %p201 = por %p199, %p200
      %s203 = sadd.s32 %s202, 1
      %p206 = scmp.eq.s32.totalorder %s44, 1
      %p207 = scmp.ne.s32.totalorder %s202, %s204
      %p208 = scmp.eq.s32.totalorder %s44, 0
      %p209 = por %p207, %p208
      %p210 = scmp.ne.s32.totalorder %s202, %s204
      %p211 = scmp.eq.s32.totalorder %s49, 1
      %p212 = por %p210, %p211
      %p213 = scmp.ne.s32.totalorder %s204, %s205
      %p214 = scmp.eq.s32.totalorder %s49, 0
      %p215 = por %p213, %p214
      %p216 = scmp.ne.s32.totalorder %s204, %s205
      %p217 = scmp.eq.s32.totalorder %s50, 1
      %p218 = por %p216, %p217
      %p220 = scmp.ne.s32.totalorder %s205, %s219
      %p221 = scmp.eq.s32.totalorder %s50, 0
      %p222 = por %p220, %p221
      %s224 = sadd.s32 %s223, 1
      %p227 = scmp.eq.s32.totalorder %s44, 1
      %p228 = scmp.ne.s32.totalorder %s223, %s225
      %p229 = scmp.eq.s32.totalorder %s44, 0
      %p230 = por %p228, %p229
      %p231 = scmp.ne.s32.totalorder %s223, %s225
      %p232 = scmp.eq.s32.totalorder %s49, 1
      %p233 = por %p231, %p232
      %p234 = scmp.ne.s32.totalorder %s225, %s226
      %p235 = scmp.eq.s32.totalorder %s49, 0
      %p236 = por %p234, %p235
      %p237 = scmp.ne.s32.totalorder %s225, %s226
      %p238 = scmp.eq.s32.totalorder %s50, 1
      %p239 = por %p237, %p238
      %p241 = scmp.ne.s32.totalorder %s226, %s240
      %p242 = scmp.eq.s32.totalorder %s50, 0
      %p243 = por %p241, %p242
      %s245 = sadd.s32 %s244, 1
      %p248 = scmp.eq.s32.totalorder %s44, 1
      %p249 = scmp.ne.s32.totalorder %s244, %s246
      %p250 = scmp.eq.s32.totalorder %s44, 0
      %p251 = por %p249, %p250
      %p252 = scmp.ne.s32.totalorder %s244, %s246
      %p253 = scmp.eq.s32.totalorder %s49, 1
      %p254 = por %p252, %p253
      %p255 = scmp.ne.s32.totalorder %s246, %s247
      %p256 = scmp.eq.s32.totalorder %s49, 0
      %p257 = por %p255, %p256
      %p258 = scmp.ne.s32.totalorder %s246, %s247
      %p259 = scmp.eq.s32.totalorder %s50, 1
      %p260 = por %p258, %p259
      %p262 = scmp.ne.s32.totalorder %s247, %s261
      %p263 = scmp.eq.s32.totalorder %s50, 0
      %p264 = por %p262, %p263
      %s266 = sadd.s32 %s265, 1
      %p269 = scmp.eq.s32.totalorder %s44, 1
      %p270 = scmp.ne.s32.totalorder %s265, %s267
      %p271 = scmp.eq.s32.totalorder %s44, 0
      %p272 = por %p270, %p271
      %p273 = scmp.ne.s32.totalorder %s265, %s267
      %p274 = scmp.eq.s32.totalorder %s49, 1
      %p275 = por %p273, %p274
      %p276 = scmp.ne.s32.totalorder %s267, %s268
      %p277 = scmp.eq.s32.totalorder %s49, 0
      %p278 = por %p276, %p277
      %p279 = scmp.ne.s32.totalorder %s267, %s268
      %p280 = scmp.eq.s32.totalorder %s50, 1
      %p281 = por %p279, %p280
      %p283 = scmp.ne.s32.totalorder %s268, %s282
      %p284 = scmp.eq.s32.totalorder %s50, 0
      %p285 = por %p283, %p284
      %s287 = sadd.s32 %s286, 1
      %p290 = scmp.eq.s32.totalorder %s44, 1
      %p291 = scmp.ne.s32.totalorder %s286, %s288
      %p292 = scmp.eq.s32.totalorder %s44, 0
      %p293 = por %p291, %p292
      %p294 = scmp.ne.s32.totalorder %s286, %s288
      %p295 = scmp.eq.s32.totalorder %s49, 1
      %p296 = por %p294, %p295
      %p297 = scmp.ne.s32.totalorder %s288, %s289
      %p298 = scmp.eq.s32.totalorder %s49, 0
      %p299 = por %p297, %p298
      %p300 = scmp.ne.s32.totalorder %s288, %s289
      %p301 = scmp.eq.s32.totalorder %s50, 1
      %p302 = por %p300, %p301
      %p304 = scmp.ne.s32.totalorder %s289, %s303
      %p305 = scmp.eq.s32.totalorder %s50, 0
      %p306 = por %p304, %p305
      %s308 = sadd.s32 %s307, 1
      %p311 = scmp.eq.s32.totalorder %s44, 1
      %p312 = scmp.ne.s32.totalorder %s307, %s309
      %p313 = scmp.eq.s32.totalorder %s44, 0
      %p314 = por %p312, %p313
      %p315 = scmp.ne.s32.totalorder %s307, %s309
      %p316 = scmp.eq.s32.totalorder %s49, 1
      %p317 = por %p315, %p316
      %p318 = scmp.ne.s32.totalorder %s309, %s310
      %p319 = scmp.eq.s32.totalorder %s49, 0
      %p320 = por %p318, %p319
      %p321 = scmp.ne.s32.totalorder %s309, %s310
      %p322 = scmp.eq.s32.totalorder %s50, 1
      %p323 = por %p321, %p322
      %p325 = scmp.ne.s32.totalorder %s310, %s324
      %p326 = scmp.eq.s32.totalorder %s50, 0
      %p327 = por %p325, %p326
      %s329 = sadd.s32 %s328, 1
      %p332 = scmp.eq.s32.totalorder %s44, 1
      %p333 = scmp.ne.s32.totalorder %s328, %s330
      %p334 = scmp.eq.s32.totalorder %s44, 0
      %p335 = por %p333, %p334
      %p336 = scmp.ne.s32.totalorder %s328, %s330
      %p337 = scmp.eq.s32.totalorder %s49, 1
      %p338 = por %p336, %p337
      %p339 = scmp.ne.s32.totalorder %s330, %s331
      %p340 = scmp.eq.s32.totalorder %s49, 0
      %p341 = por %p339, %p340
      %p342 = scmp.ne.s32.totalorder %s330, %s331
      %p343 = scmp.eq.s32.totalorder %s50, 1
      %p344 = por %p342, %p343
      %p346 = scmp.ne.s32.totalorder %s331, %s345
      %p347 = scmp.eq.s32.totalorder %s50, 0
      %p348 = por %p346, %p347
      %s350 = sadd.s32 %s349, 1
      %p353 = scmp.eq.s32.totalorder %s44, 1
      %p354 = scmp.ne.s32.totalorder %s349, %s351
      %p355 = scmp.eq.s32.totalorder %s44, 0
      %p356 = por %p354, %p355
      %p357 = scmp.ne.s32.totalorder %s349, %s351
      %p358 = scmp.eq.s32.totalorder %s49, 1
      %p359 = por %p357, %p358
      %p360 = scmp.ne.s32.totalorder %s351, %s352
      %p361 = scmp.eq.s32.totalorder %s49, 0
      %p362 = por %p360, %p361
      %p363 = scmp.ne.s32.totalorder %s351, %s352
      %p364 = scmp.eq.s32.totalorder %s50, 1
      %p365 = por %p363, %p364
      %p367 = scmp.ne.s32.totalorder %s352, %s366
      %p368 = scmp.eq.s32.totalorder %s50, 0
      %p369 = por %p367, %p368
      %s371 = sadd.s32 %s370, 1
      %p374 = scmp.eq.s32.totalorder %s44, 1
      %p375 = scmp.ne.s32.totalorder %s370, %s372
      %p376 = scmp.eq.s32.totalorder %s44, 0
      %p377 = por %p375, %p376
      %p378 = scmp.ne.s32.totalorder %s370, %s372
      %p379 = scmp.eq.s32.totalorder %s49, 1
      %p380 = por %p378, %p379
      %p381 = scmp.ne.s32.totalorder %s372, %s373
      %p382 = scmp.eq.s32.totalorder %s49, 0
      %p383 = por %p381, %p382
      %p384 = scmp.ne.s32.totalorder %s372, %s373
      %p385 = scmp.eq.s32.totalorder %s50, 1
      %p386 = por %p384, %p385
      %p388 = scmp.ne.s32.totalorder %s373, %s387
      %p389 = scmp.eq.s32.totalorder %s50, 0
      %p390 = por %p388, %p389
      %s392 = sadd.s32 %s391, 1
      %p395 = scmp.eq.s32.totalorder %s44, 1
      %p396 = scmp.ne.s32.totalorder %s391, %s393
      %p397 = scmp.eq.s32.totalorder %s44, 0
      %p398 = por %p396, %p397
      %p399 = scmp.ne.s32.totalorder %s391, %s393
      %p400 = scmp.eq.s32.totalorder %s49, 1
      %p401 = por %p399, %p400
      %p402 = scmp.ne.s32.totalorder %s393, %s394
      %p403 = scmp.eq.s32.totalorder %s49, 0
      %p404 = por %p402, %p403
      %p405 = scmp.ne.s32.totalorder %s393, %s394
      %p406 = scmp.eq.s32.totalorder %s50, 1
      %p407 = por %p405, %p406
      %p409 = scmp.ne.s32.totalorder %s394, %s408
      %p410 = scmp.eq.s32.totalorder %s50, 0
      %p411 = por %p409, %p410
      %s413 = sadd.s32 %s412, 1
      %p416 = scmp.eq.s32.totalorder %s44, 1
      %p417 = scmp.ne.s32.totalorder %s412, %s414
      %p418 = scmp.eq.s32.totalorder %s44, 0
      %p419 = por %p417, %p418
      %p420 = scmp.ne.s32.totalorder %s412, %s414
      %p421 = scmp.eq.s32.totalorder %s49, 1
      %p422 = por %p420, %p421
      %p423 = scmp.ne.s32.totalorder %s414, %s415
      %p424 = scmp.eq.s32.totalorder %s49, 0
      %p425 = por %p423, %p424
      %p426 = scmp.ne.s32.totalorder %s414, %s415
      %p427 = scmp.eq.s32.totalorder %s50, 1
      %p428 = por %p426, %p427
      %p430 = scmp.ne.s32.totalorder %s415, %s429
      %p431 = scmp.eq.s32.totalorder %s50, 0
      %p432 = por %p430, %p431
      %s434 = sadd.s32 %s433, 1
      %p437 = scmp.eq.s32.totalorder %s44, 1
      %p438 = scmp.ne.s32.totalorder %s433, %s435
      %p439 = scmp.eq.s32.totalorder %s44, 0
      %p440 = por %p438, %p439
      %p441 = scmp.ne.s32.totalorder %s433, %s435
      %p442 = scmp.eq.s32.totalorder %s49, 1
      %p443 = por %p441, %p442
      %p444 = scmp.ne.s32.totalorder %s435, %s436
      %p445 = scmp.eq.s32.totalorder %s49, 0
      %p446 = por %p444, %p445
      %p447 = scmp.ne.s32.totalorder %s435, %s436
      %p448 = scmp.eq.s32.totalorder %s50, 1
      %p449 = por %p447, %p448
      %p451 = scmp.ne.s32.totalorder %s436, %s450
      %p452 = scmp.eq.s32.totalorder %s50, 0
      %p453 = por %p451, %p452
      %s455 = sadd.s32 %s454, 1
      %p458 = scmp.eq.s32.totalorder %s44, 1
      %p459 = scmp.ne.s32.totalorder %s454, %s456
      %p460 = scmp.eq.s32.totalorder %s44, 0
      %p461 = por %p459, %p460
      %p462 = scmp.ne.s32.totalorder %s454, %s456
      %p463 = scmp.eq.s32.totalorder %s49, 1
      %p464 = por %p462, %p463
      %p465 = scmp.ne.s32.totalorder %s456, %s457
      %p466 = scmp.eq.s32.totalorder %s49, 0
      %p467 = por %p465, %p466
      %p468 = scmp.ne.s32.totalorder %s456, %s457
      %p469 = scmp.eq.s32.totalorder %s50, 1
      %p470 = por %p468, %p469
      %p472 = scmp.ne.s32.totalorder %s457, %s471
      %p473 = scmp.eq.s32.totalorder %s50, 0
      %p474 = por %p472, %p473
      %s476 = sadd.s32 %s475, 1
      %p479 = scmp.eq.s32.totalorder %s44, 1
      %p480 = scmp.ne.s32.totalorder %s475, %s477
      %p481 = scmp.eq.s32.totalorder %s44, 0
      %p482 = por %p480, %p481
      %p483 = scmp.ne.s32.totalorder %s475, %s477
      %p484 = scmp.eq.s32.totalorder %s49, 1
      %p485 = por %p483, %p484
      %p486 = scmp.ne.s32.totalorder %s477, %s478
      %p487 = scmp.eq.s32.totalorder %s49, 0
      %p488 = por %p486, %p487
      %p489 = scmp.ne.s32.totalorder %s477, %s478
      %p490 = scmp.eq.s32.totalorder %s50, 1
      %p491 = por %p489, %p490
      %p493 = scmp.ne.s32.totalorder %s478, %s492
      %p494 = scmp.eq.s32.totalorder %s50, 0
      %p495 = por %p493, %p494
      %s496 = ssub.s32 %s51, %s63
      %s497 = ssub.s32 %s52, %s59
      %s498 = sor.u32 %s496, %s497
      %p499 = scmp.eq.s32.totalorder %s498, 0
      %s501 = sadd.s32 %s500, 1
      %s502 = scalar_select %p499, %s500, %s501
      %p505 = pneg %p499
      %p506 = scmp.eq.s32.totalorder %s44, 1
      %p507 = por %p505, %p506
      %p508 = scmp.ne.s32.totalorder %s500, %s503
      %p509 = scmp.eq.s32.totalorder %s44, 0
      %p510 = por %p508, %p509
      %p511 = scmp.ne.s32.totalorder %s500, %s503
      %p512 = scmp.eq.s32.totalorder %s49, 1
      %p513 = por %p511, %p512
      %p514 = scmp.ne.s32.totalorder %s503, %s504
      %p515 = scmp.eq.s32.totalorder %s49, 0
      %p516 = por %p514, %p515
      %p517 = scmp.ne.s32.totalorder %s503, %s504
      %p518 = scmp.eq.s32.totalorder %s50, 1
      %p519 = por %p517, %p518
      %p521 = scmp.ne.s32.totalorder %s504, %s520
      %p522 = scmp.eq.s32.totalorder %s50, 0
      %p523 = por %p521, %p522
      %p524 = scmp.le.s32.totalorder 1, %s44
      %p525 = scmp.lt.s32.totalorder %s44, 3
      %p526 = pnand %p524, %p525
      %p527 = pneg %p526
      // Predicated region
      $region9: #{tpu_custom_call.1} parent=5 // pred_check
        _
      $region10: #{tpu_custom_call.1} parent=5 // pred_check_branch
        %529 = sbr.rel (%p526) target = $region12
      $region11: #{tpu_custom_call.1} parent=5 // pred_region
        %s530 = ssub.s32 %s44, 1
        // Predicated region
        $region13: #{tpu_custom_call.1} parent=11 // pred_check
          %p531 = pneg %p131
        $region14: #{tpu_custom_call.1} parent=11 // pred_check_branch
          %533 = sbr.rel (%p531) target = $region16
        $region15: #{tpu_custom_call.1} parent=11 // pred_region
          %s535 = ssub.s32 4096, 4096
          %536 = vsyncadd [#allocation8], %s535
          %s537 = sshll.u32 [#allocation9], 4
          %s538 = int_to_ptr.vmem [resolvable:$true] %s537
          %543 = dma.hbm_to_vmem [thread:$0]  %s2, 4096, %s538, [#allocation8], 256, 256, 16
        $region16: #{tpu_custom_call.1} parent=11 // pred_fallthru
          _
        // Predicated region
        $region17: #{tpu_custom_call.1} parent=11 // pred_check
          %p544 = pneg %p152
        $region18: #{tpu_custom_call.1} parent=11 // pred_check_branch
          %546 = sbr.rel (%p544) target = $region20
        $region19: #{tpu_custom_call.1} parent=11 // pred_region
          %s548 = ssub.s32 64, 64
          %549 = vsyncadd [#allocation11], %s548
          %s551 = sshll.u32 [#allocation10], 4
          %s552 = int_to_ptr.vmem [resolvable:$true] %s551
          %554 = dma.hbm_to_vmem [thread:$0]  %s3, 64, %s552, [#allocation11]
        $region20: #{tpu_custom_call.1} parent=11 // pred_fallthru
          _
        // Predicated region
        $region21: #{tpu_custom_call.1} parent=11 // pred_check
          %p555 = pneg %p173
        $region22: #{tpu_custom_call.1} parent=11 // pred_check_branch
          %557 = sbr.rel (%p555) target = $region24
        $region23: #{tpu_custom_call.1} parent=11 // pred_region
          %s559 = ssub.s32 4096, 4096
          %560 = vsyncadd [#allocation11], %s559
          %s561 = sshll.u32 [#allocation12], 4
          %s562 = int_to_ptr.vmem [resolvable:$true] %s561
          %567 = dma.hbm_to_vmem [thread:$0]  %s4, 4096, %s562, [#allocation11], 256, 256, 16
        $region24: #{tpu_custom_call.1} parent=11 // pred_fallthru
          _
        // Predicated region
        $region25: #{tpu_custom_call.1} parent=11 // pred_check
          %p568 = pneg %p194
        $region26: #{tpu_custom_call.1} parent=11 // pred_check_branch
          %570 = sbr.rel (%p568) target = $region28
        $region27: #{tpu_custom_call.1} parent=11 // pred_region
          %s572 = ssub.s32 64, 64
          %573 = vsyncadd [#allocation14], %s572
          %s575 = sshll.u32 [#allocation13], 4
          %s576 = int_to_ptr.vmem [resolvable:$true] %s575
          %578 = dma.hbm_to_vmem [thread:$0]  %s5, 64, %s576, [#allocation14]
        $region28: #{tpu_custom_call.1} parent=11 // pred_fallthru
          _
        // Predicated region
        $region29: #{tpu_custom_call.1} parent=11 // pred_check
          %p579 = pneg %p215
        $region30: #{tpu_custom_call.1} parent=11 // pred_check_branch
          %581 = sbr.rel (%p579) target = $region32
        $region31: #{tpu_custom_call.1} parent=11 // pred_region
          %s583 = ssub.s32 4096, 4096
          %584 = vsyncadd [#allocation14], %s583
          %s585 = sshll.u32 [#allocation15], 4
          %s586 = int_to_ptr.vmem [resolvable:$true] %s585
          %591 = dma.hbm_to_vmem [thread:$0]  %s6, 4096, %s586, [#allocation14], 256, 256, 16
        $region32: #{tpu_custom_call.1} parent=11 // pred_fallthru
          _
        // Predicated region
        $region33: #{tpu_custom_call.1} parent=11 // pred_check
          %p592 = pneg %p236
        $region34: #{tpu_custom_call.1} parent=11 // pred_check_branch
          %594 = sbr.rel (%p592) target = $region36
        $region35: #{tpu_custom_call.1} parent=11 // pred_region
          %s596 = ssub.s32 64, 64
          %597 = vsyncadd [#allocation17], %s596
          %s599 = sshll.u32 [#allocation16], 4
          %s600 = int_to_ptr.vmem [resolvable:$true] %s599
          %602 = dma.hbm_to_vmem [thread:$0]  %s7, 64, %s600, [#allocation17]
        $region36: #{tpu_custom_call.1} parent=11 // pred_fallthru
          _
        // Predicated region
        $region37: #{tpu_custom_call.1} parent=11 // pred_check
          %p603 = pneg %p257
        $region38: #{tpu_custom_call.1} parent=11 // pred_check_branch
          %605 = sbr.rel (%p603) target = $region40
        $region39: #{tpu_custom_call.1} parent=11 // pred_region
          %s607 = ssub.s32 4096, 4096
          %608 = vsyncadd [#allocation17], %s607
          %s609 = sshll.u32 [#allocation18], 4
          %s610 = int_to_ptr.vmem [resolvable:$true] %s609
          %615 = dma.hbm_to_vmem [thread:$0]  %s8, 4096, %s610, [#allocation17], 64, 64, 4
        $region40: #{tpu_custom_call.1} parent=11 // pred_fallthru
          _
        // Predicated region
        $region41: #{tpu_custom_call.1} parent=11 // pred_check
          %p616 = pneg %p278
        $region42: #{tpu_custom_call.1} parent=11 // pred_check_branch
          %618 = sbr.rel (%p616) target = $region44
        $region43: #{tpu_custom_call.1} parent=11 // pred_region
          %s620 = ssub.s32 16, 16
          %621 = vsyncadd [#allocation20], %s620
          %s623 = sshll.u32 [#allocation19], 4
          %s624 = int_to_ptr.vmem [resolvable:$true] %s623
          %626 = dma.hbm_to_vmem [thread:$0]  %s9, 16, %s624, [#allocation20]
        $region44: #{tpu_custom_call.1} parent=11 // pred_fallthru
          _
        // Predicated region
        $region45: #{tpu_custom_call.1} parent=11 // pred_check
          %p627 = pneg %p299
        $region46: #{tpu_custom_call.1} parent=11 // pred_check_branch
          %629 = sbr.rel (%p627) target = $region48
        $region47: #{tpu_custom_call.1} parent=11 // pred_region
          %s631 = ssub.s32 16, 16
          %632 = vsyncadd [#allocation20], %s631
          %s634 = sshll.u32 [#allocation21], 4
          %s635 = int_to_ptr.vmem [resolvable:$true] %s634
          %637 = dma.hbm_to_vmem [thread:$0]  %s10, 16, %s635, [#allocation20]
        $region48: #{tpu_custom_call.1} parent=11 // pred_fallthru
          _
        // Predicated region
        $region49: #{tpu_custom_call.1} parent=11 // pred_check
          %p638 = pneg %p320
        $region50: #{tpu_custom_call.1} parent=11 // pred_check_branch
          %640 = sbr.rel (%p638) target = $region52
        $region51: #{tpu_custom_call.1} parent=11 // pred_region
          %s642 = ssub.s32 16, 16
          %643 = vsyncadd [#allocation23], %s642
          %s645 = sshll.u32 [#allocation22], 4
          %s646 = int_to_ptr.vmem [resolvable:$true] %s645
          %648 = dma.hbm_to_vmem [thread:$0]  %s11, 16, %s646, [#allocation23]
        $region52: #{tpu_custom_call.1} parent=11 // pred_fallthru
          _
        // Predicated region
        $region53: #{tpu_custom_call.1} parent=11 // pred_check
          %p649 = pneg %p341
        $region54: #{tpu_custom_call.1} parent=11 // pred_check_branch
          %651 = sbr.rel (%p649) target = $region56
        $region55: #{tpu_custom_call.1} parent=11 // pred_region
          %s653 = ssub.s32 16, 16
          %654 = vsyncadd [#allocation23], %s653
          %s656 = sshll.u32 [#allocation24], 4
          %s657 = int_to_ptr.vmem [resolvable:$true] %s656
          %659 = dma.hbm_to_vmem [thread:$0]  %s12, 16, %s657, [#allocation23]
        $region56: #{tpu_custom_call.1} parent=11 // pred_fallthru
          _
        // Predicated region
        $region57: #{tpu_custom_call.1} parent=11 // pred_check
          %p660 = pneg %p362
        $region58: #{tpu_custom_call.1} parent=11 // pred_check_branch
          %662 = sbr.rel (%p660) target = $region60
        $region59: #{tpu_custom_call.1} parent=11 // pred_region
          %s664 = ssub.s32 16, 16
          %665 = vsyncadd [#allocation26], %s664
          %s667 = sshll.u32 [#allocation25], 4
          %s668 = int_to_ptr.vmem [resolvable:$true] %s667
          %670 = dma.hbm_to_vmem [thread:$0]  %s13, 16, %s668, [#allocation26]
        $region60: #{tpu_custom_call.1} parent=11 // pred_fallthru
          _
        // Predicated region
        $region61: #{tpu_custom_call.1} parent=11 // pred_check
          %p671 = pneg %p383
        $region62: #{tpu_custom_call.1} parent=11 // pred_check_branch
          %673 = sbr.rel (%p671) target = $region64
        $region63: #{tpu_custom_call.1} parent=11 // pred_region
          %s675 = ssub.s32 2048, 2048
          %676 = vsyncadd [#allocation26], %s675
          %s677 = sshll.u32 [#allocation27], 4
          %s678 = int_to_ptr.vmem [resolvable:$true] %s677
          %683 = dma.hbm_to_vmem [thread:$0]  %s14, 2048, %s678, [#allocation26], 128, 128, 8
        $region64: #{tpu_custom_call.1} parent=11 // pred_fallthru
          _
        // Predicated region
        $region65: #{tpu_custom_call.1} parent=11 // pred_check
          %p684 = pneg %p404
        $region66: #{tpu_custom_call.1} parent=11 // pred_check_branch
          %686 = sbr.rel (%p684) target = $region68
        $region67: #{tpu_custom_call.1} parent=11 // pred_region
          %s688 = ssub.s32 32, 32
          %689 = vsyncadd [#allocation29], %s688
          %s691 = sshll.u32 [#allocation28], 4
          %s692 = int_to_ptr.vmem [resolvable:$true] %s691
          %694 = dma.hbm_to_vmem [thread:$0]  %s15, 32, %s692, [#allocation29]
        $region68: #{tpu_custom_call.1} parent=11 // pred_fallthru
          _
        // Predicated region
        $region69: #{tpu_custom_call.1} parent=11 // pred_check
          %p695 = pneg %p425
        $region70: #{tpu_custom_call.1} parent=11 // pred_check_branch
          %697 = sbr.rel (%p695) target = $region72
        $region71: #{tpu_custom_call.1} parent=11 // pred_region
          %s699 = ssub.s32 2048, 2048
          %700 = vsyncadd [#allocation29], %s699
          %s701 = sshll.u32 [#allocation30], 4
          %s702 = int_to_ptr.vmem [resolvable:$true] %s701
          %707 = dma.hbm_to_vmem [thread:$0]  %s16, 2048, %s702, [#allocation29], 64, 64, 4
        $region72: #{tpu_custom_call.1} parent=11 // pred_fallthru
          _
        // Predicated region
        $region73: #{tpu_custom_call.1} parent=11 // pred_check
          %p708 = pneg %p446
        $region74: #{tpu_custom_call.1} parent=11 // pred_check_branch
          %710 = sbr.rel (%p708) target = $region76
        $region75: #{tpu_custom_call.1} parent=11 // pred_region
          %s712 = ssub.s32 16, 16
          %713 = vsyncadd [#allocation32], %s712
          %s715 = sshll.u32 [#allocation31], 4
          %s716 = int_to_ptr.vmem [resolvable:$true] %s715
          %718 = dma.hbm_to_vmem [thread:$0]  %s17, 16, %s716, [#allocation32]
        $region76: #{tpu_custom_call.1} parent=11 // pred_fallthru
          _
        // Predicated region
        $region77: #{tpu_custom_call.1} parent=11 // pred_check
          %p719 = pneg %p467
        $region78: #{tpu_custom_call.1} parent=11 // pred_check_branch
          %721 = sbr.rel (%p719) target = $region80
        $region79: #{tpu_custom_call.1} parent=11 // pred_region
          %s723 = ssub.s32 16, 16
          %724 = vsyncadd [#allocation32], %s723
          %s726 = sshll.u32 [#allocation33], 4
          %s727 = int_to_ptr.vmem [resolvable:$true] %s726
          %729 = dma.hbm_to_vmem [thread:$0]  %s18, 16, %s727, [#allocation32]
        $region80: #{tpu_custom_call.1} parent=11 // pred_fallthru
          _
        // Predicated region
        $region81: #{tpu_custom_call.1} parent=11 // pred_check
          %p730 = pneg %p488
        $region82: #{tpu_custom_call.1} parent=11 // pred_check_branch
          %732 = sbr.rel (%p730) target = $region84
        $region83: #{tpu_custom_call.1} parent=11 // pred_region
          %s734 = ssub.s32 16, 16
          %735 = vsyncadd [#allocation35], %s734
          %s737 = sshll.u32 [#allocation34], 4
          %s738 = int_to_ptr.vmem [resolvable:$true] %s737
          %740 = dma.hbm_to_vmem [thread:$0]  %s19, 16, %s738, [#allocation35]
        $region84: #{tpu_custom_call.1} parent=11 // pred_fallthru
          _
      $region12: #{tpu_custom_call.1} parent=5 // pred_fallthru
        _
      %p741 = scmp.lt.s32.totalorder %s44, 2
      // Predicated region
      $region85: #{tpu_custom_call.1} parent=5 // pred_check
        %p742 = pneg %p741
      $region86: #{tpu_custom_call.1} parent=5 // pred_check_branch
        %744 = sbr.rel (%p742) target = $region88
      $region87: #{tpu_custom_call.1} parent=5 // pred_region
        // Predicated region
        $region89: #{tpu_custom_call.1} parent=87 // pred_check
          %p745 = pneg %p76
        $region90: #{tpu_custom_call.1} parent=87 // pred_check_branch
          %747 = sbr.rel (%p745) target = $region92
        $region91: #{tpu_custom_call.1} parent=87 // pred_region
          %s748 = sand.u32 %s66, 1
          %s749 = scalar_lea.sflag [#allocation5], %s748
          %s750 = sand.u32 %s66, 1
          %s751 = smul.addr %s750, 8
          %s752 = scalar_lea.vmem [#allocation4], %s751
          %s754 = ssub.s32 128, 128
          %755 = vsyncadd %s749, %s754
          %s756 = smul.addr %s51, 128
          %s757 = scalar_lea.hbm %s0, %s756
          %s759 = sshll.u32 %s752, 4
          %s760 = int_to_ptr.vmem [resolvable:$true] %s759
          %762 = dma.hbm_to_vmem [thread:$0]  %s757, 128, %s760, %s749
        $region92: #{tpu_custom_call.1} parent=87 // pred_fallthru
          _
        // Predicated region
        $region93: #{tpu_custom_call.1} parent=87 // pred_check
          %p763 = pneg %p104
        $region94: #{tpu_custom_call.1} parent=87 // pred_check_branch
          %765 = sbr.rel (%p763) target = $region96
        $region95: #{tpu_custom_call.1} parent=87 // pred_region
          %s766 = sand.u32 %s44, 1
          %s767 = scalar_lea.sflag [#allocation8], %s766
          %s768 = sand.u32 %s94, 1
          %s769 = smul.addr %s768, 2
          %s770 = scalar_lea.vmem [#allocation7], %s769
          %s772 = ssub.s32 32, 32
          %773 = vsyncadd %s767, %s772
          %s774 = sadd.s32 %s52, %s51
          %s775 = smul.addr %s774, 32
          %s776 = scalar_lea.hbm %s1, %s775
          %s778 = sshll.u32 %s770, 4
          %s779 = int_to_ptr.vmem [resolvable:$true] %s778
          %781 = dma.hbm_to_vmem [thread:$0]  %s776, 32, %s779, %s767
        $region96: #{tpu_custom_call.1} parent=87 // pred_fallthru
          _
      $region88: #{tpu_custom_call.1} parent=5 // pred_fallthru
        _
      %p782 = scmp.le.s32.totalorder 1, %s44
      %p783 = scmp.lt.s32.totalorder %s44, 3
      %p784 = pnand %p782, %p783
      %p785 = pneg %p784
      // Predicated region
      $region97: #{tpu_custom_call.1} parent=5 // pred_check
        _
      $region98: #{tpu_custom_call.1} parent=5 // pred_check_branch
        %787 = sbr.rel (%p784) target = $region100
      $region99: #{tpu_custom_call.1} parent=5 // pred_region
        %s788 = ssub.s32 %s44, 1
        %s789 = sand.u32 %s69, 1
        %s790 = scalar_lea.sflag [#allocation5], %s789
        %s791 = sand.u32 %s69, 1
        %s792 = smul.addr %s791, 8
        %s793 = scalar_lea.vmem [#allocation4], %s792
        // Predicated region
        $region101: #{tpu_custom_call.1} parent=99 // pred_check
          %p794 = pneg %p82
        $region102: #{tpu_custom_call.1} parent=99 // pred_check_branch
          %796 = sbr.rel (%p794) target = $region104
        $region103: #{tpu_custom_call.1} parent=99 // pred_region
          %797 = dma.done %s790, 128
        $region104: #{tpu_custom_call.1} parent=99 // pred_fallthru
          _
        %s798 = sand.u32 %s49, 1
        %s799 = scalar_lea.sflag [#allocation8], %s798
        %s800 = sand.u32 %s97, 1
        %s801 = smul.addr %s800, 2
        %s802 = scalar_lea.vmem [#allocation7], %s801
        // Predicated region
        $region105: #{tpu_custom_call.1} parent=99 // pred_check
          %p803 = pneg %p110
        $region106: #{tpu_custom_call.1} parent=99 // pred_check_branch
          %805 = sbr.rel (%p803) target = $region108
        $region107: #{tpu_custom_call.1} parent=99 // pred_region
          %806 = dma.done %s799, 32
        $region108: #{tpu_custom_call.1} parent=99 // pred_fallthru
          _
        // Predicated region
        $region109: #{tpu_custom_call.1} parent=99 // pred_check
          %p807 = pneg %p131
        $region110: #{tpu_custom_call.1} parent=99 // pred_check_branch
          %809 = sbr.rel (%p807) target = $region112
        $region111: #{tpu_custom_call.1} parent=99 // pred_region
          %810 = dma.done [#allocation8], 4096
        $region112: #{tpu_custom_call.1} parent=99 // pred_fallthru
          _
        // Predicated region
        $region113: #{tpu_custom_call.1} parent=99 // pred_check
          %p811 = pneg %p152
        $region114: #{tpu_custom_call.1} parent=99 // pred_check_branch
          %813 = sbr.rel (%p811) target = $region116
        $region115: #{tpu_custom_call.1} parent=99 // pred_region
          %814 = dma.done [#allocation11], 64
        $region116: #{tpu_custom_call.1} parent=99 // pred_fallthru
          _
        // Predicated region
        $region117: #{tpu_custom_call.1} parent=99 // pred_check
          %p815 = pneg %p173
        $region118: #{tpu_custom_call.1} parent=99 // pred_check_branch
          %817 = sbr.rel (%p815) target = $region120
        $region119: #{tpu_custom_call.1} parent=99 // pred_region
          %818 = dma.done [#allocation11], 4096
        $region120: #{tpu_custom_call.1} parent=99 // pred_fallthru
          _
        // Predicated region
        $region121: #{tpu_custom_call.1} parent=99 // pred_check
          %p819 = pneg %p194
        $region122: #{tpu_custom_call.1} parent=99 // pred_check_branch
          %821 = sbr.rel (%p819) target = $region124
        $region123: #{tpu_custom_call.1} parent=99 // pred_region
          %822 = dma.done [#allocation14], 64
        $region124: #{tpu_custom_call.1} parent=99 // pred_fallthru
          _
        // Predicated region
        $region125: #{tpu_custom_call.1} parent=99 // pred_check
          %p823 = pneg %p215
        $region126: #{tpu_custom_call.1} parent=99 // pred_check_branch
          %825 = sbr.rel (%p823) target = $region128
        $region127: #{tpu_custom_call.1} parent=99 // pred_region
          %826 = dma.done [#allocation14], 4096
        $region128: #{tpu_custom_call.1} parent=99 // pred_fallthru
          _
        // Predicated region
        $region129: #{tpu_custom_call.1} parent=99 // pred_check
          %p827 = pneg %p236
        $region130: #{tpu_custom_call.1} parent=99 // pred_check_branch
          %829 = sbr.rel (%p827) target = $region132
        $region131: #{tpu_custom_call.1} parent=99 // pred_region
          %830 = dma.done [#allocation17], 64
        $region132: #{tpu_custom_call.1} parent=99 // pred_fallthru
          _
        // Predicated region
        $region133: #{tpu_custom_call.1} parent=99 // pred_check
          %p831 = pneg %p257
        $region134: #{tpu_custom_call.1} parent=99 // pred_check_branch
          %833 = sbr.rel (%p831) target = $region136
        $region135: #{tpu_custom_call.1} parent=99 // pred_region
          %834 = dma.done [#allocation17], 4096
        $region136: #{tpu_custom_call.1} parent=99 // pred_fallthru
          _
        // Predicated region
        $region137: #{tpu_custom_call.1} parent=99 // pred_check
          %p835 = pneg %p278
        $region138: #{tpu_custom_call.1} parent=99 // pred_check_branch
          %837 = sbr.rel (%p835) target = $region140
        $region139: #{tpu_custom_call.1} parent=99 // pred_region
          %838 = dma.done [#allocation20], 16
        $region140: #{tpu_custom_call.1} parent=99 // pred_fallthru
          _
        // Predicated region
        $region141: #{tpu_custom_call.1} parent=99 // pred_check
          %p839 = pneg %p299
        $region142: #{tpu_custom_call.1} parent=99 // pred_check_branch
          %841 = sbr.rel (%p839) target = $region144
        $region143: #{tpu_custom_call.1} parent=99 // pred_region
          %842 = dma.done [#allocation20], 16
        $region144: #{tpu_custom_call.1} parent=99 // pred_fallthru
          _
        // Predicated region
        $region145: #{tpu_custom_call.1} parent=99 // pred_check
          %p843 = pneg %p320
        $region146: #{tpu_custom_call.1} parent=99 // pred_check_branch
          %845 = sbr.rel (%p843) target = $region148
        $region147: #{tpu_custom_call.1} parent=99 // pred_region
          %846 = dma.done [#allocation23], 16
        $region148: #{tpu_custom_call.1} parent=99 // pred_fallthru
          _
        // Predicated region
        $region149: #{tpu_custom_call.1} parent=99 // pred_check
          %p847 = pneg %p341
        $region150: #{tpu_custom_call.1} parent=99 // pred_check_branch
          %849 = sbr.rel (%p847) target = $region152
        $region151: #{tpu_custom_call.1} parent=99 // pred_region
          %850 = dma.done [#allocation23], 16
        $region152: #{tpu_custom_call.1} parent=99 // pred_fallthru
          _
        // Predicated region
        $region153: #{tpu_custom_call.1} parent=99 // pred_check
          %p851 = pneg %p362
        $region154: #{tpu_custom_call.1} parent=99 // pred_check_branch
          %853 = sbr.rel (%p851) target = $region156
        $region155: #{tpu_custom_call.1} parent=99 // pred_region
          %854 = dma.done [#allocation26], 16
        $region156: #{tpu_custom_call.1} parent=99 // pred_fallthru
          _
        // Predicated region
        $region157: #{tpu_custom_call.1} parent=99 // pred_check
          %p855 = pneg %p383
        $region158: #{tpu_custom_call.1} parent=99 // pred_check_branch
          %857 = sbr.rel (%p855) target = $region160
        $region159: #{tpu_custom_call.1} parent=99 // pred_region
          %858 = dma.done [#allocation26], 2048
        $region160: #{tpu_custom_call.1} parent=99 // pred_fallthru
          _
        // Predicated region
        $region161: #{tpu_custom_call.1} parent=99 // pred_check
          %p859 = pneg %p404
        $region162: #{tpu_custom_call.1} parent=99 // pred_check_branch
          %861 = sbr.rel (%p859) target = $region164
        $region163: #{tpu_custom_call.1} parent=99 // pred_region
          %862 = dma.done [#allocation29], 32
        $region164: #{tpu_custom_call.1} parent=99 // pred_fallthru
          _
        // Predicated region
        $region165: #{tpu_custom_call.1} parent=99 // pred_check
          %p863 = pneg %p425
        $region166: #{tpu_custom_call.1} parent=99 // pred_check_branch
          %865 = sbr.rel (%p863) target = $region168
        $region167: #{tpu_custom_call.1} parent=99 // pred_region
          %866 = dma.done [#allocation29], 2048
        $region168: #{tpu_custom_call.1} parent=99 // pred_fallthru
          _
        // Predicated region
        $region169: #{tpu_custom_call.1} parent=99 // pred_check
          %p867 = pneg %p446
        $region170: #{tpu_custom_call.1} parent=99 // pred_check_branch
          %869 = sbr.rel (%p867) target = $region172
        $region171: #{tpu_custom_call.1} parent=99 // pred_region
          %870 = dma.done [#allocation32], 16
        $region172: #{tpu_custom_call.1} parent=99 // pred_fallthru
          _
        // Predicated region
        $region173: #{tpu_custom_call.1} parent=99 // pred_check
          %p871 = pneg %p467
        $region174: #{tpu_custom_call.1} parent=99 // pred_check_branch
          %873 = sbr.rel (%p871) target = $region176
        $region175: #{tpu_custom_call.1} parent=99 // pred_region
          %874 = dma.done [#allocation32], 16
        $region176: #{tpu_custom_call.1} parent=99 // pred_fallthru
          _
        // Predicated region
        $region177: #{tpu_custom_call.1} parent=99 // pred_check
          %p875 = pneg %p488
        $region178: #{tpu_custom_call.1} parent=99 // pred_check_branch
          %877 = sbr.rel (%p875) target = $region180
        $region179: #{tpu_custom_call.1} parent=99 // pred_region
          %878 = dma.done [#allocation35], 16
        $region180: #{tpu_custom_call.1} parent=99 // pred_fallthru
          _
        %s879 = sand.u32 %s69, 1
        %s880 = scalar_lea.sflag [#allocation5], %s879
        %s881 = sand.u32 %s69, 1
        %s882 = smul.addr %s881, 8
        %s883 = scalar_lea.vmem [#allocation4], %s882
        %p884 = pneg %p82
        %p885 = pneg %p79
        %s886 = sand.u32 %s49, 1
        %s887 = scalar_lea.sflag [#allocation8], %s886
        %s888 = sand.u32 %s97, 1
        %s889 = smul.addr %s888, 2
        %s890 = scalar_lea.vmem [#allocation7], %s889
        %p891 = pneg %p110
        %p892 = pneg %p107
        %p893 = pneg %p131
        %p894 = pneg %p128
        %p895 = pneg %p152
        %p896 = pneg %p149
        %p897 = pneg %p173
        %p898 = pneg %p170
        %p899 = pneg %p194
        %p900 = pneg %p191
        %p901 = pneg %p215
        %p902 = pneg %p212
        %p903 = pneg %p236
        %p904 = pneg %p233
        %p905 = pneg %p257
        %p906 = pneg %p254
        %p907 = pneg %p278
        %p908 = pneg %p275
        %p909 = pneg %p299
        %p910 = pneg %p296
        %p911 = pneg %p320
        %p912 = pneg %p317
        %p913 = pneg %p341
        %p914 = pneg %p338
        %p915 = pneg %p362
        %p916 = pneg %p359
        %p917 = pneg %p383
        %p918 = pneg %p380
        %p919 = pneg %p404
        %p920 = pneg %p401
        %p921 = pneg %p425
        %p922 = pneg %p422
        %p923 = pneg %p446
        %p924 = pneg %p443
        %p925 = pneg %p467
        %p926 = pneg %p464
        %p927 = pneg %p488
        %p928 = pneg %p485
        %p929 = pneg %p516
        %p930 = pneg %p513
        %s931 = sand.u32 %s503, 1
        %s932 = scalar_lea.sflag [#allocation6], %s931
        %s933 = sand.u32 %s503, 1
        %s934 = smul.addr %s933, 8
        %s935 = scalar_lea.vmem [#allocation36], %s934
        %v939 = vld [vmem:[#allocation21] sm:$0x1]
        %v940 = vld [vmem:[#allocation22] sm:$0x1]
        %p941 = scmp.eq.s32.totalorder %s54, 0
        // Predicated region
        $region181: #{tpu_custom_call.1} parent=99 // pred_check
          %p942 = pneg %p941
        $region182: #{tpu_custom_call.1} parent=99 // pred_check_branch
          %944 = sbr.rel (%p942) target = $region184
        $region183: #{tpu_custom_call.1} parent=99 // pred_region
          %v945 = vld [vmem:[%s793] sm:$0xff]
          %946 = vadd.xlane.f32.xlu0 %v945
          %v947 = vpop.xlane.xlu0 %946
          %v948 = vrcp.pop 128.0
          %v949 = vmul.f32 %v947, %v948
          %v950 = vsub.f32 %v945, %v949
          %v951 = vmul.f32 %v950, %v950
          %952 = vadd.xlane.f32.xlu0 %v951
          %v953 = vpop.xlane.xlu0 %952
          %v954 = vmul.f32 %v953, 0.007874016
          %v955 = vrsqrt.pop %v954
          %v956 = vmul.f32 %v954, %v955
          %vm957 = vcmp.eq.f32.partialorder %v954, inf
          %v958 = vsel %vm957, %v954, %v956
          %vm959 = vcmp.eq.f32.partialorder %v954, 0.0
          %v960 = vand.u32 %v954, 2147483648
          %v961 = vsel %vm959, %v960, %v958
          %v962 = vadd.f32 %v961, 1e-06
          %v963 = vrcp.pop %v962
          %v965 = vlaneseq
          %v966 = vshrl.u32 %v965, 7
          %v967 = vsub.s32 0, %v966
          %v968 = vrot.slane %v939, %v967
          %v970 = vmul.f32 %v968, %v950
          %v971 = vmul.f32 %v970, %v963
          %v973 = vlaneseq
          %v974 = vshrl.u32 %v973, 7
          %v975 = vsub.s32 0, %v974
          %v976 = vrot.slane %v940, %v975
          %v978 = vadd.f32 %v971, %v976
          %v979 = vpack.c.bf16 %v978, %v978
          %v980 = vld [vmem:[#allocation12] sm:$0xff]
          %v981 = vld [vmem:[#allocation12 + $0x8] sm:$0xff]
          %v982 = vld [vmem:[#allocation12 + $0x10] sm:$0xff]
          %v983 = vld [vmem:[#allocation12 + $0x18] sm:$0xff]
          %v984 = vld [vmem:[#allocation12 + $0x20] sm:$0xff]
          %v985 = vld [vmem:[#allocation12 + $0x28] sm:$0xff]
          %v986 = vld [vmem:[#allocation12 + $0x30] sm:$0xff]
          %v987 = vld [vmem:[#allocation12 + $0x38] sm:$0xff]
          %v988 = vld [vmem:[#allocation12 + $0x40] sm:$0xff]
          %v989 = vld [vmem:[#allocation12 + $0x48] sm:$0xff]
          %v990 = vld [vmem:[#allocation12 + $0x50] sm:$0xff]
          %v991 = vld [vmem:[#allocation12 + $0x58] sm:$0xff]
          %v992 = vld [vmem:[#allocation12 + $0x60] sm:$0xff]
          %v993 = vld [vmem:[#allocation12 + $0x68] sm:$0xff]
          %v994 = vld [vmem:[#allocation12 + $0x70] sm:$0xff]
          %v995 = vld [vmem:[#allocation12 + $0x78] sm:$0xff]
          %v996 = vld [vmem:[#allocation12 + $0x80] sm:$0xff]
          %v997 = vld [vmem:[#allocation12 + $0x88] sm:$0xff]
          %v998 = vld [vmem:[#allocation12 + $0x90] sm:$0xff]
          %v999 = vld [vmem:[#allocation12 + $0x98] sm:$0xff]
          %v1000 = vld [vmem:[#allocation12 + $0xa0] sm:$0xff]
          %v1001 = vld [vmem:[#allocation12 + $0xa8] sm:$0xff]
          %v1002 = vld [vmem:[#allocation12 + $0xb0] sm:$0xff]
          %v1003 = vld [vmem:[#allocation12 + $0xb8] sm:$0xff]
          %v1004 = vld [vmem:[#allocation12 + $0xc0] sm:$0xff]
          %v1005 = vld [vmem:[#allocation12 + $0xc8] sm:$0xff]
          %v1006 = vld [vmem:[#allocation12 + $0xd0] sm:$0xff]
          %v1007 = vld [vmem:[#allocation12 + $0xd8] sm:$0xff]
          %v1008 = vld [vmem:[#allocation12 + $0xe0] sm:$0xff]
          %v1009 = vld [vmem:[#allocation12 + $0xe8] sm:$0xff]
          %v1010 = vld [vmem:[#allocation12 + $0xf0] sm:$0xff]
          %v1011 = vld [vmem:[#allocation12 + $0xf8] sm:$0xff]
          %v1012 = vld [vmem:[#allocation13] sm:$0xf]
          %v1014 = vlaneseq
          %v1015 = vshrl.u32 %v1014, 7
          %v1016 = vsub.s32 0, %v1015
          %v1017 = vrot.slane %v1012, %v1016
          %v1018 = vlaneseq
          %v1019 = vshrl.u32 %v1018, 7
          %v1020 = vsub.s32 1, %v1019
          %v1021 = vrot.slane %v1012, %v1020
          %v1022 = vlaneseq
          %v1023 = vshrl.u32 %v1022, 7
          %v1024 = vsub.s32 2, %v1023
          %v1025 = vrot.slane %v1012, %v1024
          %v1026 = vlaneseq
          %v1027 = vshrl.u32 %v1026, 7
          %v1028 = vsub.s32 3, %v1027
          %v1029 = vrot.slane %v1012, %v1028
          %v1066 = vunpack.c.l.b16 %v980
          %v1067 = vunpack.c.h.b16 %v980
          %v1068 = vunpack.c.l.b16 %v981
          %v1069 = vunpack.c.h.b16 %v981
          %v1070 = vunpack.c.l.b16 %v982
          %v1071 = vunpack.c.h.b16 %v982
          %v1072 = vunpack.c.l.b16 %v983
          %v1073 = vunpack.c.h.b16 %v983
          %v1074 = vunpack.c.l.b16 %v984
          %v1075 = vunpack.c.h.b16 %v984
          %v1076 = vunpack.c.l.b16 %v985
          %v1077 = vunpack.c.h.b16 %v985
          %v1078 = vunpack.c.l.b16 %v986
          %v1079 = vunpack.c.h.b16 %v986
          %v1080 = vunpack.c.l.b16 %v987
          %v1081 = vunpack.c.h.b16 %v987
          %v1082 = vunpack.c.l.b16 %v988
          %v1083 = vunpack.c.h.b16 %v988
          %v1084 = vunpack.c.l.b16 %v989
          %v1085 = vunpack.c.h.b16 %v989
          %v1086 = vunpack.c.l.b16 %v990
          %v1087 = vunpack.c.h.b16 %v990
          %v1088 = vunpack.c.l.b16 %v991
          %v1089 = vunpack.c.h.b16 %v991
          %v1090 = vunpack.c.l.b16 %v992
          %v1091 = vunpack.c.h.b16 %v992
          %v1092 = vunpack.c.l.b16 %v993
          %v1093 = vunpack.c.h.b16 %v993
          %v1094 = vunpack.c.l.b16 %v994
          %v1095 = vunpack.c.h.b16 %v994
          %v1096 = vunpack.c.l.b16 %v995
          %v1097 = vunpack.c.h.b16 %v995
          %v1098 = vunpack.c.l.b16 %v996
          %v1099 = vunpack.c.h.b16 %v996
          %v1100 = vunpack.c.l.b16 %v997
          %v1101 = vunpack.c.h.b16 %v997
          %v1102 = vunpack.c.l.b16 %v998
          %v1103 = vunpack.c.h.b16 %v998
          %v1104 = vunpack.c.l.b16 %v999
          %v1105 = vunpack.c.h.b16 %v999
          %v1106 = vunpack.c.l.b16 %v1000
          %v1107 = vunpack.c.h.b16 %v1000
          %v1108 = vunpack.c.l.b16 %v1001
          %v1109 = vunpack.c.h.b16 %v1001
          %v1110 = vunpack.c.l.b16 %v1002
          %v1111 = vunpack.c.h.b16 %v1002
          %v1112 = vunpack.c.l.b16 %v1003
          %v1113 = vunpack.c.h.b16 %v1003
          %v1114 = vunpack.c.l.b16 %v1004
          %v1115 = vunpack.c.h.b16 %v1004
          %v1116 = vunpack.c.l.b16 %v1005
          %v1117 = vunpack.c.h.b16 %v1005
          %v1118 = vunpack.c.l.b16 %v1006
          %v1119 = vunpack.c.h.b16 %v1006
          %v1120 = vunpack.c.l.b16 %v1007
          %v1121 = vunpack.c.h.b16 %v1007
          %v1122 = vunpack.c.l.b16 %v1008
          %v1123 = vunpack.c.h.b16 %v1008
          %v1124 = vunpack.c.l.b16 %v1009
          %v1125 = vunpack.c.h.b16 %v1009
          %v1126 = vunpack.c.l.b16 %v1010
          %v1127 = vunpack.c.h.b16 %v1010
          %v1128 = vunpack.c.l.b16 %v1011
          %v1129 = vunpack.c.h.b16 %v1011
          %v1130 = vpack.c.b16 %v1070, %v1066
          %v1131 = vpack.c.b16 %v1071, %v1067
          %v1132 = vpack.c.b16 %v1072, %v1068
          %v1133 = vpack.c.b16 %v1073, %v1069
          %v1134 = vpack.c.b16 %v1078, %v1074
          %v1135 = vpack.c.b16 %v1079, %v1075
          %v1136 = vpack.c.b16 %v1080, %v1076
          %v1137 = vpack.c.b16 %v1081, %v1077
          %v1138 = vpack.c.b16 %v1086, %v1082
          %v1139 = vpack.c.b16 %v1087, %v1083
          %v1140 = vpack.c.b16 %v1088, %v1084
          %v1141 = vpack.c.b16 %v1089, %v1085
          %v1142 = vpack.c.b16 %v1094, %v1090
          %v1143 = vpack.c.b16 %v1095, %v1091
          %v1144 = vpack.c.b16 %v1096, %v1092
          %v1145 = vpack.c.b16 %v1097, %v1093
          %v1146 = vpack.c.b16 %v1102, %v1098
          %v1147 = vpack.c.b16 %v1103, %v1099
          %v1148 = vpack.c.b16 %v1104, %v1100
          %v1149 = vpack.c.b16 %v1105, %v1101
          %v1150 = vpack.c.b16 %v1110, %v1106
          %v1151 = vpack.c.b16 %v1111, %v1107
          %v1152 = vpack.c.b16 %v1112, %v1108
          %v1153 = vpack.c.b16 %v1113, %v1109
          %v1154 = vpack.c.b16 %v1118, %v1114
          %v1155 = vpack.c.b16 %v1119, %v1115
          %v1156 = vpack.c.b16 %v1120, %v1116
          %v1157 = vpack.c.b16 %v1121, %v1117
          %v1158 = vpack.c.b16 %v1126, %v1122
          %v1159 = vpack.c.b16 %v1127, %v1123
          %v1160 = vpack.c.b16 %v1128, %v1124
          %v1161 = vpack.c.b16 %v1129, %v1125
          %1194 = vmatprep.subr.bf16.mxu0 %v1131
          %1195 = vmatpush1.bf16.msra.mxu0 %v1130
          %1196 = vmatprep.subr.bf16.mxu0 %v1135
          %1197 = vmatpush1.bf16.msra.mxu0 %v1134
          %1198 = vmatprep.subr.bf16.mxu0 %v1139
          %1199 = vmatpush1.bf16.msra.mxu0 %v1138
          %1200 = vmatprep.subr.bf16.mxu0 %v1143
          %1201 = vmatpush1.bf16.msra.mxu0 %v1142
          %1202 = vmatprep.subr.bf16.mxu0 %v1147
          %1203 = vmatpush1.bf16.msra.mxu0 %v1146
          %1204 = vmatprep.subr.bf16.mxu0 %v1151
          %1205 = vmatpush1.bf16.msra.mxu0 %v1150
          %1206 = vmatprep.subr.bf16.mxu0 %v1155
          %1207 = vmatpush1.bf16.msra.mxu0 %v1154
          %1208 = vmatprep.subr.bf16.mxu0 %v1159
          %1209 = vmatpush1.bf16.msra.mxu0 %v1158
          %1210 = vmatprep.subr.bf16.mxu0 0
          %1211 = vmatpush1.bf16.msra.mxu0 0
          %1212 = vmatprep.subr.bf16.mxu0 0
          %1213 = vmatpush1.bf16.msra.mxu0 0
          %1214 = vmatprep.subr.bf16.mxu0 0
          %1215 = vmatpush1.bf16.msra.mxu0 0
          %1216 = vmatprep.subr.bf16.mxu0 0
          %1217 = vmatpush1.bf16.msra.mxu0 0
          %1218 = vmatprep.subr.bf16.mxu0 0
          %1219 = vmatpush1.bf16.msra.mxu0 0
          %1220 = vmatprep.subr.bf16.mxu0 0
          %1221 = vmatpush1.bf16.msra.mxu0 0
          %1222 = vmatprep.subr.bf16.mxu0 0
          %1223 = vmatpush1.bf16.msra.mxu0 0
          %1224 = vmatprep.subr.bf16.mxu0 0
          %1225 = vmatpush1.bf16.msra.mxu0 0
          %1226 = vmatprep.mubr.bf16.mxu0 0
          %1227 = vmatmul.mubr.bf16.gmra.mrb[0].mxu0 %v979
          %v1228 = vpop.f32.mrb[0].mxu0
          %v1229 = vadd.f32 %v1017, %v1228
          %v1230 = vpop.f32.mrb[0].mxu0
          %v1231 = vadd.f32 %v1021, %v1230
          %v1232 = vpop.f32.mrb[0].mxu0
          %v1233 = vpop.f32.mrb[0].mxu0
          %1234 = vdwg.mxu0
          %1235 = vmatprep.subr.bf16.mxu0 %v1133
          %1236 = vmatpush1.bf16.msra.mxu0 %v1132
          %1237 = vmatprep.subr.bf16.mxu0 %v1137
          %1238 = vmatpush1.bf16.msra.mxu0 %v1136
          %1239 = vmatprep.subr.bf16.mxu0 %v1141
          %1240 = vmatpush1.bf16.msra.mxu0 %v1140
          %1241 = vmatprep.subr.bf16.mxu0 %v1145
          %1242 = vmatpush1.bf16.msra.mxu0 %v1144
          %1243 = vmatprep.subr.bf16.mxu0 %v1149
          %1244 = vmatpush1.bf16.msra.mxu0 %v1148
          %1245 = vmatprep.subr.bf16.mxu0 %v1153
          %1246 = vmatpush1.bf16.msra.mxu0 %v1152
          %1247 = vmatprep.subr.bf16.mxu0 %v1157
          %1248 = vmatpush1.bf16.msra.mxu0 %v1156
          %1249 = vmatprep.subr.bf16.mxu0 %v1161
          %1250 = vmatpush1.bf16.msra.mxu0 %v1160
          %1251 = vmatprep.subr.bf16.mxu0 0
          %1252 = vmatpush1.bf16.msra.mxu0 0
          %1253 = vmatprep.subr.bf16.mxu0 0
          %1254 = vmatpush1.bf16.msra.mxu0 0
          %1255 = vmatprep.subr.bf16.mxu0 0
          %1256 = vmatpush1.bf16.msra.mxu0 0
          %1257 = vmatprep.subr.bf16.mxu0 0
          %1258 = vmatpush1.bf16.msra.mxu0 0
          %1259 = vmatprep.subr.bf16.mxu0 0
          %1260 = vmatpush1.bf16.msra.mxu0 0
          %1261 = vmatprep.subr.bf16.mxu0 0
          %1262 = vmatpush1.bf16.msra.mxu0 0
          %1263 = vmatprep.subr.bf16.mxu0 0
          %1264 = vmatpush1.bf16.msra.mxu0 0
          %1265 = vmatprep.subr.bf16.mxu0 0
          %1266 = vmatpush1.bf16.msra.mxu0 0
          %1267 = vmatprep.mubr.bf16.mxu0 0
          %1268 = vmatmul.mubr.bf16.gmra.mrb[0].mxu0 %v979
          %v1269 = vpop.f32.mrb[0].mxu0
          %v1270 = vadd.f32 %v1025, %v1269
          %v1271 = vpop.f32.mrb[0].mxu0
          %v1272 = vadd.f32 %v1029, %v1271
          %v1273 = vpop.f32.mrb[0].mxu0
          %v1274 = vpop.f32.mrb[0].mxu0
          %1275 = vdwg.mxu0
          %v1276 = vld [vmem:[#allocation15] sm:$0xff]
          %v1277 = vld [vmem:[#allocation15 + $0x8] sm:$0xff]
          %v1278 = vld [vmem:[#allocation15 + $0x10] sm:$0xff]
          %v1279 = vld [vmem:[#allocation15 + $0x18] sm:$0xff]
          %v1280 = vld [vmem:[#allocation15 + $0x20] sm:$0xff]
          %v1281 = vld [vmem:[#allocation15 + $0x28] sm:$0xff]
          %v1282 = vld [vmem:[#allocation15 + $0x30] sm:$0xff]
          %v1283 = vld [vmem:[#allocation15 + $0x38] sm:$0xff]
          %v1284 = vld [vmem:[#allocation15 + $0x40] sm:$0xff]
          %v1285 = vld [vmem:[#allocation15 + $0x48] sm:$0xff]
          %v1286 = vld [vmem:[#allocation15 + $0x50] sm:$0xff]
          %v1287 = vld [vmem:[#allocation15 + $0x58] sm:$0xff]
          %v1288 = vld [vmem:[#allocation15 + $0x60] sm:$0xff]
          %v1289 = vld [vmem:[#allocation15 + $0x68] sm:$0xff]
          %v1290 = vld [vmem:[#allocation15 + $0x70] sm:$0xff]
          %v1291 = vld [vmem:[#allocation15 + $0x78] sm:$0xff]
          %v1292 = vld [vmem:[#allocation15 + $0x80] sm:$0xff]
          %v1293 = vld [vmem:[#allocation15 + $0x88] sm:$0xff]
          %v1294 = vld [vmem:[#allocation15 + $0x90] sm:$0xff]
          %v1295 = vld [vmem:[#allocation15 + $0x98] sm:$0xff]
          %v1296 = vld [vmem:[#allocation15 + $0xa0] sm:$0xff]
          %v1297 = vld [vmem:[#allocation15 + $0xa8] sm:$0xff]
          %v1298 = vld [vmem:[#allocation15 + $0xb0] sm:$0xff]
          %v1299 = vld [vmem:[#allocation15 + $0xb8] sm:$0xff]
          %v1300 = vld [vmem:[#allocation15 + $0xc0] sm:$0xff]
          %v1301 = vld [vmem:[#allocation15 + $0xc8] sm:$0xff]
          %v1302 = vld [vmem:[#allocation15 + $0xd0] sm:$0xff]
          %v1303 = vld [vmem:[#allocation15 + $0xd8] sm:$0xff]
          %v1304 = vld [vmem:[#allocation15 + $0xe0] sm:$0xff]
          %v1305 = vld [vmem:[#allocation15 + $0xe8] sm:$0xff]
          %v1306 = vld [vmem:[#allocation15 + $0xf0] sm:$0xff]
          %v1307 = vld [vmem:[#allocation15 + $0xf8] sm:$0xff]
          %v1308 = vld [vmem:[#allocation16] sm:$0xf]
          %v1310 = vlaneseq
          %v1311 = vshrl.u32 %v1310, 7
          %v1312 = vsub.s32 0, %v1311
          %v1313 = vrot.slane %v1308, %v1312
          %v1314 = vlaneseq
          %v1315 = vshrl.u32 %v1314, 7
          %v1316 = vsub.s32 1, %v1315
          %v1317 = vrot.slane %v1308, %v1316
          %v1318 = vlaneseq
          %v1319 = vshrl.u32 %v1318, 7
          %v1320 = vsub.s32 2, %v1319
          %v1321 = vrot.slane %v1308, %v1320
          %v1322 = vlaneseq
          %v1323 = vshrl.u32 %v1322, 7
          %v1324 = vsub.s32 3, %v1323
          %v1325 = vrot.slane %v1308, %v1324
          %v1362 = vunpack.c.l.b16 %v1276
          %v1363 = vunpack.c.h.b16 %v1276
          %v1364 = vunpack.c.l.b16 %v1277
          %v1365 = vunpack.c.h.b16 %v1277
          %v1366 = vunpack.c.l.b16 %v1278
          %v1367 = vunpack.c.h.b16 %v1278
          %v1368 = vunpack.c.l.b16 %v1279
          %v1369 = vunpack.c.h.b16 %v1279
          %v1370 = vunpack.c.l.b16 %v1280
          %v1371 = vunpack.c.h.b16 %v1280
          %v1372 = vunpack.c.l.b16 %v1281
          %v1373 = vunpack.c.h.b16 %v1281
          %v1374 = vunpack.c.l.b16 %v1282
          %v1375 = vunpack.c.h.b16 %v1282
          %v1376 = vunpack.c.l.b16 %v1283
          %v1377 = vunpack.c.h.b16 %v1283
          %v1378 = vunpack.c.l.b16 %v1284
          %v1379 = vunpack.c.h.b16 %v1284
          %v1380 = vunpack.c.l.b16 %v1285
          %v1381 = vunpack.c.h.b16 %v1285
          %v1382 = vunpack.c.l.b16 %v1286
          %v1383 = vunpack.c.h.b16 %v1286
          %v1384 = vunpack.c.l.b16 %v1287
          %v1385 = vunpack.c.h.b16 %v1287
          %v1386 = vunpack.c.l.b16 %v1288
          %v1387 = vunpack.c.h.b16 %v1288
          %v1388 = vunpack.c.l.b16 %v1289
          %v1389 = vunpack.c.h.b16 %v1289
          %v1390 = vunpack.c.l.b16 %v1290
          %v1391 = vunpack.c.h.b16 %v1290
          %v1392 = vunpack.c.l.b16 %v1291
          %v1393 = vunpack.c.h.b16 %v1291
          %v1394 = vunpack.c.l.b16 %v1292
          %v1395 = vunpack.c.h.b16 %v1292
          %v1396 = vunpack.c.l.b16 %v1293
          %v1397 = vunpack.c.h.b16 %v1293
          %v1398 = vunpack.c.l.b16 %v1294
          %v1399 = vunpack.c.h.b16 %v1294
          %v1400 = vunpack.c.l.b16 %v1295
          %v1401 = vunpack.c.h.b16 %v1295
          %v1402 = vunpack.c.l.b16 %v1296
          %v1403 = vunpack.c.h.b16 %v1296
          %v1404 = vunpack.c.l.b16 %v1297
          %v1405 = vunpack.c.h.b16 %v1297
          %v1406 = vunpack.c.l.b16 %v1298
          %v1407 = vunpack.c.h.b16 %v1298
          %v1408 = vunpack.c.l.b16 %v1299
          %v1409 = vunpack.c.h.b16 %v1299
          %v1410 = vunpack.c.l.b16 %v1300
          %v1411 = vunpack.c.h.b16 %v1300
          %v1412 = vunpack.c.l.b16 %v1301
          %v1413 = vunpack.c.h.b16 %v1301
          %v1414 = vunpack.c.l.b16 %v1302
          %v1415 = vunpack.c.h.b16 %v1302
          %v1416 = vunpack.c.l.b16 %v1303
          %v1417 = vunpack.c.h.b16 %v1303
          %v1418 = vunpack.c.l.b16 %v1304
          %v1419 = vunpack.c.h.b16 %v1304
          %v1420 = vunpack.c.l.b16 %v1305
          %v1421 = vunpack.c.h.b16 %v1305
          %v1422 = vunpack.c.l.b16 %v1306
          %v1423 = vunpack.c.h.b16 %v1306
          %v1424 = vunpack.c.l.b16 %v1307
          %v1425 = vunpack.c.h.b16 %v1307
          %v1426 = vpack.c.b16 %v1366, %v1362
          %v1427 = vpack.c.b16 %v1367, %v1363
          %v1428 = vpack.c.b16 %v1368, %v1364
          %v1429 = vpack.c.b16 %v1369, %v1365
          %v1430 = vpack.c.b16 %v1374, %v1370
          %v1431 = vpack.c.b16 %v1375, %v1371
          %v1432 = vpack.c.b16 %v1376, %v1372
          %v1433 = vpack.c.b16 %v1377, %v1373
          %v1434 = vpack.c.b16 %v1382, %v1378
          %v1435 = vpack.c.b16 %v1383, %v1379
          %v1436 = vpack.c.b16 %v1384, %v1380
          %v1437 = vpack.c.b16 %v1385, %v1381
          %v1438 = vpack.c.b16 %v1390, %v1386
          %v1439 = vpack.c.b16 %v1391, %v1387
          %v1440 = vpack.c.b16 %v1392, %v1388
          %v1441 = vpack.c.b16 %v1393, %v1389
          %v1442 = vpack.c.b16 %v1398, %v1394
          %v1443 = vpack.c.b16 %v1399, %v1395
          %v1444 = vpack.c.b16 %v1400, %v1396
          %v1445 = vpack.c.b16 %v1401, %v1397
          %v1446 = vpack.c.b16 %v1406, %v1402
          %v1447 = vpack.c.b16 %v1407, %v1403
          %v1448 = vpack.c.b16 %v1408, %v1404
          %v1449 = vpack.c.b16 %v1409, %v1405
          %v1450 = vpack.c.b16 %v1414, %v1410
          %v1451 = vpack.c.b16 %v1415, %v1411
          %v1452 = vpack.c.b16 %v1416, %v1412
          %v1453 = vpack.c.b16 %v1417, %v1413
          %v1454 = vpack.c.b16 %v1422, %v1418
          %v1455 = vpack.c.b16 %v1423, %v1419
          %v1456 = vpack.c.b16 %v1424, %v1420
          %v1457 = vpack.c.b16 %v1425, %v1421
          %1490 = vmatprep.subr.bf16.mxu0 %v1427
          %1491 = vmatpush1.bf16.msra.mxu0 %v1426
          %1492 = vmatprep.subr.bf16.mxu0 %v1431
          %1493 = vmatpush1.bf16.msra.mxu0 %v1430
          %1494 = vmatprep.subr.bf16.mxu0 %v1435
          %1495 = vmatpush1.bf16.msra.mxu0 %v1434
          %1496 = vmatprep.subr.bf16.mxu0 %v1439
          %1497 = vmatpush1.bf16.msra.mxu0 %v1438
          %1498 = vmatprep.subr.bf16.mxu0 %v1443
          %1499 = vmatpush1.bf16.msra.mxu0 %v1442
          %1500 = vmatprep.subr.bf16.mxu0 %v1447
          %1501 = vmatpush1.bf16.msra.mxu0 %v1446
          %1502 = vmatprep.subr.bf16.mxu0 %v1451
          %1503 = vmatpush1.bf16.msra.mxu0 %v1450
          %1504 = vmatprep.subr.bf16.mxu0 %v1455
          %1505 = vmatpush1.bf16.msra.mxu0 %v1454
          %1506 = vmatprep.subr.bf16.mxu0 0
          %1507 = vmatpush1.bf16.msra.mxu0 0
          %1508 = vmatprep.subr.bf16.mxu0 0
          %1509 = vmatpush1.bf16.msra.mxu0 0
          %1510 = vmatprep.subr.bf16.mxu0 0
          %1511 = vmatpush1.bf16.msra.mxu0 0
          %1512 = vmatprep.subr.bf16.mxu0 0
          %1513 = vmatpush1.bf16.msra.mxu0 0
          %1514 = vmatprep.subr.bf16.mxu0 0
          %1515 = vmatpush1.bf16.msra.mxu0 0
          %1516 = vmatprep.subr.bf16.mxu0 0
          %1517 = vmatpush1.bf16.msra.mxu0 0
          %1518 = vmatprep.subr.bf16.mxu0 0
          %1519 = vmatpush1.bf16.msra.mxu0 0
          %1520 = vmatprep.subr.bf16.mxu0 0
          %1521 = vmatpush1.bf16.msra.mxu0 0
          %1522 = vmatprep.mubr.bf16.mxu0 0
          %1523 = vmatmul.mubr.bf16.gmra.mrb[0].mxu0 %v979
          %v1524 = vpop.f32.mrb[0].mxu0
          %v1525 = vadd.f32 %v1313, %v1524
          %v1526 = vpop.f32.mrb[0].mxu0
          %v1527 = vadd.f32 %v1317, %v1526
          %v1528 = vpop.f32.mrb[0].mxu0
          %v1529 = vpop.f32.mrb[0].mxu0
          %1530 = vdwg.mxu0
          %1531 = vmatprep.subr.bf16.mxu0 %v1429
          %1532 = vmatpush1.bf16.msra.mxu0 %v1428
          %1533 = vmatprep.subr.bf16.mxu0 %v1433
          %1534 = vmatpush1.bf16.msra.mxu0 %v1432
          %1535 = vmatprep.subr.bf16.mxu0 %v1437
          %1536 = vmatpush1.bf16.msra.mxu0 %v1436
          %1537 = vmatprep.subr.bf16.mxu0 %v1441
          %1538 = vmatpush1.bf16.msra.mxu0 %v1440
          %1539 = vmatprep.subr.bf16.mxu0 %v1445
          %1540 = vmatpush1.bf16.msra.mxu0 %v1444
          %1541 = vmatprep.subr.bf16.mxu0 %v1449
          %1542 = vmatpush1.bf16.msra.mxu0 %v1448
          %1543 = vmatprep.subr.bf16.mxu0 %v1453
          %1544 = vmatpush1.bf16.msra.mxu0 %v1452
          %1545 = vmatprep.subr.bf16.mxu0 %v1457
          %1546 = vmatpush1.bf16.msra.mxu0 %v1456
          %1547 = vmatprep.subr.bf16.mxu0 0
          %1548 = vmatpush1.bf16.msra.mxu0 0
          %1549 = vmatprep.subr.bf16.mxu0 0
          %1550 = vmatpush1.bf16.msra.mxu0 0
          %1551 = vmatprep.subr.bf16.mxu0 0
          %1552 = vmatpush1.bf16.msra.mxu0 0
          %1553 = vmatprep.subr.bf16.mxu0 0
          %1554 = vmatpush1.bf16.msra.mxu0 0
          %1555 = vmatprep.subr.bf16.mxu0 0
          %1556 = vmatpush1.bf16.msra.mxu0 0
          %1557 = vmatprep.subr.bf16.mxu0 0
          %1558 = vmatpush1.bf16.msra.mxu0 0
          %1559 = vmatprep.subr.bf16.mxu0 0
          %1560 = vmatpush1.bf16.msra.mxu0 0
          %1561 = vmatprep.subr.bf16.mxu0 0
          %1562 = vmatpush1.bf16.msra.mxu0 0
          %1563 = vmatprep.mubr.bf16.mxu0 0
          %1564 = vmatmul.mubr.bf16.gmra.mrb[0].mxu0 %v979
          %v1565 = vpop.f32.mrb[0].mxu0
          %v1566 = vadd.f32 %v1321, %v1565
          %v1567 = vpop.f32.mrb[0].mxu0
          %v1568 = vadd.f32 %v1325, %v1567
          %v1569 = vpop.f32.mrb[0].mxu0
          %v1570 = vpop.f32.mrb[0].mxu0
          %1571 = vdwg.mxu0
          %v1572 = vpack.c.bf16 %v1229, %v1229
          %v1573 = vpack.c.bf16 %v1231, %v1231
          %v1574 = vpack.c.bf16 %v1270, %v1270
          %v1575 = vpack.c.bf16 %v1272, %v1272
          %v1580 = vunpack.c.l.b16 %v1572
          %v1581 = vunpack.c.l.b16 %v1573
          %v1582 = vunpack.c.l.b16 %v1574
          %v1583 = vunpack.c.l.b16 %v1575
          %v1584 = vpack.c.b16 %v1581, %v1580
          %v1585 = vpack.c.b16 %v1583, %v1582
          %1588 = vst [vmem:[#allocation2] sm:$0xff] %v1584
          %1589 = vst [vmem:[#allocation2 + $0x8] sm:$0xff] %v1585
          %v1590 = vpack.c.bf16 %v1525, %v1525
          %v1591 = vpack.c.bf16 %v1527, %v1527
          %v1592 = vpack.c.bf16 %v1566, %v1566
          %v1593 = vpack.c.bf16 %v1568, %v1568
          %v1598 = vunpack.c.l.b16 %v1590
          %v1599 = vunpack.c.l.b16 %v1591
          %v1600 = vunpack.c.l.b16 %v1592
          %v1601 = vunpack.c.l.b16 %v1593
          %v1602 = vpack.c.b16 %v1599, %v1598
          %v1603 = vpack.c.b16 %v1601, %v1600
          %1606 = vst [vmem:[#allocation3] sm:$0xff] %v1602
          %1607 = vst [vmem:[#allocation3 + $0x8] sm:$0xff] %v1603
        $region184: #{tpu_custom_call.1} parent=99 // pred_fallthru
          _
        %v1608 = vld [vmem:[%s793] sm:$0xff]
        %1609 = vadd.xlane.f32.xlu0 %v1608
        %v1610 = vpop.xlane.xlu0 %1609
        %v1611 = vrcp.pop 128.0
        %v1612 = vmul.f32 %v1610, %v1611
        %v1613 = vsub.f32 %v1608, %v1612
        %v1614 = vmul.f32 %v1613, %v1613
        %1615 = vadd.xlane.f32.xlu0 %v1614
        %v1616 = vpop.xlane.xlu0 %1615
        %v1617 = vmul.f32 %v1616, 0.007874016
        %v1618 = vrsqrt.pop %v1617
        %v1619 = vmul.f32 %v1617, %v1618
        %vm1620 = vcmp.eq.f32.partialorder %v1617, inf
        %v1621 = vsel %vm1620, %v1617, %v1619
        %vm1622 = vcmp.eq.f32.partialorder %v1617, 0.0
        %v1623 = vand.u32 %v1617, 2147483648
        %v1624 = vsel %vm1622, %v1623, %v1621
        %v1625 = vadd.f32 %v1624, 1e-06
        %v1626 = vrcp.pop %v1625
        %v1628 = vlaneseq
        %v1629 = vshrl.u32 %v1628, 7
        %v1630 = vsub.s32 0, %v1629
        %v1631 = vrot.slane %v939, %v1630
        %v1633 = vmul.f32 %v1631, %v1613
        %v1634 = vmul.f32 %v1633, %v1626
        %v1636 = vlaneseq
        %v1637 = vshrl.u32 %v1636, 7
        %v1638 = vsub.s32 0, %v1637
        %v1639 = vrot.slane %v940, %v1638
        %v1641 = vadd.f32 %v1634, %v1639
        %v1642 = vmul.f32 %v1641, 0.0625
        %v1643 = vpack.c.bf16 %v1642, %v1642
        %v1644 = vld [vmem:[#allocation9] sm:$0xff]
        %v1645 = vld [vmem:[#allocation9 + $0x8] sm:$0xff]
        %v1646 = vld [vmem:[#allocation9 + $0x10] sm:$0xff]
        %v1647 = vld [vmem:[#allocation9 + $0x18] sm:$0xff]
        %v1648 = vld [vmem:[#allocation9 + $0x20] sm:$0xff]
        %v1649 = vld [vmem:[#allocation9 + $0x28] sm:$0xff]
        %v1650 = vld [vmem:[#allocation9 + $0x30] sm:$0xff]
        %v1651 = vld [vmem:[#allocation9 + $0x38] sm:$0xff]
        %v1652 = vld [vmem:[#allocation9 + $0x40] sm:$0xff]
        %v1653 = vld [vmem:[#allocation9 + $0x48] sm:$0xff]
        %v1654 = vld [vmem:[#allocation9 + $0x50] sm:$0xff]
        %v1655 = vld [vmem:[#allocation9 + $0x58] sm:$0xff]
        %v1656 = vld [vmem:[#allocation9 + $0x60] sm:$0xff]
        %v1657 = vld [vmem:[#allocation9 + $0x68] sm:$0xff]
        %v1658 = vld [vmem:[#allocation9 + $0x70] sm:$0xff]
        %v1659 = vld [vmem:[#allocation9 + $0x78] sm:$0xff]
        %v1660 = vld [vmem:[#allocation9 + $0x80] sm:$0xff]
        %v1661 = vld [vmem:[#allocation9 + $0x88] sm:$0xff]
        %v1662 = vld [vmem:[#allocation9 + $0x90] sm:$0xff]
        %v1663 = vld [vmem:[#allocation9 + $0x98] sm:$0xff]
        %v1664 = vld [vmem:[#allocation9 + $0xa0] sm:$0xff]
        %v1665 = vld [vmem:[#allocation9 + $0xa8] sm:$0xff]
        %v1666 = vld [vmem:[#allocation9 + $0xb0] sm:$0xff]
        %v1667 = vld [vmem:[#allocation9 + $0xb8] sm:$0xff]
        %v1668 = vld [vmem:[#allocation9 + $0xc0] sm:$0xff]
        %v1669 = vld [vmem:[#allocation9 + $0xc8] sm:$0xff]
        %v1670 = vld [vmem:[#allocation9 + $0xd0] sm:$0xff]
        %v1671 = vld [vmem:[#allocation9 + $0xd8] sm:$0xff]
        %v1672 = vld [vmem:[#allocation9 + $0xe0] sm:$0xff]
        %v1673 = vld [vmem:[#allocation9 + $0xe8] sm:$0xff]
        %v1674 = vld [vmem:[#allocation9 + $0xf0] sm:$0xff]
        %v1675 = vld [vmem:[#allocation9 + $0xf8] sm:$0xff]
        %v1676 = vld [vmem:[#allocation10] sm:$0xf]
        %v1677 = vmul.f32 %v1676, 0.0625
        %v1679 = vlaneseq
        %v1680 = vshrl.u32 %v1679, 7
        %v1681 = vsub.s32 0, %v1680
        %v1682 = vrot.slane %v1677, %v1681
        %v1683 = vlaneseq
        %v1684 = vshrl.u32 %v1683, 7
        %v1685 = vsub.s32 1, %v1684
        %v1686 = vrot.slane %v1677, %v1685
        %v1687 = vlaneseq
        %v1688 = vshrl.u32 %v1687, 7
        %v1689 = vsub.s32 2, %v1688
        %v1690 = vrot.slane %v1677, %v1689
        %v1691 = vlaneseq
        %v1692 = vshrl.u32 %v1691, 7
        %v1693 = vsub.s32 3, %v1692
        %v1694 = vrot.slane %v1677, %v1693
        %v1731 = vunpack.c.l.b16 %v1644
        %v1732 = vunpack.c.h.b16 %v1644
        %v1733 = vunpack.c.l.b16 %v1645
        %v1734 = vunpack.c.h.b16 %v1645
        %v1735 = vunpack.c.l.b16 %v1646
        %v1736 = vunpack.c.h.b16 %v1646
        %v1737 = vunpack.c.l.b16 %v1647
        %v1738 = vunpack.c.h.b16 %v1647
        %v1739 = vunpack.c.l.b16 %v1648
        %v1740 = vunpack.c.h.b16 %v1648
        %v1741 = vunpack.c.l.b16 %v1649
        %v1742 = vunpack.c.h.b16 %v1649
        %v1743 = vunpack.c.l.b16 %v1650
        %v1744 = vunpack.c.h.b16 %v1650
        %v1745 = vunpack.c.l.b16 %v1651
        %v1746 = vunpack.c.h.b16 %v1651
        %v1747 = vunpack.c.l.b16 %v1652
        %v1748 = vunpack.c.h.b16 %v1652
        %v1749 = vunpack.c.l.b16 %v1653
        %v1750 = vunpack.c.h.b16 %v1653
        %v1751 = vunpack.c.l.b16 %v1654
        %v1752 = vunpack.c.h.b16 %v1654
        %v1753 = vunpack.c.l.b16 %v1655
        %v1754 = vunpack.c.h.b16 %v1655
        %v1755 = vunpack.c.l.b16 %v1656
        %v1756 = vunpack.c.h.b16 %v1656
        %v1757 = vunpack.c.l.b16 %v1657
        %v1758 = vunpack.c.h.b16 %v1657
        %v1759 = vunpack.c.l.b16 %v1658
        %v1760 = vunpack.c.h.b16 %v1658
        %v1761 = vunpack.c.l.b16 %v1659
        %v1762 = vunpack.c.h.b16 %v1659
        %v1763 = vunpack.c.l.b16 %v1660
        %v1764 = vunpack.c.h.b16 %v1660
        %v1765 = vunpack.c.l.b16 %v1661
        %v1766 = vunpack.c.h.b16 %v1661
        %v1767 = vunpack.c.l.b16 %v1662
        %v1768 = vunpack.c.h.b16 %v1662
        %v1769 = vunpack.c.l.b16 %v1663
        %v1770 = vunpack.c.h.b16 %v1663
        %v1771 = vunpack.c.l.b16 %v1664
        %v1772 = vunpack.c.h.b16 %v1664
        %v1773 = vunpack.c.l.b16 %v1665
        %v1774 = vunpack.c.h.b16 %v1665
        %v1775 = vunpack.c.l.b16 %v1666
        %v1776 = vunpack.c.h.b16 %v1666
        %v1777 = vunpack.c.l.b16 %v1667
        %v1778 = vunpack.c.h.b16 %v1667
        %v1779 = vunpack.c.l.b16 %v1668
        %v1780 = vunpack.c.h.b16 %v1668
        %v1781 = vunpack.c.l.b16 %v1669
        %v1782 = vunpack.c.h.b16 %v1669
        %v1783 = vunpack.c.l.b16 %v1670
        %v1784 = vunpack.c.h.b16 %v1670
        %v1785 = vunpack.c.l.b16 %v1671
        %v1786 = vunpack.c.h.b16 %v1671
        %v1787 = vunpack.c.l.b16 %v1672
        %v1788 = vunpack.c.h.b16 %v1672
        %v1789 = vunpack.c.l.b16 %v1673
        %v1790 = vunpack.c.h.b16 %v1673
        %v1791 = vunpack.c.l.b16 %v1674
        %v1792 = vunpack.c.h.b16 %v1674
        %v1793 = vunpack.c.l.b16 %v1675
        %v1794 = vunpack.c.h.b16 %v1675
        %v1795 = vpack.c.b16 %v1735, %v1731
        %v1796 = vpack.c.b16 %v1736, %v1732
        %v1797 = vpack.c.b16 %v1737, %v1733
        %v1798 = vpack.c.b16 %v1738, %v1734
        %v1799 = vpack.c.b16 %v1743, %v1739
        %v1800 = vpack.c.b16 %v1744, %v1740
        %v1801 = vpack.c.b16 %v1745, %v1741
        %v1802 = vpack.c.b16 %v1746, %v1742
        %v1803 = vpack.c.b16 %v1751, %v1747
        %v1804 = vpack.c.b16 %v1752, %v1748
        %v1805 = vpack.c.b16 %v1753, %v1749
        %v1806 = vpack.c.b16 %v1754, %v1750
        %v1807 = vpack.c.b16 %v1759, %v1755
        %v1808 = vpack.c.b16 %v1760, %v1756
        %v1809 = vpack.c.b16 %v1761, %v1757
        %v1810 = vpack.c.b16 %v1762, %v1758
        %v1811 = vpack.c.b16 %v1767, %v1763
        %v1812 = vpack.c.b16 %v1768, %v1764
        %v1813 = vpack.c.b16 %v1769, %v1765
        %v1814 = vpack.c.b16 %v1770, %v1766
        %v1815 = vpack.c.b16 %v1775, %v1771
        %v1816 = vpack.c.b16 %v1776, %v1772
        %v1817 = vpack.c.b16 %v1777, %v1773
        %v1818 = vpack.c.b16 %v1778, %v1774
        %v1819 = vpack.c.b16 %v1783, %v1779
        %v1820 = vpack.c.b16 %v1784, %v1780
        %v1821 = vpack.c.b16 %v1785, %v1781
        %v1822 = vpack.c.b16 %v1786, %v1782
        %v1823 = vpack.c.b16 %v1791, %v1787
        %v1824 = vpack.c.b16 %v1792, %v1788
        %v1825 = vpack.c.b16 %v1793, %v1789
        %v1826 = vpack.c.b16 %v1794, %v1790
        %1859 = vmatprep.subr.bf16.mxu0 %v1796
        %1860 = vmatpush1.bf16.msra.mxu0 %v1795
        %1861 = vmatprep.subr.bf16.mxu0 %v1800
        %1862 = vmatpush1.bf16.msra.mxu0 %v1799
        %1863 = vmatprep.subr.bf16.mxu0 %v1804
        %1864 = vmatpush1.bf16.msra.mxu0 %v1803
        %1865 = vmatprep.subr.bf16.mxu0 %v1808
        %1866 = vmatpush1.bf16.msra.mxu0 %v1807
        %1867 = vmatprep.subr.bf16.mxu0 %v1812
        %1868 = vmatpush1.bf16.msra.mxu0 %v1811
        %1869 = vmatprep.subr.bf16.mxu0 %v1816
        %1870 = vmatpush1.bf16.msra.mxu0 %v1815
        %1871 = vmatprep.subr.bf16.mxu0 %v1820
        %1872 = vmatpush1.bf16.msra.mxu0 %v1819
        %1873 = vmatprep.subr.bf16.mxu0 %v1824
        %1874 = vmatpush1.bf16.msra.mxu0 %v1823
        %1875 = vmatprep.subr.bf16.mxu0 0
        %1876 = vmatpush1.bf16.msra.mxu0 0
        %1877 = vmatprep.subr.bf16.mxu0 0
        %1878 = vmatpush1.bf16.msra.mxu0 0
        %1879 = vmatprep.subr.bf16.mxu0 0
        %1880 = vmatpush1.bf16.msra.mxu0 0
        %1881 = vmatprep.subr.bf16.mxu0 0
        %1882 = vmatpush1.bf16.msra.mxu0 0
        %1883 = vmatprep.subr.bf16.mxu0 0
        %1884 = vmatpush1.bf16.msra.mxu0 0
        %1885 = vmatprep.subr.bf16.mxu0 0
        %1886 = vmatpush1.bf16.msra.mxu0 0
        %1887 = vmatprep.subr.bf16.mxu0 0
        %1888 = vmatpush1.bf16.msra.mxu0 0
        %1889 = vmatprep.subr.bf16.mxu0 0
        %1890 = vmatpush1.bf16.msra.mxu0 0
        %1891 = vmatprep.mubr.bf16.mxu0 0
        %1892 = vmatmul.mubr.bf16.gmra.mrb[0].mxu0 %v1643
        %v1893 = vpop.f32.mrb[0].mxu0
        %v1894 = vadd.f32 %v1682, %v1893
        %v1895 = vpop.f32.mrb[0].mxu0
        %v1896 = vadd.f32 %v1686, %v1895
        %v1897 = vpop.f32.mrb[0].mxu0
        %v1898 = vpop.f32.mrb[0].mxu0
        %1899 = vdwg.mxu0
        %1900 = vmatprep.subr.bf16.mxu0 %v1798
        %1901 = vmatpush1.bf16.msra.mxu0 %v1797
        %1902 = vmatprep.subr.bf16.mxu0 %v1802
        %1903 = vmatpush1.bf16.msra.mxu0 %v1801
        %1904 = vmatprep.subr.bf16.mxu0 %v1806
        %1905 = vmatpush1.bf16.msra.mxu0 %v1805
        %1906 = vmatprep.subr.bf16.mxu0 %v1810
        %1907 = vmatpush1.bf16.msra.mxu0 %v1809
        %1908 = vmatprep.subr.bf16.mxu0 %v1814
        %1909 = vmatpush1.bf16.msra.mxu0 %v1813
        %1910 = vmatprep.subr.bf16.mxu0 %v1818
        %1911 = vmatpush1.bf16.msra.mxu0 %v1817
        %1912 = vmatprep.subr.bf16.mxu0 %v1822
        %1913 = vmatpush1.bf16.msra.mxu0 %v1821
        %1914 = vmatprep.subr.bf16.mxu0 %v1826
        %1915 = vmatpush1.bf16.msra.mxu0 %v1825
        %1916 = vmatprep.subr.bf16.mxu0 0
        %1917 = vmatpush1.bf16.msra.mxu0 0
        %1918 = vmatprep.subr.bf16.mxu0 0
        %1919 = vmatpush1.bf16.msra.mxu0 0
        %1920 = vmatprep.subr.bf16.mxu0 0
        %1921 = vmatpush1.bf16.msra.mxu0 0
        %1922 = vmatprep.subr.bf16.mxu0 0
        %1923 = vmatpush1.bf16.msra.mxu0 0
        %1924 = vmatprep.subr.bf16.mxu0 0
        %1925 = vmatpush1.bf16.msra.mxu0 0
        %1926 = vmatprep.subr.bf16.mxu0 0
        %1927 = vmatpush1.bf16.msra.mxu0 0
        %1928 = vmatprep.subr.bf16.mxu0 0
        %1929 = vmatpush1.bf16.msra.mxu0 0
        %1930 = vmatprep.subr.bf16.mxu0 0
        %1931 = vmatpush1.bf16.msra.mxu0 0
        %1932 = vmatprep.mubr.bf16.mxu0 0
        %1933 = vmatmul.mubr.bf16.gmra.mrb[0].mxu0 %v1643
        %v1934 = vpop.f32.mrb[0].mxu0
        %v1935 = vadd.f32 %v1690, %v1934
        %v1936 = vpop.f32.mrb[0].mxu0
        %v1937 = vadd.f32 %v1694, %v1936
        %v1938 = vpop.f32.mrb[0].mxu0
        %v1939 = vpop.f32.mrb[0].mxu0
        %1940 = vdwg.mxu0
        %v1941 = vld [vmem:[%s802] sm:$0x3]
        %vm1942 = vnez %v1941
        %v1943 = vpack.c.bf16 %v1894, %v1894
        %v1944 = vpack.c.bf16 %v1896, %v1896
        %v1945 = vld [vmem:[#allocation2] sm:$0xff]
        %v1947 = vunpack.c.l.b16 %v1945
        %v1948 = vunpack.c.h.b16 %v1945
        %v1949 = vpack.c.b16 %v1947, %v1947
        %v1950 = vpack.c.b16 %v1948, %v1948
        %1953 = vmatprep.subr.bf16.mxu0 %v1950
        %1954 = vmatpush1.bf16.xpose.msra.mxu0 %v1949
        %1955 = vmatprep.subr.bf16.mxu0 0
        %1956 = vmatpush1.bf16.xpose.msra.mxu0 0
        %1957 = vmatprep.subr.bf16.mxu0 0
        %1958 = vmatpush1.bf16.xpose.msra.mxu0 0
        %1959 = vmatprep.subr.bf16.mxu0 0
        %1960 = vmatpush1.bf16.xpose.msra.mxu0 0
        %1961 = vmatprep.subr.bf16.mxu0 0
        %1962 = vmatpush1.bf16.xpose.msra.mxu0 0
        %1963 = vmatprep.subr.bf16.mxu0 0
        %1964 = vmatpush1.bf16.xpose.msra.mxu0 0
        %1965 = vmatprep.subr.bf16.mxu0 0
        %1966 = vmatpush1.bf16.xpose.msra.mxu0 0
        %1967 = vmatprep.subr.bf16.mxu0 0
        %1968 = vmatpush1.bf16.xpose.msra.mxu0 0
        %1969 = vmatprep.subr.bf16.mxu0 0
        %1970 = vmatpush1.bf16.xpose.msra.mxu0 0
        %1971 = vmatprep.subr.bf16.mxu0 0
        %1972 = vmatpush1.bf16.xpose.msra.mxu0 0
        %1973 = vmatprep.subr.bf16.mxu0 0
        %1974 = vmatpush1.bf16.xpose.msra.mxu0 0
        %1975 = vmatprep.subr.bf16.mxu0 0
        %1976 = vmatpush1.bf16.xpose.msra.mxu0 0
        %1977 = vmatprep.subr.bf16.mxu0 0
        %1978 = vmatpush1.bf16.xpose.msra.mxu0 0
        %1979 = vmatprep.subr.bf16.mxu0 0
        %1980 = vmatpush1.bf16.xpose.msra.mxu0 0
        %1981 = vmatprep.subr.bf16.mxu0 0
        %1982 = vmatpush1.bf16.xpose.msra.mxu0 0
        %1983 = vmatprep.subr.bf16.mxu0 0
        %1984 = vmatpush1.bf16.xpose.msra.mxu0 0
        %1985 = vmatprep.mubr.bf16.mxu0 %v1944
        %1986 = vmatmul.mubr.bf16.gmra.mrb[0].mxu0 %v1943
        %v1987 = vpop.f32.mrb[0].mxu0
        %v1988 = vadd.f32 0.0, %v1987
        %v1989 = vpop.f32.mrb[0].mxu0
        %v1990 = vpop.f32.mrb[0].mxu0
        %v1991 = vpop.f32.mrb[0].mxu0
        %1992 = vdwg.mxu0
        %v1993 = vsel %vm1942, 16843009, 0
        %v1994 = vunpack.c.0.s8 %v1993
        %vm1995 = vcmp.ne.s32.totalorder %v1994, 0
        %v1996 = vsel %vm1995, -1e+09, %v1988
        %vm1997 = vcmask 64512
        %v1998 = vsel %vm1997, %v1996, -inf
        %1999 = vmax.xlane.f32.xlu0 %v1998
        %v2000 = vpop.xlane.xlu0 %1999
        %v2001 = vsub.f32 %v1996, %v2000
        %v2002 = vmul.f32 %v2001, 1.442695
        %v2003 = vpow.pop %v2002
        %v2004 = vsel %vm1997, %v2003, 0.0
        %2005 = vadd.xlane.f32.xlu0 %v2004
        %v2006 = vpop.xlane.xlu0 %2005
        %v2007 = vrcp.pop %v2006
        %v2008 = vmul.f32 %v2003, %v2007
        %v2009 = vpack.c.bf16 %v2008, %v2008
        %v2010 = vld [vmem:[#allocation3] sm:$0xff]
        %v2012 = vunpack.c.l.b16 %v2010
        %v2013 = vunpack.c.h.b16 %v2010
        %v2014 = vpack.c.b16 %v2012, %v2012
        %v2015 = vpack.c.b16 %v2013, %v2013
        %v2017 = vsel %vm1997, %v2009, 0
        %vm2019 = vcmask 1043456
        %v2021 = vsel %vm2019, %v2014, 0
        %v2024 = vsel %vm2019, %v2015, 0
        %2026 = vmatprep.subr.bf16.mxu0 %v2024
        %2027 = vmatpush1.bf16.msra.mxu0 %v2021
        %2028 = vmatprep.subr.bf16.mxu0 0
        %2029 = vmatpush1.bf16.msra.mxu0 0
        %2030 = vmatprep.subr.bf16.mxu0 0
        %2031 = vmatpush1.bf16.msra.mxu0 0
        %2032 = vmatprep.subr.bf16.mxu0 0
        %2033 = vmatpush1.bf16.msra.mxu0 0
        %2034 = vmatprep.subr.bf16.mxu0 0
        %2035 = vmatpush1.bf16.msra.mxu0 0
        %2036 = vmatprep.subr.bf16.mxu0 0
        %2037 = vmatpush1.bf16.msra.mxu0 0
        %2038 = vmatprep.subr.bf16.mxu0 0
        %2039 = vmatpush1.bf16.msra.mxu0 0
        %2040 = vmatprep.subr.bf16.mxu0 0
        %2041 = vmatpush1.bf16.msra.mxu0 0
        %2042 = vmatprep.subr.bf16.mxu0 0
        %2043 = vmatpush1.bf16.msra.mxu0 0
        %2044 = vmatprep.subr.bf16.mxu0 0
        %2045 = vmatpush1.bf16.msra.mxu0 0
        %2046 = vmatprep.subr.bf16.mxu0 0
        %2047 = vmatpush1.bf16.msra.mxu0 0
        %2048 = vmatprep.subr.bf16.mxu0 0
        %2049 = vmatpush1.bf16.msra.mxu0 0
        %2050 = vmatprep.subr.bf16.mxu0 0
        %2051 = vmatpush1.bf16.msra.mxu0 0
        %2052 = vmatprep.subr.bf16.mxu0 0
        %2053 = vmatpush1.bf16.msra.mxu0 0
        %2054 = vmatprep.subr.bf16.mxu0 0
        %2055 = vmatpush1.bf16.msra.mxu0 0
        %2056 = vmatprep.subr.bf16.mxu0 0
        %2057 = vmatpush1.bf16.msra.mxu0 0
        %2058 = vmatprep.mubr.bf16.mxu0 0
        %2059 = vmatmul.mubr.bf16.gmra.mrb[0].mxu0 %v2017
        %v2060 = vpop.f32.mrb[0].mxu0
        %v2061 = vadd.f32 0.0, %v2060
        %v2062 = vpop.f32.mrb[0].mxu0
        %v2063 = vadd.f32 0.0, %v2062
        %v2064 = vpop.f32.mrb[0].mxu0
        %v2065 = vpop.f32.mrb[0].mxu0
        %2066 = vdwg.mxu0
        %v2067 = vpack.c.bf16 %v2061, %v2061
        %v2068 = vpack.c.bf16 %v2063, %v2063
        %v2069 = vpack.c.bf16 %v1935, %v1935
        %v2070 = vpack.c.bf16 %v1937, %v1937
        %v2071 = vld [vmem:[#allocation2 + $0x8] sm:$0xff]
        %v2073 = vunpack.c.l.b16 %v2071
        %v2074 = vunpack.c.h.b16 %v2071
        %v2075 = vpack.c.b16 %v2073, %v2073
        %v2076 = vpack.c.b16 %v2074, %v2074
        %2079 = vmatprep.subr.bf16.mxu0 %v2076
        %2080 = vmatpush1.bf16.xpose.msra.mxu0 %v2075
        %2081 = vmatprep.subr.bf16.mxu0 0
        %2082 = vmatpush1.bf16.xpose.msra.mxu0 0
        %2083 = vmatprep.subr.bf16.mxu0 0
        %2084 = vmatpush1.bf16.xpose.msra.mxu0 0
        %2085 = vmatprep.subr.bf16.mxu0 0
        %2086 = vmatpush1.bf16.xpose.msra.mxu0 0
        %2087 = vmatprep.subr.bf16.mxu0 0
        %2088 = vmatpush1.bf16.xpose.msra.mxu0 0
        %2089 = vmatprep.subr.bf16.mxu0 0
        %2090 = vmatpush1.bf16.xpose.msra.mxu0 0
        %2091 = vmatprep.subr.bf16.mxu0 0
        %2092 = vmatpush1.bf16.xpose.msra.mxu0 0
        %2093 = vmatprep.subr.bf16.mxu0 0
        %2094 = vmatpush1.bf16.xpose.msra.mxu0 0
        %2095 = vmatprep.subr.bf16.mxu0 0
        %2096 = vmatpush1.bf16.xpose.msra.mxu0 0
        %2097 = vmatprep.subr.bf16.mxu0 0
        %2098 = vmatpush1.bf16.xpose.msra.mxu0 0
        %2099 = vmatprep.subr.bf16.mxu0 0
        %2100 = vmatpush1.bf16.xpose.msra.mxu0 0
        %2101 = vmatprep.subr.bf16.mxu0 0
        %2102 = vmatpush1.bf16.xpose.msra.mxu0 0
        %2103 = vmatprep.subr.bf16.mxu0 0
        %2104 = vmatpush1.bf16.xpose.msra.mxu0 0
        %2105 = vmatprep.subr.bf16.mxu0 0
        %2106 = vmatpush1.bf16.xpose.msra.mxu0 0
        %2107 = vmatprep.subr.bf16.mxu0 0
        %2108 = vmatpush1.bf16.xpose.msra.mxu0 0
        %2109 = vmatprep.subr.bf16.mxu0 0
        %2110 = vmatpush1.bf16.xpose.msra.mxu0 0
        %2111 = vmatprep.mubr.bf16.mxu0 %v2070
        %2112 = vmatmul.mubr.bf16.gmra.mrb[0].mxu0 %v2069
        %v2113 = vpop.f32.mrb[0].mxu0
        %v2114 = vadd.f32 0.0, %v2113
        %v2115 = vpop.f32.mrb[0].mxu0
        %v2116 = vpop.f32.mrb[0].mxu0
        %v2117 = vpop.f32.mrb[0].mxu0
        %2118 = vdwg.mxu0
        %v2119 = vsel %vm1995, -1e+09, %v2114
        %v2120 = vsel %vm1997, %v2119, -inf
        %2121 = vmax.xlane.f32.xlu0 %v2120
        %v2122 = vpop.xlane.xlu0 %2121
        %v2123 = vsub.f32 %v2119, %v2122
        %v2124 = vmul.f32 %v2123, 1.442695
        %v2125 = vpow.pop %v2124
        %v2126 = vsel %vm1997, %v2125, 0.0
        %2127 = vadd.xlane.f32.xlu0 %v2126
        %v2128 = vpop.xlane.xlu0 %2127
        %v2129 = vrcp.pop %v2128
        %v2130 = vmul.f32 %v2125, %v2129
        %v2131 = vpack.c.bf16 %v2130, %v2130
        %v2132 = vld [vmem:[#allocation3 + $0x8] sm:$0xff]
        %v2134 = vunpack.c.l.b16 %v2132
        %v2135 = vunpack.c.h.b16 %v2132
        %v2136 = vpack.c.b16 %v2134, %v2134
        %v2137 = vpack.c.b16 %v2135, %v2135
        %v2139 = vsel %vm1997, %v2131, 0
        %v2142 = vsel %vm2019, %v2136, 0
        %v2145 = vsel %vm2019, %v2137, 0
        %2147 = vmatprep.subr.bf16.mxu0 %v2145
        %2148 = vmatpush1.bf16.msra.mxu0 %v2142
        %2149 = vmatprep.subr.bf16.mxu0 0
        %2150 = vmatpush1.bf16.msra.mxu0 0
        %2151 = vmatprep.subr.bf16.mxu0 0
        %2152 = vmatpush1.bf16.msra.mxu0 0
        %2153 = vmatprep.subr.bf16.mxu0 0
        %2154 = vmatpush1.bf16.msra.mxu0 0
        %2155 = vmatprep.subr.bf16.mxu0 0
        %2156 = vmatpush1.bf16.msra.mxu0 0
        %2157 = vmatprep.subr.bf16.mxu0 0
        %2158 = vmatpush1.bf16.msra.mxu0 0
        %2159 = vmatprep.subr.bf16.mxu0 0
        %2160 = vmatpush1.bf16.msra.mxu0 0
        %2161 = vmatprep.subr.bf16.mxu0 0
        %2162 = vmatpush1.bf16.msra.mxu0 0
        %2163 = vmatprep.subr.bf16.mxu0 0
        %2164 = vmatpush1.bf16.msra.mxu0 0
        %2165 = vmatprep.subr.bf16.mxu0 0
        %2166 = vmatpush1.bf16.msra.mxu0 0
        %2167 = vmatprep.subr.bf16.mxu0 0
        %2168 = vmatpush1.bf16.msra.mxu0 0
        %2169 = vmatprep.subr.bf16.mxu0 0
        %2170 = vmatpush1.bf16.msra.mxu0 0
        %2171 = vmatprep.subr.bf16.mxu0 0
        %2172 = vmatpush1.bf16.msra.mxu0 0
        %2173 = vmatprep.subr.bf16.mxu0 0
        %2174 = vmatpush1.bf16.msra.mxu0 0
        %2175 = vmatprep.subr.bf16.mxu0 0
        %2176 = vmatpush1.bf16.msra.mxu0 0
        %2177 = vmatprep.subr.bf16.mxu0 0
        %2178 = vmatpush1.bf16.msra.mxu0 0
        %2179 = vmatprep.mubr.bf16.mxu0 0
        %2180 = vmatmul.mubr.bf16.gmra.mrb[0].mxu0 %v2139
        %v2181 = vpop.f32.mrb[0].mxu0
        %v2182 = vadd.f32 0.0, %v2181
        %v2183 = vpop.f32.mrb[0].mxu0
        %v2184 = vadd.f32 0.0, %v2183
        %v2185 = vpop.f32.mrb[0].mxu0
        %v2186 = vpop.f32.mrb[0].mxu0
        %2187 = vdwg.mxu0
        %v2188 = vpack.c.bf16 %v2182, %v2182
        %v2189 = vpack.c.bf16 %v2184, %v2184
        %v2190 = vld [vmem:[#allocation18] sm:$0xf]
        %v2191 = vld [vmem:[#allocation18 + $0x4] sm:$0xf]
        %v2192 = vld [vmem:[#allocation18 + $0x8] sm:$0xf]
        %v2193 = vld [vmem:[#allocation18 + $0xc] sm:$0xf]
        %v2194 = vld [vmem:[#allocation18 + $0x10] sm:$0xf]
        %v2195 = vld [vmem:[#allocation18 + $0x14] sm:$0xf]
        %v2196 = vld [vmem:[#allocation18 + $0x18] sm:$0xf]
        %v2197 = vld [vmem:[#allocation18 + $0x1c] sm:$0xf]
        %v2198 = vld [vmem:[#allocation18 + $0x20] sm:$0xf]
        %v2199 = vld [vmem:[#allocation18 + $0x24] sm:$0xf]
        %v2200 = vld [vmem:[#allocation18 + $0x28] sm:$0xf]
        %v2201 = vld [vmem:[#allocation18 + $0x2c] sm:$0xf]
        %v2202 = vld [vmem:[#allocation18 + $0x30] sm:$0xf]
        %v2203 = vld [vmem:[#allocation18 + $0x34] sm:$0xf]
        %v2204 = vld [vmem:[#allocation18 + $0x38] sm:$0xf]
        %v2205 = vld [vmem:[#allocation18 + $0x3c] sm:$0xf]
        %v2206 = vld [vmem:[#allocation18 + $0x40] sm:$0xf]
        %v2207 = vld [vmem:[#allocation18 + $0x44] sm:$0xf]
        %v2208 = vld [vmem:[#allocation18 + $0x48] sm:$0xf]
        %v2209 = vld [vmem:[#allocation18 + $0x4c] sm:$0xf]
        %v2210 = vld [vmem:[#allocation18 + $0x50] sm:$0xf]
        %v2211 = vld [vmem:[#allocation18 + $0x54] sm:$0xf]
        %v2212 = vld [vmem:[#allocation18 + $0x58] sm:$0xf]
        %v2213 = vld [vmem:[#allocation18 + $0x5c] sm:$0xf]
        %v2214 = vld [vmem:[#allocation18 + $0x60] sm:$0xf]
        %v2215 = vld [vmem:[#allocation18 + $0x64] sm:$0xf]
        %v2216 = vld [vmem:[#allocation18 + $0x68] sm:$0xf]
        %v2217 = vld [vmem:[#allocation18 + $0x6c] sm:$0xf]
        %v2218 = vld [vmem:[#allocation18 + $0x70] sm:$0xf]
        %v2219 = vld [vmem:[#allocation18 + $0x74] sm:$0xf]
        %v2220 = vld [vmem:[#allocation18 + $0x78] sm:$0xf]
        %v2221 = vld [vmem:[#allocation18 + $0x7c] sm:$0xf]
        %v2222 = vld [vmem:[#allocation18 + $0x80] sm:$0xf]
        %v2223 = vld [vmem:[#allocation18 + $0x84] sm:$0xf]
        %v2224 = vld [vmem:[#allocation18 + $0x88] sm:$0xf]
        %v2225 = vld [vmem:[#allocation18 + $0x8c] sm:$0xf]
        %v2226 = vld [vmem:[#allocation18 + $0x90] sm:$0xf]
        %v2227 = vld [vmem:[#allocation18 + $0x94] sm:$0xf]
        %v2228 = vld [vmem:[#allocation18 + $0x98] sm:$0xf]
        %v2229 = vld [vmem:[#allocation18 + $0x9c] sm:$0xf]
        %v2230 = vld [vmem:[#allocation18 + $0xa0] sm:$0xf]
        %v2231 = vld [vmem:[#allocation18 + $0xa4] sm:$0xf]
        %v2232 = vld [vmem:[#allocation18 + $0xa8] sm:$0xf]
        %v2233 = vld [vmem:[#allocation18 + $0xac] sm:$0xf]
        %v2234 = vld [vmem:[#allocation18 + $0xb0] sm:$0xf]
        %v2235 = vld [vmem:[#allocation18 + $0xb4] sm:$0xf]
        %v2236 = vld [vmem:[#allocation18 + $0xb8] sm:$0xf]
        %v2237 = vld [vmem:[#allocation18 + $0xbc] sm:$0xf]
        %v2238 = vld [vmem:[#allocation18 + $0xc0] sm:$0xf]
        %v2239 = vld [vmem:[#allocation18 + $0xc4] sm:$0xf]
        %v2240 = vld [vmem:[#allocation18 + $0xc8] sm:$0xf]
        %v2241 = vld [vmem:[#allocation18 + $0xcc] sm:$0xf]
        %v2242 = vld [vmem:[#allocation18 + $0xd0] sm:$0xf]
        %v2243 = vld [vmem:[#allocation18 + $0xd4] sm:$0xf]
        %v2244 = vld [vmem:[#allocation18 + $0xd8] sm:$0xf]
        %v2245 = vld [vmem:[#allocation18 + $0xdc] sm:$0xf]
        %v2246 = vld [vmem:[#allocation18 + $0xe0] sm:$0xf]
        %v2247 = vld [vmem:[#allocation18 + $0xe4] sm:$0xf]
        %v2248 = vld [vmem:[#allocation18 + $0xe8] sm:$0xf]
        %v2249 = vld [vmem:[#allocation18 + $0xec] sm:$0xf]
        %v2250 = vld [vmem:[#allocation18 + $0xf0] sm:$0xf]
        %v2251 = vld [vmem:[#allocation18 + $0xf4] sm:$0xf]
        %v2252 = vld [vmem:[#allocation18 + $0xf8] sm:$0xf]
        %v2253 = vld [vmem:[#allocation18 + $0xfc] sm:$0xf]
        %v2254 = vld [vmem:[#allocation19] sm:$0x1]
        %v2256 = vlaneseq
        %v2257 = vshrl.u32 %v2256, 7
        %v2258 = vsub.s32 0, %v2257
        %v2259 = vrot.slane %v2254, %v2258
        %v2325 = vunpack.c.l.b16 %v2190
        %v2326 = vunpack.c.l.b16 %v2191
        %v2327 = vunpack.c.l.b16 %v2192
        %v2328 = vunpack.c.l.b16 %v2193
        %v2329 = vunpack.c.l.b16 %v2194
        %v2330 = vunpack.c.l.b16 %v2195
        %v2331 = vunpack.c.l.b16 %v2196
        %v2332 = vunpack.c.l.b16 %v2197
        %v2333 = vunpack.c.l.b16 %v2198
        %v2334 = vunpack.c.l.b16 %v2199
        %v2335 = vunpack.c.l.b16 %v2200
        %v2336 = vunpack.c.l.b16 %v2201
        %v2337 = vunpack.c.l.b16 %v2202
        %v2338 = vunpack.c.l.b16 %v2203
        %v2339 = vunpack.c.l.b16 %v2204
        %v2340 = vunpack.c.l.b16 %v2205
        %v2341 = vunpack.c.l.b16 %v2206
        %v2342 = vunpack.c.l.b16 %v2207
        %v2343 = vunpack.c.l.b16 %v2208
        %v2344 = vunpack.c.l.b16 %v2209
        %v2345 = vunpack.c.l.b16 %v2210
        %v2346 = vunpack.c.l.b16 %v2211
        %v2347 = vunpack.c.l.b16 %v2212
        %v2348 = vunpack.c.l.b16 %v2213
        %v2349 = vunpack.c.l.b16 %v2214
        %v2350 = vunpack.c.l.b16 %v2215
        %v2351 = vunpack.c.l.b16 %v2216
        %v2352 = vunpack.c.l.b16 %v2217
        %v2353 = vunpack.c.l.b16 %v2218
        %v2354 = vunpack.c.l.b16 %v2219
        %v2355 = vunpack.c.l.b16 %v2220
        %v2356 = vunpack.c.l.b16 %v2221
        %v2357 = vunpack.c.l.b16 %v2222
        %v2358 = vunpack.c.l.b16 %v2223
        %v2359 = vunpack.c.l.b16 %v2224
        %v2360 = vunpack.c.l.b16 %v2225
        %v2361 = vunpack.c.l.b16 %v2226
        %v2362 = vunpack.c.l.b16 %v2227
        %v2363 = vunpack.c.l.b16 %v2228
        %v2364 = vunpack.c.l.b16 %v2229
        %v2365 = vunpack.c.l.b16 %v2230
        %v2366 = vunpack.c.l.b16 %v2231
        %v2367 = vunpack.c.l.b16 %v2232
        %v2368 = vunpack.c.l.b16 %v2233
        %v2369 = vunpack.c.l.b16 %v2234
        %v2370 = vunpack.c.l.b16 %v2235
        %v2371 = vunpack.c.l.b16 %v2236
        %v2372 = vunpack.c.l.b16 %v2237
        %v2373 = vunpack.c.l.b16 %v2238
        %v2374 = vunpack.c.l.b16 %v2239
        %v2375 = vunpack.c.l.b16 %v2240
        %v2376 = vunpack.c.l.b16 %v2241
        %v2377 = vunpack.c.l.b16 %v2242
        %v2378 = vunpack.c.l.b16 %v2243
        %v2379 = vunpack.c.l.b16 %v2244
        %v2380 = vunpack.c.l.b16 %v2245
        %v2381 = vunpack.c.l.b16 %v2246
        %v2382 = vunpack.c.l.b16 %v2247
        %v2383 = vunpack.c.l.b16 %v2248
        %v2384 = vunpack.c.l.b16 %v2249
        %v2385 = vunpack.c.l.b16 %v2250
        %v2386 = vunpack.c.l.b16 %v2251
        %v2387 = vunpack.c.l.b16 %v2252
        %v2388 = vunpack.c.l.b16 %v2253
        %v2389 = vpack.c.b16 %v2326, %v2325
        %v2390 = vpack.c.b16 %v2328, %v2327
        %v2391 = vpack.c.b16 %v2330, %v2329
        %v2392 = vpack.c.b16 %v2332, %v2331
        %v2393 = vpack.c.b16 %v2334, %v2333
        %v2394 = vpack.c.b16 %v2336, %v2335
        %v2395 = vpack.c.b16 %v2338, %v2337
        %v2396 = vpack.c.b16 %v2340, %v2339
        %v2397 = vpack.c.b16 %v2342, %v2341
        %v2398 = vpack.c.b16 %v2344, %v2343
        %v2399 = vpack.c.b16 %v2346, %v2345
        %v2400 = vpack.c.b16 %v2348, %v2347
        %v2401 = vpack.c.b16 %v2350, %v2349
        %v2402 = vpack.c.b16 %v2352, %v2351
        %v2403 = vpack.c.b16 %v2354, %v2353
        %v2404 = vpack.c.b16 %v2356, %v2355
        %v2405 = vpack.c.b16 %v2358, %v2357
        %v2406 = vpack.c.b16 %v2360, %v2359
        %v2407 = vpack.c.b16 %v2362, %v2361
        %v2408 = vpack.c.b16 %v2364, %v2363
        %v2409 = vpack.c.b16 %v2366, %v2365
        %v2410 = vpack.c.b16 %v2368, %v2367
        %v2411 = vpack.c.b16 %v2370, %v2369
        %v2412 = vpack.c.b16 %v2372, %v2371
        %v2413 = vpack.c.b16 %v2374, %v2373
        %v2414 = vpack.c.b16 %v2376, %v2375
        %v2415 = vpack.c.b16 %v2378, %v2377
        %v2416 = vpack.c.b16 %v2380, %v2379
        %v2417 = vpack.c.b16 %v2382, %v2381
        %v2418 = vpack.c.b16 %v2384, %v2383
        %v2419 = vpack.c.b16 %v2386, %v2385
        %v2420 = vpack.c.b16 %v2388, %v2387
        %2453 = vmatprep.subr.bf16.mxu0 0
        %2454 = vmatpush1.bf16.msra.mxu0 %v2389
        %2455 = vmatprep.subr.bf16.mxu0 0
        %2456 = vmatpush1.bf16.msra.mxu0 %v2390
        %2457 = vmatprep.subr.bf16.mxu0 0
        %2458 = vmatpush1.bf16.msra.mxu0 %v2391
        %2459 = vmatprep.subr.bf16.mxu0 0
        %2460 = vmatpush1.bf16.msra.mxu0 %v2392
        %2461 = vmatprep.subr.bf16.mxu0 0
        %2462 = vmatpush1.bf16.msra.mxu0 %v2393
        %2463 = vmatprep.subr.bf16.mxu0 0
        %2464 = vmatpush1.bf16.msra.mxu0 %v2394
        %2465 = vmatprep.subr.bf16.mxu0 0
        %2466 = vmatpush1.bf16.msra.mxu0 %v2395
        %2467 = vmatprep.subr.bf16.mxu0 0
        %2468 = vmatpush1.bf16.msra.mxu0 %v2396
        %2469 = vmatprep.subr.bf16.mxu0 0
        %2470 = vmatpush1.bf16.msra.mxu0 %v2397
        %2471 = vmatprep.subr.bf16.mxu0 0
        %2472 = vmatpush1.bf16.msra.mxu0 %v2398
        %2473 = vmatprep.subr.bf16.mxu0 0
        %2474 = vmatpush1.bf16.msra.mxu0 %v2399
        %2475 = vmatprep.subr.bf16.mxu0 0
        %2476 = vmatpush1.bf16.msra.mxu0 %v2400
        %2477 = vmatprep.subr.bf16.mxu0 0
        %2478 = vmatpush1.bf16.msra.mxu0 %v2401
        %2479 = vmatprep.subr.bf16.mxu0 0
        %2480 = vmatpush1.bf16.msra.mxu0 %v2402
        %2481 = vmatprep.subr.bf16.mxu0 0
        %2482 = vmatpush1.bf16.msra.mxu0 %v2403
        %2483 = vmatprep.subr.bf16.mxu0 0
        %2484 = vmatpush1.bf16.msra.mxu0 %v2404
        %2485 = vmatprep.mubr.bf16.mxu0 %v2068
        %2486 = vmatmul.mubr.bf16.gmra.mrb[0].mxu0 %v2067
        %v2487 = vpop.f32.mrb[0].mxu0
        %v2488 = vadd.f32 %v2259, %v2487
        %v2489 = vpop.f32.mrb[0].mxu0
        %v2490 = vpop.f32.mrb[0].mxu0
        %v2491 = vpop.f32.mrb[0].mxu0
        %2492 = vdwg.mxu0
        %2493 = vmatprep.subr.bf16.mxu0 0
        %2494 = vmatpush1.bf16.msra.mxu0 %v2405
        %2495 = vmatprep.subr.bf16.mxu0 0
        %2496 = vmatpush1.bf16.msra.mxu0 %v2406
        %2497 = vmatprep.subr.bf16.mxu0 0
        %2498 = vmatpush1.bf16.msra.mxu0 %v2407
        %2499 = vmatprep.subr.bf16.mxu0 0
        %2500 = vmatpush1.bf16.msra.mxu0 %v2408
        %2501 = vmatprep.subr.bf16.mxu0 0
        %2502 = vmatpush1.bf16.msra.mxu0 %v2409
        %2503 = vmatprep.subr.bf16.mxu0 0
        %2504 = vmatpush1.bf16.msra.mxu0 %v2410
        %2505 = vmatprep.subr.bf16.mxu0 0
        %2506 = vmatpush1.bf16.msra.mxu0 %v2411
        %2507 = vmatprep.subr.bf16.mxu0 0
        %2508 = vmatpush1.bf16.msra.mxu0 %v2412
        %2509 = vmatprep.subr.bf16.mxu0 0
        %2510 = vmatpush1.bf16.msra.mxu0 %v2413
        %2511 = vmatprep.subr.bf16.mxu0 0
        %2512 = vmatpush1.bf16.msra.mxu0 %v2414
        %2513 = vmatprep.subr.bf16.mxu0 0
        %2514 = vmatpush1.bf16.msra.mxu0 %v2415
        %2515 = vmatprep.subr.bf16.mxu0 0
        %2516 = vmatpush1.bf16.msra.mxu0 %v2416
        %2517 = vmatprep.subr.bf16.mxu0 0
        %2518 = vmatpush1.bf16.msra.mxu0 %v2417
        %2519 = vmatprep.subr.bf16.mxu0 0
        %2520 = vmatpush1.bf16.msra.mxu0 %v2418
        %2521 = vmatprep.subr.bf16.mxu0 0
        %2522 = vmatpush1.bf16.msra.mxu0 %v2419
        %2523 = vmatprep.subr.bf16.mxu0 0
        %2524 = vmatpush1.bf16.msra.mxu0 %v2420
        %2525 = vmatprep.mubr.bf16.mxu0 %v2189
        %2526 = vmatmul.mubr.bf16.gmra.mrb[0].mxu0 %v2188
        %v2527 = vpop.f32.mrb[0].mxu0
        %v2528 = vadd.f32 %v2488, %v2527
        %v2529 = vpop.f32.mrb[0].mxu0
        %v2530 = vpop.f32.mrb[0].mxu0
        %v2531 = vpop.f32.mrb[0].mxu0
        %2532 = vdwg.mxu0
        %v2533 = vadd.f32 %v1608, %v2528
        %v2534 = vld [vmem:[#allocation24] sm:$0x1]
        %v2535 = vld [vmem:[#allocation25] sm:$0x1]
        %2536 = vadd.xlane.f32.xlu0 %v2533
        %v2537 = vpop.xlane.xlu0 %2536
        %v2538 = vmul.f32 %v2537, %v1611
        %v2539 = vsub.f32 %v2533, %v2538
        %v2540 = vmul.f32 %v2539, %v2539
        %2541 = vadd.xlane.f32.xlu0 %v2540
        %v2542 = vpop.xlane.xlu0 %2541
        %v2543 = vmul.f32 %v2542, 0.007874016
        %v2544 = vrsqrt.pop %v2543
        %v2545 = vmul.f32 %v2543, %v2544
        %vm2546 = vcmp.eq.f32.partialorder %v2543, inf
        %v2547 = vsel %vm2546, %v2543, %v2545
        %vm2548 = vcmp.eq.f32.partialorder %v2543, 0.0
        %v2549 = vand.u32 %v2543, 2147483648
        %v2550 = vsel %vm2548, %v2549, %v2547
        %v2551 = vadd.f32 %v2550, 1e-06
        %v2552 = vrcp.pop %v2551
        %v2554 = vlaneseq
        %v2555 = vshrl.u32 %v2554, 7
        %v2556 = vsub.s32 0, %v2555
        %v2557 = vrot.slane %v2534, %v2556
        %v2559 = vmul.f32 %v2557, %v2539
        %v2560 = vmul.f32 %v2559, %v2552
        %v2562 = vlaneseq
        %v2563 = vshrl.u32 %v2562, 7
        %v2564 = vsub.s32 0, %v2563
        %v2565 = vrot.slane %v2535, %v2564
        %v2567 = vadd.f32 %v2560, %v2565
        %v2568 = vpack.c.bf16 %v2567, %v2567
        %v2569 = vld [vmem:[#allocation27] sm:$0xff]
        %v2570 = vld [vmem:[#allocation27 + $0x8] sm:$0xff]
        %v2571 = vld [vmem:[#allocation27 + $0x10] sm:$0xff]
        %v2572 = vld [vmem:[#allocation27 + $0x18] sm:$0xff]
        %v2573 = vld [vmem:[#allocation27 + $0x20] sm:$0xff]
        %v2574 = vld [vmem:[#allocation27 + $0x28] sm:$0xff]
        %v2575 = vld [vmem:[#allocation27 + $0x30] sm:$0xff]
        %v2576 = vld [vmem:[#allocation27 + $0x38] sm:$0xff]
        %v2577 = vld [vmem:[#allocation27 + $0x40] sm:$0xff]
        %v2578 = vld [vmem:[#allocation27 + $0x48] sm:$0xff]
        %v2579 = vld [vmem:[#allocation27 + $0x50] sm:$0xff]
        %v2580 = vld [vmem:[#allocation27 + $0x58] sm:$0xff]
        %v2581 = vld [vmem:[#allocation27 + $0x60] sm:$0xff]
        %v2582 = vld [vmem:[#allocation27 + $0x68] sm:$0xff]
        %v2583 = vld [vmem:[#allocation27 + $0x70] sm:$0xff]
        %v2584 = vld [vmem:[#allocation27 + $0x78] sm:$0xff]
        %v2585 = vld [vmem:[#allocation28] sm:$0x3]
        %v2587 = vlaneseq
        %v2588 = vshrl.u32 %v2587, 7
        %v2589 = vsub.s32 0, %v2588
        %v2590 = vrot.slane %v2585, %v2589
        %v2591 = vlaneseq
        %v2592 = vshrl.u32 %v2591, 7
        %v2593 = vsub.s32 1, %v2592
        %v2594 = vrot.slane %v2585, %v2593
        %v2613 = vunpack.c.l.b16 %v2569
        %v2614 = vunpack.c.h.b16 %v2569
        %v2615 = vunpack.c.l.b16 %v2570
        %v2616 = vunpack.c.h.b16 %v2570
        %v2617 = vunpack.c.l.b16 %v2571
        %v2618 = vunpack.c.h.b16 %v2571
        %v2619 = vunpack.c.l.b16 %v2572
        %v2620 = vunpack.c.h.b16 %v2572
        %v2621 = vunpack.c.l.b16 %v2573
        %v2622 = vunpack.c.h.b16 %v2573
        %v2623 = vunpack.c.l.b16 %v2574
        %v2624 = vunpack.c.h.b16 %v2574
        %v2625 = vunpack.c.l.b16 %v2575
        %v2626 = vunpack.c.h.b16 %v2575
        %v2627 = vunpack.c.l.b16 %v2576
        %v2628 = vunpack.c.h.b16 %v2576
        %v2629 = vunpack.c.l.b16 %v2577
        %v2630 = vunpack.c.h.b16 %v2577
        %v2631 = vunpack.c.l.b16 %v2578
        %v2632 = vunpack.c.h.b16 %v2578
        %v2633 = vunpack.c.l.b16 %v2579
        %v2634 = vunpack.c.h.b16 %v2579
        %v2635 = vunpack.c.l.b16 %v2580
        %v2636 = vunpack.c.h.b16 %v2580
        %v2637 = vunpack.c.l.b16 %v2581
        %v2638 = vunpack.c.h.b16 %v2581
        %v2639 = vunpack.c.l.b16 %v2582
        %v2640 = vunpack.c.h.b16 %v2582
        %v2641 = vunpack.c.l.b16 %v2583
        %v2642 = vunpack.c.h.b16 %v2583
        %v2643 = vunpack.c.l.b16 %v2584
        %v2644 = vunpack.c.h.b16 %v2584
        %v2645 = vpack.c.b16 %v2615, %v2613
        %v2646 = vpack.c.b16 %v2616, %v2614
        %v2647 = vpack.c.b16 %v2619, %v2617
        %v2648 = vpack.c.b16 %v2620, %v2618
        %v2649 = vpack.c.b16 %v2623, %v2621
        %v2650 = vpack.c.b16 %v2624, %v2622
        %v2651 = vpack.c.b16 %v2627, %v2625
        %v2652 = vpack.c.b16 %v2628, %v2626
        %v2653 = vpack.c.b16 %v2631, %v2629
        %v2654 = vpack.c.b16 %v2632, %v2630
        %v2655 = vpack.c.b16 %v2635, %v2633
        %v2656 = vpack.c.b16 %v2636, %v2634
        %v2657 = vpack.c.b16 %v2639, %v2637
        %v2658 = vpack.c.b16 %v2640, %v2638
        %v2659 = vpack.c.b16 %v2643, %v2641
        %v2660 = vpack.c.b16 %v2644, %v2642
        %2677 = vmatprep.subr.bf16.mxu0 %v2646
        %2678 = vmatpush1.bf16.msra.mxu0 %v2645
        %2679 = vmatprep.subr.bf16.mxu0 %v2648
        %2680 = vmatpush1.bf16.msra.mxu0 %v2647
        %2681 = vmatprep.subr.bf16.mxu0 %v2650
        %2682 = vmatpush1.bf16.msra.mxu0 %v2649
        %2683 = vmatprep.subr.bf16.mxu0 %v2652
        %2684 = vmatpush1.bf16.msra.mxu0 %v2651
        %2685 = vmatprep.subr.bf16.mxu0 %v2654
        %2686 = vmatpush1.bf16.msra.mxu0 %v2653
        %2687 = vmatprep.subr.bf16.mxu0 %v2656
        %2688 = vmatpush1.bf16.msra.mxu0 %v2655
        %2689 = vmatprep.subr.bf16.mxu0 %v2658
        %2690 = vmatpush1.bf16.msra.mxu0 %v2657
        %2691 = vmatprep.subr.bf16.mxu0 %v2660
        %2692 = vmatpush1.bf16.msra.mxu0 %v2659
        %2693 = vmatprep.subr.bf16.mxu0 0
        %2694 = vmatpush1.bf16.msra.mxu0 0
        %2695 = vmatprep.subr.bf16.mxu0 0
        %2696 = vmatpush1.bf16.msra.mxu0 0
        %2697 = vmatprep.subr.bf16.mxu0 0
        %2698 = vmatpush1.bf16.msra.mxu0 0
        %2699 = vmatprep.subr.bf16.mxu0 0
        %2700 = vmatpush1.bf16.msra.mxu0 0
        %2701 = vmatprep.subr.bf16.mxu0 0
        %2702 = vmatpush1.bf16.msra.mxu0 0
        %2703 = vmatprep.subr.bf16.mxu0 0
        %2704 = vmatpush1.bf16.msra.mxu0 0
        %2705 = vmatprep.subr.bf16.mxu0 0
        %2706 = vmatpush1.bf16.msra.mxu0 0
        %2707 = vmatprep.subr.bf16.mxu0 0
        %2708 = vmatpush1.bf16.msra.mxu0 0
        %2709 = vmatprep.mubr.bf16.mxu0 0
        %2710 = vmatmul.mubr.bf16.gmra.mrb[0].mxu0 %v2568
        %v2711 = vpop.f32.mrb[0].mxu0
        %v2712 = vadd.f32 %v2590, %v2711
        %v2713 = vpop.f32.mrb[0].mxu0
        %v2714 = vadd.f32 %v2594, %v2713
        %v2715 = vpop.f32.mrb[0].mxu0
        %v2716 = vpop.f32.mrb[0].mxu0
        %2717 = vdwg.mxu0
        %v2718 = vmax.f32 %v2712, 0.0
        %v2719 = vmax.f32 %v2714, 0.0
        %v2720 = vpack.c.bf16 %v2718, %v2718
        %v2721 = vpack.c.bf16 %v2719, %v2719
        %v2722 = vld [vmem:[#allocation30] sm:$0xf]
        %v2723 = vld [vmem:[#allocation30 + $0x4] sm:$0xf]
        %v2724 = vld [vmem:[#allocation30 + $0x8] sm:$0xf]
        %v2725 = vld [vmem:[#allocation30 + $0xc] sm:$0xf]
        %v2726 = vld [vmem:[#allocation30 + $0x10] sm:$0xf]
        %v2727 = vld [vmem:[#allocation30 + $0x14] sm:$0xf]
        %v2728 = vld [vmem:[#allocation30 + $0x18] sm:$0xf]
        %v2729 = vld [vmem:[#allocation30 + $0x1c] sm:$0xf]
        %v2730 = vld [vmem:[#allocation30 + $0x20] sm:$0xf]
        %v2731 = vld [vmem:[#allocation30 + $0x24] sm:$0xf]
        %v2732 = vld [vmem:[#allocation30 + $0x28] sm:$0xf]
        %v2733 = vld [vmem:[#allocation30 + $0x2c] sm:$0xf]
        %v2734 = vld [vmem:[#allocation30 + $0x30] sm:$0xf]
        %v2735 = vld [vmem:[#allocation30 + $0x34] sm:$0xf]
        %v2736 = vld [vmem:[#allocation30 + $0x38] sm:$0xf]
        %v2737 = vld [vmem:[#allocation30 + $0x3c] sm:$0xf]
        %v2738 = vld [vmem:[#allocation30 + $0x40] sm:$0xf]
        %v2739 = vld [vmem:[#allocation30 + $0x44] sm:$0xf]
        %v2740 = vld [vmem:[#allocation30 + $0x48] sm:$0xf]
        %v2741 = vld [vmem:[#allocation30 + $0x4c] sm:$0xf]
        %v2742 = vld [vmem:[#allocation30 + $0x50] sm:$0xf]
        %v2743 = vld [vmem:[#allocation30 + $0x54] sm:$0xf]
        %v2744 = vld [vmem:[#allocation30 + $0x58] sm:$0xf]
        %v2745 = vld [vmem:[#allocation30 + $0x5c] sm:$0xf]
        %v2746 = vld [vmem:[#allocation30 + $0x60] sm:$0xf]
        %v2747 = vld [vmem:[#allocation30 + $0x64] sm:$0xf]
        %v2748 = vld [vmem:[#allocation30 + $0x68] sm:$0xf]
        %v2749 = vld [vmem:[#allocation30 + $0x6c] sm:$0xf]
        %v2750 = vld [vmem:[#allocation30 + $0x70] sm:$0xf]
        %v2751 = vld [vmem:[#allocation30 + $0x74] sm:$0xf]
        %v2752 = vld [vmem:[#allocation30 + $0x78] sm:$0xf]
        %v2753 = vld [vmem:[#allocation30 + $0x7c] sm:$0xf]
        %v2754 = vld [vmem:[#allocation31] sm:$0x1]
        %v2756 = vlaneseq
        %v2757 = vshrl.u32 %v2756, 7
        %v2758 = vsub.s32 0, %v2757
        %v2759 = vrot.slane %v2754, %v2758
        %v2793 = vunpack.c.l.b16 %v2722
        %v2794 = vunpack.c.l.b16 %v2723
        %v2795 = vunpack.c.l.b16 %v2724
        %v2796 = vunpack.c.l.b16 %v2725
        %v2797 = vunpack.c.l.b16 %v2726
        %v2798 = vunpack.c.l.b16 %v2727
        %v2799 = vunpack.c.l.b16 %v2728
        %v2800 = vunpack.c.l.b16 %v2729
        %v2801 = vunpack.c.l.b16 %v2730
        %v2802 = vunpack.c.l.b16 %v2731
        %v2803 = vunpack.c.l.b16 %v2732
        %v2804 = vunpack.c.l.b16 %v2733
        %v2805 = vunpack.c.l.b16 %v2734
        %v2806 = vunpack.c.l.b16 %v2735
        %v2807 = vunpack.c.l.b16 %v2736
        %v2808 = vunpack.c.l.b16 %v2737
        %v2809 = vunpack.c.l.b16 %v2738
        %v2810 = vunpack.c.l.b16 %v2739
        %v2811 = vunpack.c.l.b16 %v2740
        %v2812 = vunpack.c.l.b16 %v2741
        %v2813 = vunpack.c.l.b16 %v2742
        %v2814 = vunpack.c.l.b16 %v2743
        %v2815 = vunpack.c.l.b16 %v2744
        %v2816 = vunpack.c.l.b16 %v2745
        %v2817 = vunpack.c.l.b16 %v2746
        %v2818 = vunpack.c.l.b16 %v2747
        %v2819 = vunpack.c.l.b16 %v2748
        %v2820 = vunpack.c.l.b16 %v2749
        %v2821 = vunpack.c.l.b16 %v2750
        %v2822 = vunpack.c.l.b16 %v2751
        %v2823 = vunpack.c.l.b16 %v2752
        %v2824 = vunpack.c.l.b16 %v2753
        %v2825 = vpack.c.b16 %v2794, %v2793
        %v2826 = vpack.c.b16 %v2796, %v2795
        %v2827 = vpack.c.b16 %v2798, %v2797
        %v2828 = vpack.c.b16 %v2800, %v2799
        %v2829 = vpack.c.b16 %v2802, %v2801
        %v2830 = vpack.c.b16 %v2804, %v2803
        %v2831 = vpack.c.b16 %v2806, %v2805
        %v2832 = vpack.c.b16 %v2808, %v2807
        %v2833 = vpack.c.b16 %v2810, %v2809
        %v2834 = vpack.c.b16 %v2812, %v2811
        %v2835 = vpack.c.b16 %v2814, %v2813
        %v2836 = vpack.c.b16 %v2816, %v2815
        %v2837 = vpack.c.b16 %v2818, %v2817
        %v2838 = vpack.c.b16 %v2820, %v2819
        %v2839 = vpack.c.b16 %v2822, %v2821
        %v2840 = vpack.c.b16 %v2824, %v2823
        %2857 = vmatprep.subr.bf16.mxu0 0
        %2858 = vmatpush1.bf16.msra.mxu0 %v2825
        %2859 = vmatprep.subr.bf16.mxu0 0
        %2860 = vmatpush1.bf16.msra.mxu0 %v2826
        %2861 = vmatprep.subr.bf16.mxu0 0
        %2862 = vmatpush1.bf16.msra.mxu0 %v2827
        %2863 = vmatprep.subr.bf16.mxu0 0
        %2864 = vmatpush1.bf16.msra.mxu0 %v2828
        %2865 = vmatprep.subr.bf16.mxu0 0
        %2866 = vmatpush1.bf16.msra.mxu0 %v2829
        %2867 = vmatprep.subr.bf16.mxu0 0
        %2868 = vmatpush1.bf16.msra.mxu0 %v2830
        %2869 = vmatprep.subr.bf16.mxu0 0
        %2870 = vmatpush1.bf16.msra.mxu0 %v2831
        %2871 = vmatprep.subr.bf16.mxu0 0
        %2872 = vmatpush1.bf16.msra.mxu0 %v2832
        %2873 = vmatprep.subr.bf16.mxu0 0
        %2874 = vmatpush1.bf16.msra.mxu0 %v2833
        %2875 = vmatprep.subr.bf16.mxu0 0
        %2876 = vmatpush1.bf16.msra.mxu0 %v2834
        %2877 = vmatprep.subr.bf16.mxu0 0
        %2878 = vmatpush1.bf16.msra.mxu0 %v2835
        %2879 = vmatprep.subr.bf16.mxu0 0
        %2880 = vmatpush1.bf16.msra.mxu0 %v2836
        %2881 = vmatprep.subr.bf16.mxu0 0
        %2882 = vmatpush1.bf16.msra.mxu0 %v2837
        %2883 = vmatprep.subr.bf16.mxu0 0
        %2884 = vmatpush1.bf16.msra.mxu0 %v2838
        %2885 = vmatprep.subr.bf16.mxu0 0
        %2886 = vmatpush1.bf16.msra.mxu0 %v2839
        %2887 = vmatprep.subr.bf16.mxu0 0
        %2888 = vmatpush1.bf16.msra.mxu0 %v2840
        %2889 = vmatprep.mubr.bf16.mxu0 %v2721
        %2890 = vmatmul.mubr.bf16.gmra.mrb[0].mxu0 %v2720
        %v2891 = vpop.f32.mrb[0].mxu0
        %v2892 = vadd.f32 %v2759, %v2891
        %v2893 = vpop.f32.mrb[0].mxu0
        %v2894 = vpop.f32.mrb[0].mxu0
        %v2895 = vpop.f32.mrb[0].mxu0
        %2896 = vdwg.mxu0
        %v2897 = vadd.f32 %v2533, %v2892
        %2898 = vst [vmem:[%s935] sm:$0xff] %v2897
        %s2899 = sand.u32 %s503, 1
        %s2900 = scalar_lea.sflag [#allocation6], %s2899
        %s2901 = sand.u32 %s503, 1
        %s2902 = smul.addr %s2901, 8
        %s2903 = scalar_lea.vmem [#allocation36], %s2902
        // Predicated region
        $region185: #{tpu_custom_call.1} parent=99 // pred_check
          %p2904 = pneg %p513
        $region186: #{tpu_custom_call.1} parent=99 // pred_check_branch
          %2906 = sbr.rel (%p2904) target = $region188
        $region187: #{tpu_custom_call.1} parent=99 // pred_region
          %s2908 = ssub.s32 128, 128
          %2909 = vsyncadd %s2900, %s2908
          %s2910 = sadd.s32 %s54, %s53
          %s2911 = smul.addr %s2910, 128
          %s2912 = scalar_lea.hbm %s20, %s2911
          %s2914 = sshll.u32 %s2903, 4
          %s2915 = int_to_ptr.vmem [resolvable:$true] %s2914
          %2917 = dma.vmem_to_hbm [thread:$0]  %s2915, 128, %s2912, %s2900
        $region188: #{tpu_custom_call.1} parent=99 // pred_fallthru
          _
      $region100: #{tpu_custom_call.1} parent=5 // pred_fallthru
        _
      %p2918 = scmp.le.s32.totalorder 2, %s44
      // Predicated region
      $region189: #{tpu_custom_call.1} parent=5 // pred_check
        %p2919 = pneg %p2918
      $region190: #{tpu_custom_call.1} parent=5 // pred_check_branch
        %2921 = sbr.rel (%p2919) target = $region192
      $region191: #{tpu_custom_call.1} parent=5 // pred_region
        %s2922 = ssub.s32 %s44, 2
        // Predicated region
        $region193: #{tpu_custom_call.1} parent=191 // pred_check
          %p2923 = pneg %p519
        $region194: #{tpu_custom_call.1} parent=191 // pred_check_branch
          %2925 = sbr.rel (%p2923) target = $region196
        $region195: #{tpu_custom_call.1} parent=191 // pred_region
          %s2926 = sand.u32 %s504, 1
          %s2927 = scalar_lea.sflag [#allocation6], %s2926
          %s2928 = sand.u32 %s504, 1
          %s2929 = smul.addr %s2928, 8
          %s2930 = scalar_lea.vmem [#allocation36], %s2929
          %2931 = dma.done %s2927, 128
        $region196: #{tpu_custom_call.1} parent=191 // pred_fallthru
          _
      $region192: #{tpu_custom_call.1} parent=5 // pred_fallthru
        _
    $region6: #{tpu_custom_call.1} parent=1 // loop_footer
      %s48 = sadd.s32 1, %s44
    $region7: #{tpu_custom_call.1} parent=1 // loop_footer_branch
      %43 = sbr.rel target = $region3
    $region8: #{tpu_custom_call.1} parent=1 // loop_exit
      _
    %2932 = vsyncpa [#allocation5], 1
    %s2933 = scalar_lea.sflag [#allocation5], 1
    %2934 = vsyncpa %s2933, 1
    %2935 = vsyncpa [#allocation8], 1
    %s2936 = scalar_lea.sflag [#allocation8], 1
    %2937 = vsyncpa %s2936, 1
    %2938 = vsyncpa [#allocation11], 1
    %2939 = vsyncpa [#allocation14], 1
    %2940 = vsyncpa [#allocation17], 1
    %2941 = vsyncpa [#allocation20], 1
    %2942 = vsyncpa [#allocation23], 1
    %2943 = vsyncpa [#allocation26], 1
    %2944 = vsyncpa [#allocation29], 1
    %2945 = vsyncpa [#allocation32], 1
    %2946 = vsyncpa [#allocation35], 1
    %2947 = vsyncpa [#allocation6], 1
    %s2948 = scalar_lea.sflag [#allocation6], 1
    %2949 = vsyncpa %s2948, 1

</llo_original>
